<compile_context>
chip_gen: v7x
topology: tpu7x:2x2x1
jax: 0.10.0
libtpu: 0.0.40
codegen_flags: <defaults>
</compile_context>

<pallas_src>
import jax
import jax.numpy as jnp
from jax import lax
from jax.experimental import pallas as pl
from jax.experimental.pallas import tpu as pltpu

_EPS = 1e-5
_MIB = 1024 * 1024


# ---------------------------------------------------------------------------
# Small helpers (host side)
# ---------------------------------------------------------------------------
def _nbytes(shape, dtype):
    n = 1
    for d in shape:
        n *= int(d)
    return n * jnp.dtype(dtype).itemsize


def _vmem_limit(estimate_bytes):
    """2x headroom over the per-step buffer estimate, clamped to a range that is
    valid on v5e / v6e / v7x and never below the largest default scoped limit."""
    return int(max(32 * _MIB, min(2 * int(estimate_bytes), 64 * _MIB)))


def _bn_scale_shift(parts, gamma, beta, inv_count):
    """Global BN scale/shift from the per-image partial-stats table (N, 2, C).

    Tiny XLA op in the wrapper -> computed once instead of once per grid step.
    """
    tot = jnp.sum(parts.astype(jnp.float32), axis=0)          # (2, C)
    mean = tot[0] * inv_count                                  # (C,)
    var = tot[1] * inv_count - mean * mean                     # biased (PyTorch train fwd)
    scale = gamma.astype(jnp.float32) * lax.rsqrt(var + _EPS)
    shift = beta.astype(jnp.float32) - mean * scale
    return scale.reshape(1, -1), shift.reshape(1, -1)          # (1, C), (1, C)


# ---------------------------------------------------------------------------
# In-kernel helpers
# ---------------------------------------------------------------------------
def _pad_hw_1(x):
    """(H, W, C) bf16 value -> (H+2, W+2, C) with a zero 1-pixel halo (in VMEM)."""
    H, W, C = x.shape
    zrow = jnp.zeros((1, W, C), x.dtype)
    x = jnp.concatenate([zrow, x, zrow], axis=0)               # (H+2, W, C)
    zcol = jnp.zeros((H + 2, 1, C), x.dtype)
    return jnp.concatenate([zcol, x, zcol], axis=1)            # (H+2, W+2, C)


def _conv3x3_folded(xp, w_ref):
    """3x3 stride-1 conv of a halo-padded bf16 tile with dx folded into K.

    xp: (H+2, W+2, C) bf16 value; w_ref: (3, 3*C, Cout) bf16 ref (dx-major fold).
    Returns the (H*W, Cout) f32 accumulator value (no scratch round trips).
    """
    Hp, Wp, C = xp.shape
    H, W = Hp - 2, Wp - 2
    acc = None
    for dy in range(3):
        rows = xp[dy:dy + H]                                   # (H, W+2, C) bf16
        patch = jnp.concatenate(                               # dx folded onto lanes
            [rows[:, 0:W, :], rows[:, 1:W + 1, :], rows[:, 2:W + 2, :]],
            axis=-1).reshape(H * W, 3 * C)                     # (H*W, 3C) bf16
        part = jnp.dot(patch, w_ref[dy], preferred_element_type=jnp.float32)
        acc = part if acc is None else acc + part              # first tap = assignment
    return acc                                                 # (H*W, Cout) f32


def _partial_stats(acc):
    """Per-image (sum, sum-of-squares) of an (H*W, C) f32 tile -> (1, 2, C)."""
    s = jnp.sum(acc, axis=0, keepdims=True)
    ss = jnp.sum(acc * acc, axis=0, keepdims=True)
    return jnp.concatenate([s, ss], axis=0).reshape(1, 2, acc.shape[-1])


# ---------------------------------------------------------------------------
# Kernels
# ---------------------------------------------------------------------------
def _conv1_kernel(x_ref, w_ref, raw_ref, parts_ref):
    """conv1 of one image (bf16 MXU, f32 acc) + its BN partial statistics."""
    _, H, W, _ = x_ref.shape
    Cout = raw_ref.shape[-1]
    xp = _pad_hw_1(x_ref[0])                                   # bf16 halo-padded slab
    acc = _conv3x3_folded(xp, w_ref)                           # (H*W, Cout) f32
    parts_ref[...] = _partial_stats(acc)
    raw_ref[...] = acc.reshape(1, H, W, Cout).astype(raw_ref.dtype)


def _bn1_relu_conv2_kernel(raw1_ref, s_ref, t_ref, w_ref, raw2_ref, parts2_ref):
    """bn1 (precomputed scale/shift) + relu fused with conv2 + its partial stats."""
    _, H, W, C = raw1_ref.shape
    Cout = raw2_ref.shape[-1]
    y = raw1_ref[0].astype(jnp.float32).reshape(H * W, C)
    h = jnp.maximum(y * s_ref[...] + t_ref[...], 0.0)          # f32 BN + ReLU
    hp = _pad_hw_1(h.astype(jnp.bfloat16).reshape(H, W, C))    # single cast to bf16
    acc = _conv3x3_folded(hp, w_ref)
    parts2_ref[...] = _partial_stats(acc)
    raw2_ref[...] = acc.reshape(1, H, W, Cout).astype(raw2_ref.dtype)


def _bn2_add_relu_kernel(raw2_ref, res_ref, s_ref, t_ref, o_ref):
    """bn2 + residual add + relu, lane-dense (blocks are (1, tile_h, W*C))."""
    y = raw2_ref[...].astype(jnp.float32)
    r = res_ref[...].astype(jnp.float32)
    o_ref[...] = jnp.maximum(y * s_ref[...] + t_ref[...] + r, 0.0).astype(o_ref.dtype)


# ---------------------------------------------------------------------------
# pallas_call wrappers
# ---------------------------------------------------------------------------
def _conv1_call(x_bf, w_fold):
    N, H, W, C = x_bf.shape
    Cout = w_fold.shape[-1]
    est = (2 * _nbytes((1, H, W, C), jnp.bfloat16)            # input (double-buffered)
           + 2 * _nbytes((3, 3 * C, Cout), jnp.bfloat16)      # resident weights
           + 2 * _nbytes((1, H, W, Cout), jnp.bfloat16)       # raw out (double-buffered)
           + 2 * _nbytes((1, 2, Cout), jnp.float32)           # stats out
           + _nbytes((H + 2, W + 2, C), jnp.bfloat16)         # padded slab
           + 2 * _nbytes((H * W, 3 * C), jnp.bfloat16)        # im2col patches in flight
           + 2 * _nbytes((H * W, Cout), jnp.float32))         # f32 accumulator values
    return pl.pallas_call(
        _conv1_kernel,
        out_shape=(jax.ShapeDtypeStruct((N, H, W, Cout), jnp.bfloat16),
                   jax.ShapeDtypeStruct((N, 2, Cout), jnp.float32)),
        grid=(N,),
        in_specs=[
            pl.BlockSpec((1, H, W, C), lambda n: (n, 0, 0, 0)),
            pl.BlockSpec((3, 3 * C, Cout), lambda n: (0, 0, 0)),   # resident
        ],
        out_specs=(
            pl.BlockSpec((1, H, W, Cout), lambda n: (n, 0, 0, 0)),
            pl.BlockSpec((1, 2, Cout), lambda n: (n, 0, 0)),
        ),
        compiler_params=pltpu.CompilerParams(
            dimension_semantics=("parallel",),
            vmem_limit_bytes=_vmem_limit(est)),
    )(x_bf, w_fold)


def _bn1_relu_conv2_call(raw1, scale, shift, w_fold):
    N, H, W, C = raw1.shape
    Cout = w_fold.shape[-1]
    est = (2 * _nbytes((1, H, W, C), jnp.bfloat16)
           + 2 * _nbytes((3, 3 * C, Cout), jnp.bfloat16)
           + 2 * _nbytes((1, H, W, Cout), jnp.bfloat16)
           + 2 * _nbytes((1, 2, Cout), jnp.float32)
           + 2 * _nbytes((H * W, C), jnp.float32)              # f32 BN/ReLU temp
           + _nbytes((H + 2, W + 2, C), jnp.bfloat16)
           + 2 * _nbytes((H * W, 3 * C), jnp.bfloat16)
           + 2 * _nbytes((H * W, Cout), jnp.float32))
    return pl.pallas_call(
        _bn1_relu_conv2_kernel,
        out_shape=(jax.ShapeDtypeStruct((N, H, W, Cout), jnp.bfloat16),
                   jax.ShapeDtypeStruct((N, 2, Cout), jnp.float32)),
        grid=(N,),
        in_specs=[
            pl.BlockSpec((1, H, W, C), lambda n: (n, 0, 0, 0)),
            pl.BlockSpec((1, C), lambda n: (0, 0)),                # resident scale
            pl.BlockSpec((1, C), lambda n: (0, 0)),                # resident shift
            pl.BlockSpec((3, 3 * C, Cout), lambda n: (0, 0, 0)),   # resident weights
        ],
        out_specs=(
            pl.BlockSpec((1, H, W, Cout), lambda n: (n, 0, 0, 0)),
            pl.BlockSpec((1, 2, Cout), lambda n: (n, 0, 0)),
        ),
        compiler_params=pltpu.CompilerParams(
            dimension_semantics=("parallel",),
            vmem_limit_bytes=_vmem_limit(est)),
    )(raw1, scale, shift, w_fold)


def _bn2_add_relu_call(raw2_l, res_l, scale_l, shift_l, tile_h):
    """Lane-dense element-wise pass on (N, H, L) tensors with L = W*C."""
    N, H, L = raw2_l.shape
    est = (2 * _nbytes((1, tile_h, L), jnp.bfloat16) * 2        # two bf16 inputs
           + 2 * _nbytes((1, tile_h, L), jnp.float32)           # f32 output
           + 4 * _nbytes((1, tile_h, L), jnp.float32)           # f32 temporaries
           + 4 * _nbytes((1, L), jnp.float32))
    return pl.pallas_call(
        _bn2_add_relu_kernel,
        out_shape=jax.ShapeDtypeStruct((N, H, L), jnp.float32),
        grid=(N, H // tile_h),
        in_specs=[
            pl.BlockSpec((1, tile_h, L), lambda n, h: (n, h, 0)),
            pl.BlockSpec((1, tile_h, L), lambda n, h: (n, h, 0)),
            pl.BlockSpec((1, L), lambda n, h: (0, 0)),             # resident scale
            pl.BlockSpec((1, L), lambda n, h: (0, 0)),             # resident shift
        ],
        out_specs=pl.BlockSpec((1, tile_h, L), lambda n, h: (n, h, 0)),
        compiler_params=pltpu.CompilerParams(
            dimension_semantics=("parallel", "parallel"),
            vmem_limit_bytes=_vmem_limit(est)),
    )(raw2_l, res_l, scale_l, shift_l)


# ---------------------------------------------------------------------------
# BasicBlock forward
# ---------------------------------------------------------------------------
@jax.jit
def basic_block_forward(x_nchw, w1, g1, b1, w2, g2, b2):
    """BasicBlock forward (stride=1, downsample=None).

    x_nchw: (N, C, H, W) f32; w*: (Cout, Cin, 3, 3) PyTorch conv weights;
    g*/b*: (C,) BatchNorm weight/bias.  Returns (N, C, H, W) f32.
    """
    N, C, H, W = x_nchw.shape
    Cout = w1.shape[0]                                          # == C for BasicBlock

    # Layout glue: NCHW -> NHWC bf16 (C on lanes); fold dx into the contraction
    # dim of the weights once: (Cout, Cin, 3, 3) -> (kh, kw, Cin, Cout) -> (3, 3*Cin, Cout).
    x_bf = jnp.transpose(x_nchw, (0, 2, 3, 1)).astype(jnp.bfloat16)
    w1k = jnp.transpose(w1, (2, 3, 1, 0)).astype(jnp.bfloat16).reshape(3, 3 * C, Cout)
    w2k = jnp.transpose(w2, (2, 3, 1, 0)).astype(jnp.bfloat16).reshape(3, 3 * Cout, Cout)
    inv_count = 1.0 / float(N * H * W)

    # conv1 + per-image partial stats
    raw1, parts1 = _conv1_call(x_bf, w1k)
    s1, t1 = _bn_scale_shift(parts1, g1, b1, inv_count)         # tiny XLA reduce, once

    # bn1 + relu + conv2 + per-image partial stats (fused; conv1 activation never
    # re-touches HBM post-BN)
    raw2, parts2 = _bn1_relu_conv2_call(raw1, s1, t1, w2k)
    s2, t2 = _bn_scale_shift(parts2, g2, b2, inv_count)

    # bn2 + residual add + relu, lane-dense over W*C with large row tiles
    if H <= 64:
        tile_h = H
    else:
        tile_h = next((t for t in range(64, 7, -1) if H % t == 0 and t % 8 == 0), H)
    out_l = _bn2_add_relu_call(
        raw2.reshape(N, H, W * Cout),
        x_bf.reshape(N, H, W * C),
        jnp.tile(s2, (1, W)),                                    # (1, W*C), c-minor layout
        jnp.tile(t2, (1, W)),
        tile_h)

    out = out_l.reshape(N, H, W, Cout)
    return jnp.transpose(out, (0, 3, 1, 2))                      # back to NCHW


# ---------------------------------------------------------------------------
# Pure-JAX reference (mirrors the kernel's quantization points exactly:
# bf16 MXU operands / bf16 HBM intermediates, f32 accumulation & BN math).
# ---------------------------------------------------------------------------
def _reference_forward(x_nchw, w1, g1, b1, w2, g2, b2):
    x = jnp.transpose(x_nchw, (0, 2, 3, 1)).astype(jnp.bfloat16)
    w1k = jnp.transpose(w1, (2, 3, 1, 0)).astype(jnp.bfloat16)
    w2k = jnp.transpose(w2, (2, 3, 1, 0)).astype(jnp.bfloat16)

    def conv(h, w):
        return lax.conv_general_dilated(
            h, w, window_strides=(1, 1), padding=((1, 1), (1, 1)),
            dimension_numbers=("NHWC", "HWIO", "NHWC"),
            preferred_element_type=jnp.float32)

    def bn_apply(h_q, h_stats, g, b):
        mean = jnp.mean(h_stats, axis=(0, 1, 2), keepdims=True)
        var = jnp.mean(h_stats * h_stats, axis=(0, 1, 2), keepdims=True) - mean * mean
        scale = g.reshape(1, 1, 1, -1) * lax.rsqrt(var + _EPS)
        shift = b.reshape(1, 1, 1, -1) - mean * scale
        return h_q * scale + shift

    c1 = conv(x, w1k)                                        # f32
    c1q = c1.astype(jnp.bfloat16).astype(jnp.float32)        # bf16 HBM round trip
    h1 = jnp.maximum(bn_apply(c1q, c1, g1, b1), 0.0)
    c2 = conv(h1.astype(jnp.bfloat16), w2k)
    c2q = c2.astype(jnp.bfloat16).astype(jnp.float32)
    out = jnp.maximum(bn_apply(c2q, c2, g2, b2) + x.astype(jnp.float32), 0.0)
    return jnp.transpose(out, (0, 3, 1, 2))


if __name__ == "__main__":
    N, C, H, W = 2, 4, 16, 16
    key = jax.random.PRNGKey(0)
    k1, k2, k3, k4, k5, k6, k7 = jax.random.split(key, 7)

    x = jax.random.normal(k1, (N, C, H, W), jnp.float32)
    w1 = 0.1 * jax.random.normal(k2, (C, C, 3, 3), jnp.float32)   # conv1.weight
    w2 = 0.1 * jax.random.normal(k3, (C, C, 3, 3), jnp.float32)   # conv2.weight
    g1 = 1.0 + 0.1 * jax.random.normal(k4, (C,), jnp.float32)     # bn1.weight
    b1 = 0.1 * jax.random.normal(k5, (C,), jnp.float32)           # bn1.bias
    g2 = 1.0 + 0.1 * jax.random.normal(k6, (C,), jnp.float32)     # bn2.weight
    b2 = 0.1 * jax.random.normal(k7, (C,), jnp.float32)           # bn2.bias

    out = jax.block_until_ready(basic_block_forward(x, w1, g1, b1, w2, g2, b2))
    ref = _reference_forward(x, w1, g1, b1, w2, g2, b2)

    if out.shape != (N, C, H, W):
        raise RuntimeError(f"bad output shape {out.shape}")
    if not bool(jnp.allclose(out, ref, atol=2e-3, rtol=2e-3)):
        err = float(jnp.max(jnp.abs(out - ref)))
        raise RuntimeError(f"Pallas kernel mismatch vs. reference (max abs err {err})")
    print("KERNEL_OK")
</pallas_src>

<mosaic_0001>
module attributes {stable_mosaic.version = 11 : i64} {
  func.func @_conv1_kernel(%arg0: i32, %arg1: memref<1x16x16x4xbf16, #tpu.memory_space<vmem>>, %arg2: memref<3x12x4xbf16, #tpu.memory_space<vmem>>, %arg3: memref<1x16x16x4xbf16, #tpu.memory_space<vmem>>, %arg4: memref<1x2x4xf32, #tpu.memory_space<vmem>>) attributes {dimension_semantics = [#tpu.dimension_semantics<parallel>], iteration_bounds = array<i64: 2>, scalar_prefetch = 0 : i64, scratch_operands = 0 : i64, tpu.core_type = #tpu.core_type<tc>, window_params = [{transform_indices = @transform_0, window_bounds = array<i64: 1, 16, 16, 4>}, {pipeline_mode = #tpu.pipeline_mode<synchronous>, transform_indices = @transform_1, window_bounds = array<i64: 3, 12, 4>}, {transform_indices = @transform_2, window_bounds = array<i64: 1, 16, 16, 4>}, {transform_indices = @transform_3, window_bounds = array<i64: 1, 2, 4>}]} {
    %c0 = arith.constant 0 : index
    %c0_0 = arith.constant 0 : index
    %c0_1 = arith.constant 0 : index
    %c0_2 = arith.constant 0 : index
    %0 = vector.load %arg1[%c0, %c0_0, %c0_1, %c0_2] : memref<1x16x16x4xbf16, #tpu.memory_space<vmem>>, vector<1x16x16x4xbf16>
    %1 = vector.shape_cast %0 : vector<1x16x16x4xbf16> to vector<16x16x4xbf16>
    %cst = arith.constant 0.000000e+00 : bf16
    %2 = vector.broadcast %cst : bf16 to vector<1x16x4xbf16>
    %3 = tpu.concatenate %2, %1, %2 in 0 : vector<1x16x4xbf16>, vector<16x16x4xbf16>, vector<1x16x4xbf16> -> vector<18x16x4xbf16>
    %cst_3 = arith.constant 0.000000e+00 : bf16
    %4 = vector.broadcast %cst_3 : bf16 to vector<18x1x4xbf16>
    %5 = tpu.concatenate %4, %3, %4 in 1 : vector<18x1x4xbf16>, vector<18x16x4xbf16>, vector<18x1x4xbf16> -> vector<18x18x4xbf16>
    %6 = vector.extract_strided_slice %5 {offsets = [0, 0, 0], sizes = [16, 18, 4], strides = [1, 1, 1]} : vector<18x18x4xbf16> to vector<16x18x4xbf16>
    %7 = vector.extract_strided_slice %6 {offsets = [0, 0, 0], sizes = [16, 16, 4], strides = [1, 1, 1]} : vector<16x18x4xbf16> to vector<16x16x4xbf16>
    %8 = vector.extract_strided_slice %6 {offsets = [0, 1, 0], sizes = [16, 16, 4], strides = [1, 1, 1]} : vector<16x18x4xbf16> to vector<16x16x4xbf16>
    %9 = vector.extract_strided_slice %6 {offsets = [0, 2, 0], sizes = [16, 16, 4], strides = [1, 1, 1]} : vector<16x18x4xbf16> to vector<16x16x4xbf16>
    %10 = tpu.concatenate %7, %8, %9 in 2 : vector<16x16x4xbf16>, vector<16x16x4xbf16>, vector<16x16x4xbf16> -> vector<16x16x12xbf16>
    %11 = vector.shape_cast %10 : vector<16x16x12xbf16> to vector<256x12xbf16>
    %c0_4 = arith.constant 0 : index
    %c0_5 = arith.constant 0 : index
    %c0_6 = arith.constant 0 : index
    %12 = vector.load %arg2[%c0_4, %c0_5, %c0_6] : memref<3x12x4xbf16, #tpu.memory_space<vmem>>, vector<1x12x4xbf16>
    %13 = vector.shape_cast %12 : vector<1x12x4xbf16> to vector<12x4xbf16>
    %cst_7 = arith.constant dense<0.000000e+00> : vector<256x4xf32>
    %14 = tpu.matmul %11, %13, %cst_7 {dimension_numbers = #tpu.dot_dimension_numbers<[1], [0], [0], [1], [0, 0, 1, 1], [], []>} : vector<256x12xbf16>, vector<12x4xbf16>, vector<256x4xf32> -> vector<256x4xf32>
    %15 = vector.extract_strided_slice %5 {offsets = [1, 0, 0], sizes = [16, 18, 4], strides = [1, 1, 1]} : vector<18x18x4xbf16> to vector<16x18x4xbf16>
    %16 = vector.extract_strided_slice %15 {offsets = [0, 0, 0], sizes = [16, 16, 4], strides = [1, 1, 1]} : vector<16x18x4xbf16> to vector<16x16x4xbf16>
    %17 = vector.extract_strided_slice %15 {offsets = [0, 1, 0], sizes = [16, 16, 4], strides = [1, 1, 1]} : vector<16x18x4xbf16> to vector<16x16x4xbf16>
    %18 = vector.extract_strided_slice %15 {offsets = [0, 2, 0], sizes = [16, 16, 4], strides = [1, 1, 1]} : vector<16x18x4xbf16> to vector<16x16x4xbf16>
    %19 = tpu.concatenate %16, %17, %18 in 2 : vector<16x16x4xbf16>, vector<16x16x4xbf16>, vector<16x16x4xbf16> -> vector<16x16x12xbf16>
    %20 = vector.shape_cast %19 : vector<16x16x12xbf16> to vector<256x12xbf16>
    %c1 = arith.constant 1 : index
    %c0_8 = arith.constant 0 : index
    %c0_9 = arith.constant 0 : index
    %21 = vector.load %arg2[%c1, %c0_8, %c0_9] : memref<3x12x4xbf16, #tpu.memory_space<vmem>>, vector<1x12x4xbf16>
    %22 = vector.shape_cast %21 : vector<1x12x4xbf16> to vector<12x4xbf16>
    %cst_10 = arith.constant dense<0.000000e+00> : vector<256x4xf32>
    %23 = tpu.matmul %20, %22, %cst_10 {dimension_numbers = #tpu.dot_dimension_numbers<[1], [0], [0], [1], [0, 0, 1, 1], [], []>} : vector<256x12xbf16>, vector<12x4xbf16>, vector<256x4xf32> -> vector<256x4xf32>
    %24 = arith.addf %14, %23 : vector<256x4xf32>
    %25 = vector.extract_strided_slice %5 {offsets = [2, 0, 0], sizes = [16, 18, 4], strides = [1, 1, 1]} : vector<18x18x4xbf16> to vector<16x18x4xbf16>
    %26 = vector.extract_strided_slice %25 {offsets = [0, 0, 0], sizes = [16, 16, 4], strides = [1, 1, 1]} : vector<16x18x4xbf16> to vector<16x16x4xbf16>
    %27 = vector.extract_strided_slice %25 {offsets = [0, 1, 0], sizes = [16, 16, 4], strides = [1, 1, 1]} : vector<16x18x4xbf16> to vector<16x16x4xbf16>
    %28 = vector.extract_strided_slice %25 {offsets = [0, 2, 0], sizes = [16, 16, 4], strides = [1, 1, 1]} : vector<16x18x4xbf16> to vector<16x16x4xbf16>
    %29 = tpu.concatenate %26, %27, %28 in 2 : vector<16x16x4xbf16>, vector<16x16x4xbf16>, vector<16x16x4xbf16> -> vector<16x16x12xbf16>
    %30 = vector.shape_cast %29 : vector<16x16x12xbf16> to vector<256x12xbf16>
    %c2 = arith.constant 2 : index
    %c0_11 = arith.constant 0 : index
    %c0_12 = arith.constant 0 : index
    %31 = vector.load %arg2[%c2, %c0_11, %c0_12] : memref<3x12x4xbf16, #tpu.memory_space<vmem>>, vector<1x12x4xbf16>
    %32 = vector.shape_cast %31 : vector<1x12x4xbf16> to vector<12x4xbf16>
    %cst_13 = arith.constant dense<0.000000e+00> : vector<256x4xf32>
    %33 = tpu.matmul %30, %32, %cst_13 {dimension_numbers = #tpu.dot_dimension_numbers<[1], [0], [0], [1], [0, 0, 1, 1], [], []>} : vector<256x12xbf16>, vector<12x4xbf16>, vector<256x4xf32> -> vector<256x4xf32>
    %34 = arith.addf %24, %33 : vector<256x4xf32>
    %cst_14 = arith.constant dense<0.000000e+00> : vector<4xf32>
    %35 = vector.multi_reduction <add>, %34, %cst_14 [0] : vector<256x4xf32> to vector<4xf32>
    %36 = vector.shape_cast %35 : vector<4xf32> to vector<1x4xf32>
    %37 = arith.mulf %34, %34 : vector<256x4xf32>
    %cst_15 = arith.constant dense<0.000000e+00> : vector<4xf32>
    %38 = vector.multi_reduction <add>, %37, %cst_15 [0] : vector<256x4xf32> to vector<4xf32>
    %39 = vector.shape_cast %38 : vector<4xf32> to vector<1x4xf32>
    %40 = tpu.concatenate %36, %39 in 0 : vector<1x4xf32>, vector<1x4xf32> -> vector<2x4xf32>
    %41 = vector.shape_cast %40 : vector<2x4xf32> to vector<1x2x4xf32>
    %c0_16 = arith.constant 0 : index
    %c0_17 = arith.constant 0 : index
    %c0_18 = arith.constant 0 : index
    %42 = vector.load %arg4[%c0_16, %c0_17, %c0_18] : memref<1x2x4xf32, #tpu.memory_space<vmem>>, vector<1x2x4xf32>
    tpu.vector_store %arg4[%c0_16, %c0_17, %c0_18], %41 {strides = array<i32>} : memref<1x2x4xf32, #tpu.memory_space<vmem>>, vector<1x2x4xf32>,
    %43 = vector.shape_cast %34 : vector<256x4xf32> to vector<1x16x16x4xf32>
    %44 = arith.truncf %43 : vector<1x16x16x4xf32> to vector<1x16x16x4xbf16>
    %c0_19 = arith.constant 0 : index
    %c0_20 = arith.constant 0 : index
    %c0_21 = arith.constant 0 : index
    %c0_22 = arith.constant 0 : index
    %45 = vector.load %arg3[%c0_19, %c0_20, %c0_21, %c0_22] : memref<1x16x16x4xbf16, #tpu.memory_space<vmem>>, vector<1x16x16x4xbf16>
    tpu.vector_store %arg3[%c0_19, %c0_20, %c0_21, %c0_22], %44 {strides = array<i32>} : memref<1x16x16x4xbf16, #tpu.memory_space<vmem>>, vector<1x16x16x4xbf16>,
    return
  }
  func.func @transform_0(%arg0: i32) -> (i32, i32, i32, i32) {
    %c0_i32 = arith.constant 0 : i32
    %c0_i32_0 = arith.constant 0 : i32
    %c0_i32_1 = arith.constant 0 : i32
    %c0_i32_2 = arith.constant 0 : i32
    return %arg0, %c0_i32, %c0_i32_0, %c0_i32_1 : i32, i32, i32, i32
  }
  func.func @transform_1(%arg0: i32) -> (i32, i32, i32) {
    %c0_i32 = arith.constant 0 : i32
    %c0_i32_0 = arith.constant 0 : i32
    %c0_i32_1 = arith.constant 0 : i32
    %c0_i32_2 = arith.constant 0 : i32
    return %c0_i32, %c0_i32_0, %c0_i32_1 : i32, i32, i32
  }
  func.func @transform_2(%arg0: i32) -> (i32, i32, i32, i32) {
    %c0_i32 = arith.constant 0 : i32
    %c0_i32_0 = arith.constant 0 : i32
    %c0_i32_1 = arith.constant 0 : i32
    %c0_i32_2 = arith.constant 0 : i32
    return %arg0, %c0_i32, %c0_i32_0, %c0_i32_1 : i32, i32, i32, i32
  }
  func.func @transform_3(%arg0: i32) -> (i32, i32, i32) {
    %c0_i32 = arith.constant 0 : i32
    %c0_i32_0 = arith.constant 0 : i32
    %c0_i32_1 = arith.constant 0 : i32
    return %arg0, %c0_i32, %c0_i32_0 : i32, i32, i32
  }
}

module attributes {stable_mosaic.version = 11 : i64} {
  func.func @_bn1_relu_conv2_kernel(%arg0: i32, %arg1: memref<1x16x16x4xbf16, #tpu.memory_space<vmem>>, %arg2: memref<1x4xf32, #tpu.memory_space<vmem>>, %arg3: memref<1x4xf32, #tpu.memory_space<vmem>>, %arg4: memref<3x12x4xbf16, #tpu.memory_space<vmem>>, %arg5: memref<1x16x16x4xbf16, #tpu.memory_space<vmem>>, %arg6: memref<1x2x4xf32, #tpu.memory_space<vmem>>) attributes {dimension_semantics = [#tpu.dimension_semantics<parallel>], iteration_bounds = array<i64: 2>, scalar_prefetch = 0 : i64, scratch_operands = 0 : i64, tpu.core_type = #tpu.core_type<tc>, window_params = [{transform_indices = @transform_0, window_bounds = array<i64: 1, 16, 16, 4>}, {pipeline_mode = #tpu.pipeline_mode<synchronous>, transform_indices = @transform_1, window_bounds = array<i64: 1, 4>}, {pipeline_mode = #tpu.pipeline_mode<synchronous>, transform_indices = @transform_2, window_bounds = array<i64: 1, 4>}, {pipeline_mode = #tpu.pipeline_mode<synchronous>, transform_indices = @transform_3, window_bounds = array<i64: 3, 12, 4>}, {transform_indices = @transform_4, window_bounds = array<i64: 1, 16, 16, 4>}, {transform_indices = @transform_5, window_bounds = array<i64: 1, 2, 4>}]} {
    %c0 = arith.constant 0 : index
    %c0_0 = arith.constant 0 : index
    %c0_1 = arith.constant 0 : index
    %c0_2 = arith.constant 0 : index
    %0 = vector.load %arg1[%c0, %c0_0, %c0_1, %c0_2] : memref<1x16x16x4xbf16, #tpu.memory_space<vmem>>, vector<1x16x16x4xbf16>
    %1 = vector.shape_cast %0 : vector<1x16x16x4xbf16> to vector<16x16x4xbf16>
    %2 = arith.extf %1 : vector<16x16x4xbf16> to vector<16x16x4xf32>
    %3 = vector.shape_cast %2 : vector<16x16x4xf32> to vector<256x4xf32>
    %c0_3 = arith.constant 0 : index
    %c0_4 = arith.constant 0 : index
    %4 = vector.load %arg2[%c0_3, %c0_4] : memref<1x4xf32, #tpu.memory_space<vmem>>, vector<1x4xf32>
    %5 = vector.broadcast %4 : vector<1x4xf32> to vector<256x4xf32>
    %6 = arith.mulf %3, %5 : vector<256x4xf32>
    %c0_5 = arith.constant 0 : index
    %c0_6 = arith.constant 0 : index
    %7 = vector.load %arg3[%c0_5, %c0_6] : memref<1x4xf32, #tpu.memory_space<vmem>>, vector<1x4xf32>
    %8 = vector.broadcast %7 : vector<1x4xf32> to vector<256x4xf32>
    %9 = arith.addf %6, %8 : vector<256x4xf32>
    %cst = arith.constant 0.000000e+00 : f32
    %10 = vector.broadcast %cst : f32 to vector<256x4xf32>
    %11 = arith.maximumf %9, %10 : vector<256x4xf32>
    %12 = arith.truncf %11 : vector<256x4xf32> to vector<256x4xbf16>
    %13 = vector.shape_cast %12 : vector<256x4xbf16> to vector<16x16x4xbf16>
    %cst_7 = arith.constant 0.000000e+00 : bf16
    %14 = vector.broadcast %cst_7 : bf16 to vector<1x16x4xbf16>
    %15 = tpu.concatenate %14, %13, %14 in 0 : vector<1x16x4xbf16>, vector<16x16x4xbf16>, vector<1x16x4xbf16> -> vector<18x16x4xbf16>
    %cst_8 = arith.constant 0.000000e+00 : bf16
    %16 = vector.broadcast %cst_8 : bf16 to vector<18x1x4xbf16>
    %17 = tpu.concatenate %16, %15, %16 in 1 : vector<18x1x4xbf16>, vector<18x16x4xbf16>, vector<18x1x4xbf16> -> vector<18x18x4xbf16>
    %18 = vector.extract_strided_slice %17 {offsets = [0, 0, 0], sizes = [16, 18, 4], strides = [1, 1, 1]} : vector<18x18x4xbf16> to vector<16x18x4xbf16>
    %19 = vector.extract_strided_slice %18 {offsets = [0, 0, 0], sizes = [16, 16, 4], strides = [1, 1, 1]} : vector<16x18x4xbf16> to vector<16x16x4xbf16>
    %20 = vector.extract_strided_slice %18 {offsets = [0, 1, 0], sizes = [16, 16, 4], strides = [1, 1, 1]} : vector<16x18x4xbf16> to vector<16x16x4xbf16>
    %21 = vector.extract_strided_slice %18 {offsets = [0, 2, 0], sizes = [16, 16, 4], strides = [1, 1, 1]} : vector<16x18x4xbf16> to vector<16x16x4xbf16>
    %22 = tpu.concatenate %19, %20, %21 in 2 : vector<16x16x4xbf16>, vector<16x16x4xbf16>, vector<16x16x4xbf16> -> vector<16x16x12xbf16>
    %23 = vector.shape_cast %22 : vector<16x16x12xbf16> to vector<256x12xbf16>
    %c0_9 = arith.constant 0 : index
    %c0_10 = arith.constant 0 : index
    %c0_11 = arith.constant 0 : index
    %24 = vector.load %arg4[%c0_9, %c0_10, %c0_11] : memref<3x12x4xbf16, #tpu.memory_space<vmem>>, vector<1x12x4xbf16>
    %25 = vector.shape_cast %24 : vector<1x12x4xbf16> to vector<12x4xbf16>
    %cst_12 = arith.constant dense<0.000000e+00> : vector<256x4xf32>
    %26 = tpu.matmul %23, %25, %cst_12 {dimension_numbers = #tpu.dot_dimension_numbers<[1], [0], [0], [1], [0, 0, 1, 1], [], []>} : vector<256x12xbf16>, vector<12x4xbf16>, vector<256x4xf32> -> vector<256x4xf32>
    %27 = vector.extract_strided_slice %17 {offsets = [1, 0, 0], sizes = [16, 18, 4], strides = [1, 1, 1]} : vector<18x18x4xbf16> to vector<16x18x4xbf16>
    %28 = vector.extract_strided_slice %27 {offsets = [0, 0, 0], sizes = [16, 16, 4], strides = [1, 1, 1]} : vector<16x18x4xbf16> to vector<16x16x4xbf16>
    %29 = vector.extract_strided_slice %27 {offsets = [0, 1, 0], sizes = [16, 16, 4], strides = [1, 1, 1]} : vector<16x18x4xbf16> to vector<16x16x4xbf16>
    %30 = vector.extract_strided_slice %27 {offsets = [0, 2, 0], sizes = [16, 16, 4], strides = [1, 1, 1]} : vector<16x18x4xbf16> to vector<16x16x4xbf16>
    %31 = tpu.concatenate %28, %29, %30 in 2 : vector<16x16x4xbf16>, vector<16x16x4xbf16>, vector<16x16x4xbf16> -> vector<16x16x12xbf16>
    %32 = vector.shape_cast %31 : vector<16x16x12xbf16> to vector<256x12xbf16>
    %c1 = arith.constant 1 : index
    %c0_13 = arith.constant 0 : index
    %c0_14 = arith.constant 0 : index
    %33 = vector.load %arg4[%c1, %c0_13, %c0_14] : memref<3x12x4xbf16, #tpu.memory_space<vmem>>, vector<1x12x4xbf16>
    %34 = vector.shape_cast %33 : vector<1x12x4xbf16> to vector<12x4xbf16>
    %cst_15 = arith.constant dense<0.000000e+00> : vector<256x4xf32>
    %35 = tpu.matmul %32, %34, %cst_15 {dimension_numbers = #tpu.dot_dimension_numbers<[1], [0], [0], [1], [0, 0, 1, 1], [], []>} : vector<256x12xbf16>, vector<12x4xbf16>, vector<256x4xf32> -> vector<256x4xf32>
    %36 = arith.addf %26, %35 : vector<256x4xf32>
    %37 = vector.extract_strided_slice %17 {offsets = [2, 0, 0], sizes = [16, 18, 4], strides = [1, 1, 1]} : vector<18x18x4xbf16> to vector<16x18x4xbf16>
    %38 = vector.extract_strided_slice %37 {offsets = [0, 0, 0], sizes = [16, 16, 4], strides = [1, 1, 1]} : vector<16x18x4xbf16> to vector<16x16x4xbf16>
    %39 = vector.extract_strided_slice %37 {offsets = [0, 1, 0], sizes = [16, 16, 4], strides = [1, 1, 1]} : vector<16x18x4xbf16> to vector<16x16x4xbf16>
    %40 = vector.extract_strided_slice %37 {offsets = [0, 2, 0], sizes = [16, 16, 4], strides = [1, 1, 1]} : vector<16x18x4xbf16> to vector<16x16x4xbf16>
    %41 = tpu.concatenate %38, %39, %40 in 2 : vector<16x16x4xbf16>, vector<16x16x4xbf16>, vector<16x16x4xbf16> -> vector<16x16x12xbf16>
    %42 = vector.shape_cast %41 : vector<16x16x12xbf16> to vector<256x12xbf16>
    %c2 = arith.constant 2 : index
    %c0_16 = arith.constant 0 : index
    %c0_17 = arith.constant 0 : index
    %43 = vector.load %arg4[%c2, %c0_16, %c0_17] : memref<3x12x4xbf16, #tpu.memory_space<vmem>>, vector<1x12x4xbf16>
    %44 = vector.shape_cast %43 : vector<1x12x4xbf16> to vector<12x4xbf16>
    %cst_18 = arith.constant dense<0.000000e+00> : vector<256x4xf32>
    %45 = tpu.matmul %42, %44, %cst_18 {dimension_numbers = #tpu.dot_dimension_numbers<[1], [0], [0], [1], [0, 0, 1, 1], [], []>} : vector<256x12xbf16>, vector<12x4xbf16>, vector<256x4xf32> -> vector<256x4xf32>
    %46 = arith.addf %36, %45 : vector<256x4xf32>
    %cst_19 = arith.constant dense<0.000000e+00> : vector<4xf32>
    %47 = vector.multi_reduction <add>, %46, %cst_19 [0] : vector<256x4xf32> to vector<4xf32>
    %48 = vector.shape_cast %47 : vector<4xf32> to vector<1x4xf32>
    %49 = arith.mulf %46, %46 : vector<256x4xf32>
    %cst_20 = arith.constant dense<0.000000e+00> : vector<4xf32>
    %50 = vector.multi_reduction <add>, %49, %cst_20 [0] : vector<256x4xf32> to vector<4xf32>
    %51 = vector.shape_cast %50 : vector<4xf32> to vector<1x4xf32>
    %52 = tpu.concatenate %48, %51 in 0 : vector<1x4xf32>, vector<1x4xf32> -> vector<2x4xf32>
    %53 = vector.shape_cast %52 : vector<2x4xf32> to vector<1x2x4xf32>
    %c0_21 = arith.constant 0 : index
    %c0_22 = arith.constant 0 : index
    %c0_23 = arith.constant 0 : index
    %54 = vector.load %arg6[%c0_21, %c0_22, %c0_23] : memref<1x2x4xf32, #tpu.memory_space<vmem>>, vector<1x2x4xf32>
    tpu.vector_store %arg6[%c0_21, %c0_22, %c0_23], %53 {strides = array<i32>} : memref<1x2x4xf32, #tpu.memory_space<vmem>>, vector<1x2x4xf32>,
    %55 = vector.shape_cast %46 : vector<256x4xf32> to vector<1x16x16x4xf32>
    %56 = arith.truncf %55 : vector<1x16x16x4xf32> to vector<1x16x16x4xbf16>
    %c0_24 = arith.constant 0 : index
    %c0_25 = arith.constant 0 : index
    %c0_26 = arith.constant 0 : index
    %c0_27 = arith.constant 0 : index
    %57 = vector.load %arg5[%c0_24, %c0_25, %c0_26, %c0_27] : memref<1x16x16x4xbf16, #tpu.memory_space<vmem>>, vector<1x16x16x4xbf16>
    tpu.vector_store %arg5[%c0_24, %c0_25, %c0_26, %c0_27], %56 {strides = array<i32>} : memref<1x16x16x4xbf16, #tpu.memory_space<vmem>>, vector<1x16x16x4xbf16>,
    return
  }
  func.func @transform_0(%arg0: i32) -> (i32, i32, i32, i32) {
    %c0_i32 = arith.constant 0 : i32
    %c0_i32_0 = arith.constant 0 : i32
    %c0_i32_1 = arith.constant 0 : i32
    %c0_i32_2 = arith.constant 0 : i32
    return %arg0, %c0_i32, %c0_i32_0, %c0_i32_1 : i32, i32, i32, i32
  }
  func.func @transform_1(%arg0: i32) -> (i32, i32) {
    %c0_i32 = arith.constant 0 : i32
    %c0_i32_0 = arith.constant 0 : i32
    %c0_i32_1 = arith.constant 0 : i32
    return %c0_i32, %c0_i32_0 : i32, i32
  }
  func.func @transform_2(%arg0: i32) -> (i32, i32) {
    %c0_i32 = arith.constant 0 : i32
    %c0_i32_0 = arith.constant 0 : i32
    %c0_i32_1 = arith.constant 0 : i32
    return %c0_i32, %c0_i32_0 : i32, i32
  }
  func.func @transform_3(%arg0: i32) -> (i32, i32, i32) {
    %c0_i32 = arith.constant 0 : i32
    %c0_i32_0 = arith.constant 0 : i32
    %c0_i32_1 = arith.constant 0 : i32
    %c0_i32_2 = arith.constant 0 : i32
    return %c0_i32, %c0_i32_0, %c0_i32_1 : i32, i32, i32
  }
  func.func @transform_4(%arg0: i32) -> (i32, i32, i32, i32) {
    %c0_i32 = arith.constant 0 : i32
    %c0_i32_0 = arith.constant 0 : i32
    %c0_i32_1 = arith.constant 0 : i32
    %c0_i32_2 = arith.constant 0 : i32
    return %arg0, %c0_i32, %c0_i32_0, %c0_i32_1 : i32, i32, i32, i32
  }
  func.func @transform_5(%arg0: i32) -> (i32, i32, i32) {
    %c0_i32 = arith.constant 0 : i32
    %c0_i32_0 = arith.constant 0 : i32
    %c0_i32_1 = arith.constant 0 : i32
    return %arg0, %c0_i32, %c0_i32_0 : i32, i32, i32
  }
}

module attributes {stable_mosaic.version = 11 : i64} {
  func.func @_bn2_add_relu_kernel(%arg0: i32, %arg1: i32, %arg2: memref<1x16x64xbf16, #tpu.memory_space<vmem>>, %arg3: memref<1x16x64xbf16, #tpu.memory_space<vmem>>, %arg4: memref<1x64xf32, #tpu.memory_space<vmem>>, %arg5: memref<1x64xf32, #tpu.memory_space<vmem>>, %arg6: memref<1x16x64xf32, #tpu.memory_space<vmem>>) attributes {dimension_semantics = [#tpu.dimension_semantics<parallel>, #tpu.dimension_semantics<parallel>], iteration_bounds = array<i64: 2, 1>, scalar_prefetch = 0 : i64, scratch_operands = 0 : i64, tpu.core_type = #tpu.core_type<tc>, window_params = [{transform_indices = @transform_0, window_bounds = array<i64: 1, 16, 64>}, {transform_indices = @transform_1, window_bounds = array<i64: 1, 16, 64>}, {pipeline_mode = #tpu.pipeline_mode<synchronous>, transform_indices = @transform_2, window_bounds = array<i64: 1, 64>}, {pipeline_mode = #tpu.pipeline_mode<synchronous>, transform_indices = @transform_3, window_bounds = array<i64: 1, 64>}, {transform_indices = @transform_4, window_bounds = array<i64: 1, 16, 64>}]} {
    %c0 = arith.constant 0 : index
    %c0_0 = arith.constant 0 : index
    %c0_1 = arith.constant 0 : index
    %0 = vector.load %arg2[%c0, %c0_0, %c0_1] : memref<1x16x64xbf16, #tpu.memory_space<vmem>>, vector<1x16x64xbf16>
    %1 = arith.extf %0 : vector<1x16x64xbf16> to vector<1x16x64xf32>
    %c0_2 = arith.constant 0 : index
    %c0_3 = arith.constant 0 : index
    %c0_4 = arith.constant 0 : index
    %2 = vector.load %arg3[%c0_2, %c0_3, %c0_4] : memref<1x16x64xbf16, #tpu.memory_space<vmem>>, vector<1x16x64xbf16>
    %3 = arith.extf %2 : vector<1x16x64xbf16> to vector<1x16x64xf32>
    %c0_5 = arith.constant 0 : index
    %c0_6 = arith.constant 0 : index
    %4 = vector.load %arg4[%c0_5, %c0_6] : memref<1x64xf32, #tpu.memory_space<vmem>>, vector<1x64xf32>
    %5 = vector.shape_cast %4 : vector<1x64xf32> to vector<1x1x64xf32>
    %6 = vector.broadcast %5 : vector<1x1x64xf32> to vector<1x16x64xf32>
    %7 = arith.mulf %1, %6 : vector<1x16x64xf32>
    %c0_7 = arith.constant 0 : index
    %c0_8 = arith.constant 0 : index
    %8 = vector.load %arg5[%c0_7, %c0_8] : memref<1x64xf32, #tpu.memory_space<vmem>>, vector<1x64xf32>
    %9 = vector.shape_cast %8 : vector<1x64xf32> to vector<1x1x64xf32>
    %10 = vector.broadcast %9 : vector<1x1x64xf32> to vector<1x16x64xf32>
    %11 = arith.addf %7, %10 : vector<1x16x64xf32>
    %12 = arith.addf %11, %3 : vector<1x16x64xf32>
    %cst = arith.constant 0.000000e+00 : f32
    %13 = vector.broadcast %cst : f32 to vector<1x16x64xf32>
    %14 = arith.maximumf %12, %13 : vector<1x16x64xf32>
    %c0_9 = arith.constant 0 : index
    %c0_10 = arith.constant 0 : index
    %c0_11 = arith.constant 0 : index
    %15 = vector.load %arg6[%c0_9, %c0_10, %c0_11] : memref<1x16x64xf32, #tpu.memory_space<vmem>>, vector<1x16x64xf32>
    tpu.vector_store %arg6[%c0_9, %c0_10, %c0_11], %14 {strides = array<i32>} : memref<1x16x64xf32, #tpu.memory_space<vmem>>, vector<1x16x64xf32>,
    return
  }
  func.func @transform_0(%arg0: i32, %arg1: i32) -> (i32, i32, i32) {
    %c0_i32 = arith.constant 0 : i32
    %c0_i32_0 = arith.constant 0 : i32
    return %arg0, %arg1, %c0_i32 : i32, i32, i32
  }
  func.func @transform_1(%arg0: i32, %arg1: i32) -> (i32, i32, i32) {
    %c0_i32 = arith.constant 0 : i32
    %c0_i32_0 = arith.constant 0 : i32
    return %arg0, %arg1, %c0_i32 : i32, i32, i32
  }
  func.func @transform_2(%arg0: i32, %arg1: i32) -> (i32, i32) {
    %c0_i32 = arith.constant 0 : i32
    %c0_i32_0 = arith.constant 0 : i32
    %c0_i32_1 = arith.constant 0 : i32
    return %c0_i32, %c0_i32_0 : i32, i32
  }
  func.func @transform_3(%arg0: i32, %arg1: i32) -> (i32, i32) {
    %c0_i32 = arith.constant 0 : i32
    %c0_i32_0 = arith.constant 0 : i32
    %c0_i32_1 = arith.constant 0 : i32
    return %c0_i32, %c0_i32_0 : i32, i32
  }
  func.func @transform_4(%arg0: i32, %arg1: i32) -> (i32, i32, i32) {
    %c0_i32 = arith.constant 0 : i32
    %c0_i32_0 = arith.constant 0 : i32
    return %arg0, %arg1, %c0_i32 : i32, i32, i32
  }
}

</mosaic_0001>

<llo_original>
// kernel: basic_block_forward.5
$region0: #{basic_block_forward.5}
  #allocation0 [shape = 'u32[]', space=smem, size = 0x4, offset = 0x4, fixed_abs, tag = 'smem constant byte address 0x4 - core index']
  #allocation1 [shape = 'u32[144,128]{1,0:T(1,128)}', space=vmem, size = 0x12000, scoped, tag = 'internal scratch']
  %s0 = inlined_call_operand.vmem [shape: bf16[2,16,64], index: 0, kind: input, shape index: {}]
  %s1 = inlined_call_operand.vmem [shape: bf16[2,16,64], index: 1, kind: input, shape index: {}]
  %s2 = inlined_call_operand.vmem [shape: f32[1,64], index: 2, kind: input, shape index: {}]
  %s3 = inlined_call_operand.vmem [shape: f32[1,64], index: 3, kind: input, shape index: {}]
  %s4 = inlined_call_operand.vmem [shape: f32[2,16,64], index: 4, kind: output, shape index: {}]
  %s5 = sld [smem:[#allocation0]]
  $region49: #{basic_block_forward.5} parent=0
    _
  %s7 = ssub.s32 1, %s5
  %s8 = scalar_select 0, %s7, %s5
  loop: start=0, step=1, limit=4
  $region2: #{basic_block_forward.5} parent=0 // loop_pre_header
    _
  $region3: #{basic_block_forward.5} parent=0 // loop_header
    %s10 = sphi 0, %s14
    %p11 = scmp.ge.s32.totalorder %s10, 4
    %s17 = sphi 0, %s29
    %s18 = sphi 0, %s25
    %s19 = sphi 0, %s17
    %s20 = sphi 0, %s18
    %s21 = sphi 0, %s19
    %s22 = sphi 0, %s20
    %s34 = sphi 0, %s36
    %s37 = sphi 0, %s34
    %s38 = sphi 0, %s37
    %s54 = sphi 0, %s38
    %s62 = sphi 0, %s64
    %s65 = sphi 0, %s62
    %s66 = sphi 0, %s65
    %s82 = sphi 0, %s66
    %s86 = sphi 0, %s86
    %s88 = sphi 0, %s86
    %s89 = sphi 0, %s88
    %s103 = sphi 0, %s89
    %s107 = sphi 0, %s107
    %s109 = sphi 0, %s107
    %s110 = sphi 0, %s109
    %s124 = sphi 0, %s110
    %s132 = sphi 0, %s134
    %s135 = sphi 0, %s132
    %s136 = sphi 0, %s135
    %s152 = sphi 0, %s136
  $region4: #{basic_block_forward.5} parent=0 // loop_header_branch
    %13 = sbr.rel (%p11) target = $region8
  $region5: #{basic_block_forward.5} parent=0 // loop_body
    %s15 = ssub.s32 %s10, 1
    %s16 = ssub.s32 %s10, 2
    %s23 = sadd.s32 1, %s18
    %p24 = scmp.ge.s32.totalorder %s23, 1
    %s25 = scalar_select %p24, 0, %s23
    %s26 = sadd.s32 1, %s17
    %s27 = scalar_select %p24, %s26, %s17
    %p28 = scmp.ge.s32.totalorder %s27, 2
    %s29 = scalar_select %p28, 0, %s27
    %s30 = ssub.s32 %s17, %s29
    %s31 = ssub.s32 %s18, %s25
    %s32 = sor.u32 %s30, %s31
    %p33 = scmp.eq.s32.totalorder %s32, 0
    %s35 = sadd.s32 %s34, 1
    %s36 = scalar_select %p33, %s34, %s35
    %p39 = pneg %p33
    %p40 = scmp.eq.s32.totalorder %s10, 1
    %p41 = por %p39, %p40
    %p42 = scmp.ne.s32.totalorder %s34, %s37
    %p43 = scmp.eq.s32.totalorder %s10, 0
    %p44 = por %p42, %p43
    %p45 = scmp.ne.s32.totalorder %s34, %s37
    %p46 = scmp.eq.s32.totalorder %s15, 1
    %p47 = por %p45, %p46
    %p48 = scmp.ne.s32.totalorder %s37, %s38
    %p49 = scmp.eq.s32.totalorder %s15, 0
    %p50 = por %p48, %p49
    %p51 = scmp.ne.s32.totalorder %s37, %s38
    %p52 = scmp.eq.s32.totalorder %s16, 1
    %p53 = por %p51, %p52
    %p55 = scmp.ne.s32.totalorder %s38, %s54
    %p56 = scmp.eq.s32.totalorder %s16, 0
    %p57 = por %p55, %p56
    %s58 = ssub.s32 %s17, %s29
    %s59 = ssub.s32 %s18, %s25
    %s60 = sor.u32 %s58, %s59
    %p61 = scmp.eq.s32.totalorder %s60, 0
    %s63 = sadd.s32 %s62, 1
    %s64 = scalar_select %p61, %s62, %s63
    %p67 = pneg %p61
    %p68 = scmp.eq.s32.totalorder %s10, 1
    %p69 = por %p67, %p68
    %p70 = scmp.ne.s32.totalorder %s62, %s65
    %p71 = scmp.eq.s32.totalorder %s10, 0
    %p72 = por %p70, %p71
    %p73 = scmp.ne.s32.totalorder %s62, %s65
    %p74 = scmp.eq.s32.totalorder %s15, 1
    %p75 = por %p73, %p74
    %p76 = scmp.ne.s32.totalorder %s65, %s66
    %p77 = scmp.eq.s32.totalorder %s15, 0
    %p78 = por %p76, %p77
    %p79 = scmp.ne.s32.totalorder %s65, %s66
    %p80 = scmp.eq.s32.totalorder %s16, 1
    %p81 = por %p79, %p80
    %p83 = scmp.ne.s32.totalorder %s66, %s82
    %p84 = scmp.eq.s32.totalorder %s16, 0
    %p85 = por %p83, %p84
    %s87 = sadd.s32 %s86, 1
    %p90 = scmp.eq.s32.totalorder %s10, 1
    %p91 = scmp.ne.s32.totalorder %s86, %s88
    %p92 = scmp.eq.s32.totalorder %s10, 0
    %p93 = por %p91, %p92
    %p94 = scmp.ne.s32.totalorder %s86, %s88
    %p95 = scmp.eq.s32.totalorder %s15, 1
    %p96 = por %p94, %p95
    %p97 = scmp.ne.s32.totalorder %s88, %s89
    %p98 = scmp.eq.s32.totalorder %s15, 0
    %p99 = por %p97, %p98
    %p100 = scmp.ne.s32.totalorder %s88, %s89
    %p101 = scmp.eq.s32.totalorder %s16, 1
    %p102 = por %p100, %p101
    %p104 = scmp.ne.s32.totalorder %s89, %s103
    %p105 = scmp.eq.s32.totalorder %s16, 0
    %p106 = por %p104, %p105
    %s108 = sadd.s32 %s107, 1
    %p111 = scmp.eq.s32.totalorder %s10, 1
    %p112 = scmp.ne.s32.totalorder %s107, %s109
    %p113 = scmp.eq.s32.totalorder %s10, 0
    %p114 = por %p112, %p113
    %p115 = scmp.ne.s32.totalorder %s107, %s109
    %p116 = scmp.eq.s32.totalorder %s15, 1
    %p117 = por %p115, %p116
    %p118 = scmp.ne.s32.totalorder %s109, %s110
    %p119 = scmp.eq.s32.totalorder %s15, 0
    %p120 = por %p118, %p119
    %p121 = scmp.ne.s32.totalorder %s109, %s110
    %p122 = scmp.eq.s32.totalorder %s16, 1
    %p123 = por %p121, %p122
    %p125 = scmp.ne.s32.totalorder %s110, %s124
    %p126 = scmp.eq.s32.totalorder %s16, 0
    %p127 = por %p125, %p126
    %s128 = ssub.s32 %s17, %s29
    %s129 = ssub.s32 %s18, %s25
    %s130 = sor.u32 %s128, %s129
    %p131 = scmp.eq.s32.totalorder %s130, 0
    %s133 = sadd.s32 %s132, 1
    %s134 = scalar_select %p131, %s132, %s133
    %p137 = pneg %p131
    %p138 = scmp.eq.s32.totalorder %s10, 1
    %p139 = por %p137, %p138
    %p140 = scmp.ne.s32.totalorder %s132, %s135
    %p141 = scmp.eq.s32.totalorder %s10, 0
    %p142 = por %p140, %p141
    %p143 = scmp.ne.s32.totalorder %s132, %s135
    %p144 = scmp.eq.s32.totalorder %s15, 1
    %p145 = por %p143, %p144
    %p146 = scmp.ne.s32.totalorder %s135, %s136
    %p147 = scmp.eq.s32.totalorder %s15, 0
    %p148 = por %p146, %p147
    %p149 = scmp.ne.s32.totalorder %s135, %s136
    %p150 = scmp.eq.s32.totalorder %s16, 1
    %p151 = por %p149, %p150
    %p153 = scmp.ne.s32.totalorder %s136, %s152
    %p154 = scmp.eq.s32.totalorder %s16, 0
    %p155 = por %p153, %p154
    %p156 = scmp.le.s32.totalorder 1, %s10
    %p157 = scmp.lt.s32.totalorder %s10, 3
    %p158 = pnand %p156, %p157
    %p159 = pneg %p158
    // Predicated region
    $region9: #{basic_block_forward.5} parent=5 // pred_check
      _
    $region10: #{basic_block_forward.5} parent=5 // pred_check_branch
      %161 = sbr.rel (%p158) target = $region12
    $region11: #{basic_block_forward.5} parent=5 // pred_region
      %s162 = ssub.s32 %s10, 1
      // Predicated region
      $region13: #{basic_block_forward.5} parent=11 // pred_check
        %p163 = pneg %p99
      $region14: #{basic_block_forward.5} parent=11 // pred_check_branch
        %165 = sbr.rel (%p163) target = $region16
      $region15: #{basic_block_forward.5} parent=11 // pred_region
        _
      $region16: #{basic_block_forward.5} parent=11 // pred_fallthru
        _
      // Predicated region
      $region17: #{basic_block_forward.5} parent=11 // pred_check
        %p166 = pneg %p120
      $region18: #{basic_block_forward.5} parent=11 // pred_check_branch
        %168 = sbr.rel (%p166) target = $region20
      $region19: #{basic_block_forward.5} parent=11 // pred_region
        _
      $region20: #{basic_block_forward.5} parent=11 // pred_fallthru
        _
    $region12: #{basic_block_forward.5} parent=5 // pred_fallthru
      _
    %p169 = scmp.lt.s32.totalorder %s10, 2
    // Predicated region
    $region21: #{basic_block_forward.5} parent=5 // pred_check
      %p170 = pneg %p169
    $region22: #{basic_block_forward.5} parent=5 // pred_check_branch
      %172 = sbr.rel (%p170) target = $region24
    $region23: #{basic_block_forward.5} parent=5 // pred_region
      // Predicated region
      $region25: #{basic_block_forward.5} parent=23 // pred_check
        %p173 = pneg %p44
      $region26: #{basic_block_forward.5} parent=23 // pred_check_branch
        %175 = sbr.rel (%p173) target = $region28
      $region27: #{basic_block_forward.5} parent=23 // pred_region
        %s176 = smul.u32 2, %s18
        %p177 = scmp.lt.s32.totalorder %s17, 1
        %s178 = scalar_select %p177, %s17, 1
        %p179 = scmp.lt.s32.totalorder %s176, 1
        %s180 = scalar_select %p179, %s176, 1
        %s181 = smul.addr %s178, 2
        %s182 = sadd.s32 %s180, %s181
        %s183 = smul.addr %s182, 4
        %s184 = scalar_lea.vmem %s0, %s183
        %s185 = smul.u32 2, %s18
      $region28: #{basic_block_forward.5} parent=23 // pred_fallthru
        _
      // Predicated region
      $region29: #{basic_block_forward.5} parent=23 // pred_check
        %p186 = pneg %p72
      $region30: #{basic_block_forward.5} parent=23 // pred_check_branch
        %188 = sbr.rel (%p186) target = $region32
      $region31: #{basic_block_forward.5} parent=23 // pred_region
        %s189 = smul.u32 2, %s18
        %p190 = scmp.lt.s32.totalorder %s17, 1
        %s191 = scalar_select %p190, %s17, 1
        %p192 = scmp.lt.s32.totalorder %s189, 1
        %s193 = scalar_select %p192, %s189, 1
        %s194 = smul.addr %s191, 2
        %s195 = sadd.s32 %s193, %s194
        %s196 = smul.addr %s195, 4
        %s197 = scalar_lea.vmem %s1, %s196
        %s198 = smul.u32 2, %s18
      $region32: #{basic_block_forward.5} parent=23 // pred_fallthru
        _
    $region24: #{basic_block_forward.5} parent=5 // pred_fallthru
      _
    %p199 = scmp.le.s32.totalorder 1, %s10
    %p200 = scmp.lt.s32.totalorder %s10, 3
    %p201 = pnand %p199, %p200
    %p202 = pneg %p201
    // Predicated region
    $region33: #{basic_block_forward.5} parent=5 // pred_check
      _
    $region34: #{basic_block_forward.5} parent=5 // pred_check_branch
      %204 = sbr.rel (%p201) target = $region36
    $region35: #{basic_block_forward.5} parent=5 // pred_region
      %s205 = ssub.s32 %s10, 1
      %s206 = smul.u32 2, %s20
      %p207 = scmp.lt.s32.totalorder %s19, 1
      %s208 = scalar_select %p207, %s19, 1
      %p209 = scmp.lt.s32.totalorder %s206, 1
      %s210 = scalar_select %p209, %s206, 1
      %s211 = smul.addr %s208, 2
      %s212 = sadd.s32 %s210, %s211
      %s213 = smul.addr %s212, 4
      %s214 = scalar_lea.vmem %s0, %s213
      %p215 = pneg %p50
      %p216 = pneg %p47
      %s217 = smul.u32 2, %s20
      %p218 = scmp.lt.s32.totalorder %s19, 1
      %s219 = scalar_select %p218, %s19, 1
      %p220 = scmp.lt.s32.totalorder %s217, 1
      %s221 = scalar_select %p220, %s217, 1
      %s222 = smul.addr %s219, 2
      %s223 = sadd.s32 %s221, %s222
      %s224 = smul.addr %s223, 4
      %s225 = scalar_lea.vmem %s1, %s224
      %p226 = pneg %p78
      %p227 = pneg %p75
      %p228 = pneg %p99
      %p229 = pneg %p96
      %p230 = pneg %p120
      %p231 = pneg %p117
      %p232 = pneg %p148
      %p233 = pneg %p145
      %s234 = smul.u32 2, %s20
      %p235 = scmp.lt.s32.totalorder %s19, 1
      %s236 = scalar_select %p235, %s19, 1
      %p237 = scmp.lt.s32.totalorder %s234, 1
      %s238 = scalar_select %p237, %s234, 1
      %s239 = smul.addr %s236, 2
      %s240 = sadd.s32 %s238, %s239
      %s241 = smul.addr %s240, 8
      %s242 = scalar_lea.vmem %s4, %s241
      %s243 = smul.u32 2, %s20
      %p244 = scmp.lt.s32.totalorder %s19, 1
      %s245 = scalar_select %p244, %s19, 1
      %p246 = scmp.lt.s32.totalorder %s243, 1
      %s247 = scalar_select %p246, %s243, 1
      %s248 = smul.addr %s245, 2
      %s249 = sadd.s32 %s247, %s248
      %s250 = smul.addr %s249, 4
      %s251 = scalar_lea.vmem %s0, %s250
      %s252 = smul.u32 2, %s20
      %s253 = smul.u32 2, %s20
      %p254 = scmp.lt.s32.totalorder %s19, 1
      %s255 = scalar_select %p254, %s19, 1
      %p256 = scmp.lt.s32.totalorder %s253, 1
      %s257 = scalar_select %p256, %s253, 1
      %s258 = smul.addr %s255, 2
      %s259 = sadd.s32 %s257, %s258
      %s260 = smul.addr %s259, 4
      %s261 = scalar_lea.vmem %s1, %s260
      %s262 = smul.u32 2, %s20
      %s263 = smul.u32 2, %s20
      %p264 = scmp.lt.s32.totalorder %s19, 1
      %s265 = scalar_select %p264, %s19, 1
      %p266 = scmp.lt.s32.totalorder %s263, 1
      %s267 = scalar_select %p266, %s263, 1
      %s268 = smul.addr %s265, 2
      %s269 = sadd.s32 %s267, %s268
      %s270 = smul.addr %s269, 8
      %s271 = scalar_lea.vmem %s4, %s270
      %s272 = smul.u32 2, %s20
      %v273 = vld [vmem:[%s251] sm:$0xf]
      %v274 = vld [vmem:[%s251 + $0x4] sm:$0xf]
      %v275 = vunpack.c.l.bf16 %v273
      %v276 = vunpack.c.l.bf16 %v274
      %v277 = vld [vmem:[%s261] sm:$0xf]
      %v278 = vld [vmem:[%s261 + $0x4] sm:$0xf]
      %v279 = vunpack.c.l.bf16 %v277
      %v280 = vunpack.c.l.bf16 %v278
      %v281 = vld [vmem:[%s2] sm:$0x1]
      %v283 = vlaneseq
      %v284 = vshrl.u32 %v283, 7
      %v285 = vsub.s32 0, %v284
      %v286 = vrot.slane %v281, %v285
      %v288 = vmul.f32 %v275, %v286
      %v289 = vmul.f32 %v276, %v286
      %v290 = vld [vmem:[%s3] sm:$0x1]
      %v292 = vlaneseq
      %v293 = vshrl.u32 %v292, 7
      %v294 = vsub.s32 0, %v293
      %v295 = vrot.slane %v290, %v294
      %v297 = vadd.f32 %v288, %v295
      %v298 = vadd.f32 %v289, %v295
      %v299 = vadd.f32 %v297, %v279
      %v300 = vadd.f32 %v298, %v280
      %v301 = vmax.f32 %v299, 0.0
      %v302 = vmax.f32 %v300, 0.0
      %vm303 = vcmask 523264
      %304 = vst.msk [vmem:[%s271] sm:$0xff] %vm303, %v301
      %305 = vst.msk [vmem:[%s271 + $0x8] sm:$0xff] %vm303, %v302
      %s306 = smul.u32 2, %s20
      %p307 = scmp.lt.s32.totalorder %s19, 1
      %s308 = scalar_select %p307, %s19, 1
      %p309 = scmp.lt.s32.totalorder %s306, 1
      %s310 = scalar_select %p309, %s306, 1
      %s311 = smul.addr %s308, 2
      %s312 = sadd.s32 %s310, %s311
      %s313 = smul.addr %s312, 8
      %s314 = scalar_lea.vmem %s4, %s313
      // Predicated region
      $region37: #{basic_block_forward.5} parent=35 // pred_check
        %p315 = pneg %p145
      $region38: #{basic_block_forward.5} parent=35 // pred_check_branch
        %317 = sbr.rel (%p315) target = $region40
      $region39: #{basic_block_forward.5} parent=35 // pred_region
        %s318 = smul.u32 2, %s20
      $region40: #{basic_block_forward.5} parent=35 // pred_fallthru
        _
    $region36: #{basic_block_forward.5} parent=5 // pred_fallthru
      _
    %p319 = scmp.le.s32.totalorder 2, %s10
    // Predicated region
    $region41: #{basic_block_forward.5} parent=5 // pred_check
      %p320 = pneg %p319
    $region42: #{basic_block_forward.5} parent=5 // pred_check_branch
      %322 = sbr.rel (%p320) target = $region44
    $region43: #{basic_block_forward.5} parent=5 // pred_region
      %s323 = ssub.s32 %s10, 2
      // Predicated region
      $region45: #{basic_block_forward.5} parent=43 // pred_check
        %p324 = pneg %p151
      $region46: #{basic_block_forward.5} parent=43 // pred_check_branch
        %326 = sbr.rel (%p324) target = $region48
      $region47: #{basic_block_forward.5} parent=43 // pred_region
        %s327 = smul.u32 2, %s22
        %p328 = scmp.lt.s32.totalorder %s21, 1
        %s329 = scalar_select %p328, %s21, 1
        %p330 = scmp.lt.s32.totalorder %s327, 1
        %s331 = scalar_select %p330, %s327, 1
        %s332 = smul.addr %s329, 2
        %s333 = sadd.s32 %s331, %s332
        %s334 = smul.addr %s333, 8
        %s335 = scalar_lea.vmem %s4, %s334
      $region48: #{basic_block_forward.5} parent=43 // pred_fallthru
        _
    $region44: #{basic_block_forward.5} parent=5 // pred_fallthru
      _
  $region6: #{basic_block_forward.5} parent=0 // loop_footer
    %s14 = sadd.s32 1, %s10
  $region7: #{basic_block_forward.5} parent=0 // loop_footer_branch
    %9 = sbr.rel target = $region3
  $region8: #{basic_block_forward.5} parent=0 // loop_exit
    _

// kernel: basic_block_forward.3
$region0: #{basic_block_forward.3}
  #allocation0 [shape = 'u32[]', space=smem, size = 0x4, offset = 0x4, fixed_abs, tag = 'smem constant byte address 0x4 - core index']
  #allocation1 [shape = 'u32[144,128]{1,0:T(1,128)}', space=vmem, size = 0x12000, scoped, tag = 'internal scratch']
  %s0 = inlined_call_operand.vmem [shape: bf16[2,16,16,4], index: 0, kind: input, shape index: {}]
  %s1 = inlined_call_operand.vmem [shape: bf16[3,12,4], index: 1, kind: input, shape index: {}]
  %s2 = inlined_call_operand.vmem [shape: bf16[2,16,16,4], index: 2, kind: output, shape index: {0}]
  %s3 = inlined_call_operand.vmem [shape: f32[2,2,4], index: 3, kind: output, shape index: {1}]
  %4 = xla_tuple %s2, %s3
  %s5 = sld [smem:[#allocation0]]
  $region49: #{basic_block_forward.3} parent=0
    _
  %s7 = ssub.s32 1, %s5
  %s8 = scalar_select 0, %s7, %s5
  loop: start=0, step=1, limit=4
  $region2: #{basic_block_forward.3} parent=0 // loop_pre_header
    _
  $region3: #{basic_block_forward.3} parent=0 // loop_header
    %s10 = sphi 0, %s14
    %p11 = scmp.ge.s32.totalorder %s10, 4
    %s20 = sphi 0, %s22
    %s23 = sphi 0, %s20
    %s24 = sphi 0, %s23
    %s40 = sphi 0, %s24
    %s44 = sphi 0, %s44
    %s46 = sphi 0, %s44
    %s47 = sphi 0, %s46
    %s61 = sphi 0, %s47
    %s67 = sphi 0, %s69
    %s70 = sphi 0, %s67
    %s71 = sphi 0, %s70
    %s87 = sphi 0, %s71
    %s93 = sphi 0, %s95
    %s96 = sphi 0, %s93
    %s97 = sphi 0, %s96
    %s113 = sphi 0, %s97
  $region4: #{basic_block_forward.3} parent=0 // loop_header_branch
    %13 = sbr.rel (%p11) target = $region8
  $region5: #{basic_block_forward.3} parent=0 // loop_body
    %s15 = ssub.s32 %s10, 1
    %s16 = ssub.s32 %s10, 2
    %s17 = sadd.s32 %s10, 1
    %s18 = ssub.s32 %s10, %s17
    %p19 = scmp.eq.s32.totalorder %s18, 0
    %s21 = sadd.s32 %s20, 1
    %s22 = scalar_select %p19, %s20, %s21
    %p25 = pneg %p19
    %p26 = scmp.eq.s32.totalorder %s10, 1
    %p27 = por %p25, %p26
    %p28 = scmp.ne.s32.totalorder %s20, %s23
    %p29 = scmp.eq.s32.totalorder %s10, 0
    %p30 = por %p28, %p29
    %p31 = scmp.ne.s32.totalorder %s20, %s23
    %p32 = scmp.eq.s32.totalorder %s15, 1
    %p33 = por %p31, %p32
    %p34 = scmp.ne.s32.totalorder %s23, %s24
    %p35 = scmp.eq.s32.totalorder %s15, 0
    %p36 = por %p34, %p35
    %p37 = scmp.ne.s32.totalorder %s23, %s24
    %p38 = scmp.eq.s32.totalorder %s16, 1
    %p39 = por %p37, %p38
    %p41 = scmp.ne.s32.totalorder %s24, %s40
    %p42 = scmp.eq.s32.totalorder %s16, 0
    %p43 = por %p41, %p42
    %s45 = sadd.s32 %s44, 1
    %p48 = scmp.eq.s32.totalorder %s10, 1
    %p49 = scmp.ne.s32.totalorder %s44, %s46
    %p50 = scmp.eq.s32.totalorder %s10, 0
    %p51 = por %p49, %p50
    %p52 = scmp.ne.s32.totalorder %s44, %s46
    %p53 = scmp.eq.s32.totalorder %s15, 1
    %p54 = por %p52, %p53
    %p55 = scmp.ne.s32.totalorder %s46, %s47
    %p56 = scmp.eq.s32.totalorder %s15, 0
    %p57 = por %p55, %p56
    %p58 = scmp.ne.s32.totalorder %s46, %s47
    %p59 = scmp.eq.s32.totalorder %s16, 1
    %p60 = por %p58, %p59
    %p62 = scmp.ne.s32.totalorder %s47, %s61
    %p63 = scmp.eq.s32.totalorder %s16, 0
    %p64 = por %p62, %p63
    %s65 = ssub.s32 %s10, %s17
    %p66 = scmp.eq.s32.totalorder %s65, 0
    %s68 = sadd.s32 %s67, 1
    %s69 = scalar_select %p66, %s67, %s68
    %p72 = pneg %p66
    %p73 = scmp.eq.s32.totalorder %s10, 1
    %p74 = por %p72, %p73
    %p75 = scmp.ne.s32.totalorder %s67, %s70
    %p76 = scmp.eq.s32.totalorder %s10, 0
    %p77 = por %p75, %p76
    %p78 = scmp.ne.s32.totalorder %s67, %s70
    %p79 = scmp.eq.s32.totalorder %s15, 1
    %p80 = por %p78, %p79
    %p81 = scmp.ne.s32.totalorder %s70, %s71
    %p82 = scmp.eq.s32.totalorder %s15, 0
    %p83 = por %p81, %p82
    %p84 = scmp.ne.s32.totalorder %s70, %s71
    %p85 = scmp.eq.s32.totalorder %s16, 1
    %p86 = por %p84, %p85
    %p88 = scmp.ne.s32.totalorder %s71, %s87
    %p89 = scmp.eq.s32.totalorder %s16, 0
    %p90 = por %p88, %p89
    %s91 = ssub.s32 %s10, %s17
    %p92 = scmp.eq.s32.totalorder %s91, 0
    %s94 = sadd.s32 %s93, 1
    %s95 = scalar_select %p92, %s93, %s94
    %p98 = pneg %p92
    %p99 = scmp.eq.s32.totalorder %s10, 1
    %p100 = por %p98, %p99
    %p101 = scmp.ne.s32.totalorder %s93, %s96
    %p102 = scmp.eq.s32.totalorder %s10, 0
    %p103 = por %p101, %p102
    %p104 = scmp.ne.s32.totalorder %s93, %s96
    %p105 = scmp.eq.s32.totalorder %s15, 1
    %p106 = por %p104, %p105
    %p107 = scmp.ne.s32.totalorder %s96, %s97
    %p108 = scmp.eq.s32.totalorder %s15, 0
    %p109 = por %p107, %p108
    %p110 = scmp.ne.s32.totalorder %s96, %s97
    %p111 = scmp.eq.s32.totalorder %s16, 1
    %p112 = por %p110, %p111
    %p114 = scmp.ne.s32.totalorder %s97, %s113
    %p115 = scmp.eq.s32.totalorder %s16, 0
    %p116 = por %p114, %p115
    %p117 = scmp.le.s32.totalorder 1, %s10
    %p118 = scmp.lt.s32.totalorder %s10, 3
    %p119 = pnand %p117, %p118
    %p120 = pneg %p119
    // Predicated region
    $region9: #{basic_block_forward.3} parent=5 // pred_check
      _
    $region10: #{basic_block_forward.3} parent=5 // pred_check_branch
      %122 = sbr.rel (%p119) target = $region12
    $region11: #{basic_block_forward.3} parent=5 // pred_region
      %s123 = ssub.s32 %s10, 1
      // Predicated region
      $region13: #{basic_block_forward.3} parent=11 // pred_check
        %p124 = pneg %p57
      $region14: #{basic_block_forward.3} parent=11 // pred_check_branch
        %126 = sbr.rel (%p124) target = $region16
      $region15: #{basic_block_forward.3} parent=11 // pred_region
        _
      $region16: #{basic_block_forward.3} parent=11 // pred_fallthru
        _
    $region12: #{basic_block_forward.3} parent=5 // pred_fallthru
      _
    %p127 = scmp.lt.s32.totalorder %s10, 2
    // Predicated region
    $region17: #{basic_block_forward.3} parent=5 // pred_check
      %p128 = pneg %p127
    $region18: #{basic_block_forward.3} parent=5 // pred_check_branch
      %130 = sbr.rel (%p128) target = $region20
    $region19: #{basic_block_forward.3} parent=5 // pred_region
      // Predicated region
      $region21: #{basic_block_forward.3} parent=19 // pred_check
        %p131 = pneg %p30
      $region22: #{basic_block_forward.3} parent=19 // pred_check_branch
        %133 = sbr.rel (%p131) target = $region24
      $region23: #{basic_block_forward.3} parent=19 // pred_region
        %p134 = scmp.lt.s32.totalorder %s10, 1
        %s135 = scalar_select %p134, %s10, 1
        %s136 = smul.addr %s135, 32
        %s137 = smul.addr %s136, 4
        %s138 = scalar_lea.vmem %s0, %s137
      $region24: #{basic_block_forward.3} parent=19 // pred_fallthru
        _
    $region20: #{basic_block_forward.3} parent=5 // pred_fallthru
      _
    %p139 = scmp.le.s32.totalorder 1, %s10
    %p140 = scmp.lt.s32.totalorder %s10, 3
    %p141 = pnand %p139, %p140
    %p142 = pneg %p141
    // Predicated region
    $region25: #{basic_block_forward.3} parent=5 // pred_check
      _
    $region26: #{basic_block_forward.3} parent=5 // pred_check_branch
      %144 = sbr.rel (%p141) target = $region28
    $region27: #{basic_block_forward.3} parent=5 // pred_region
      %s145 = ssub.s32 %s10, 1
      %p146 = scmp.lt.s32.totalorder %s15, 1
      %s147 = scalar_select %p146, %s15, 1
      %s148 = smul.addr %s147, 32
      %s149 = smul.addr %s148, 4
      %s150 = scalar_lea.vmem %s0, %s149
      %p151 = pneg %p36
      %p152 = pneg %p33
      %p153 = pneg %p57
      %p154 = pneg %p54
      %p155 = pneg %p83
      %p156 = pneg %p80
      %p157 = scmp.lt.s32.totalorder %s15, 1
      %s158 = scalar_select %p157, %s15, 1
      %s159 = smul.addr %s158, 32
      %s160 = smul.addr %s159, 4
      %s161 = scalar_lea.vmem %s2, %s160
      %p162 = pneg %p109
      %p163 = pneg %p106
      %p164 = scmp.lt.s32.totalorder %s15, 1
      %s165 = scalar_select %p164, %s15, 1
      %s166 = smul.addr %s165, 2
      %s167 = scalar_lea.vmem %s3, %s166
      %p168 = scmp.lt.s32.totalorder %s15, 1
      %s169 = scalar_select %p168, %s15, 1
      %s170 = smul.addr %s169, 32
      %s171 = smul.addr %s170, 4
      %s172 = scalar_lea.vmem %s0, %s171
      %p173 = scmp.lt.s32.totalorder %s15, 1
      %s174 = scalar_select %p173, %s15, 1
      %s175 = smul.addr %s174, 32
      %s176 = smul.addr %s175, 4
      %s177 = scalar_lea.vmem %s2, %s176
      %p178 = scmp.lt.s32.totalorder %s15, 1
      %s179 = scalar_select %p178, %s15, 1
      %s180 = smul.addr %s179, 2
      %s181 = scalar_lea.vmem %s3, %s180
      %v183 = vld [vmem:[%s172] sm:$0xf]
      %v184 = vld [vmem:[%s172 + $0x4] sm:$0xf]
      %v185 = vld [vmem:[%s172 + $0x8] sm:$0xf]
      %v186 = vld [vmem:[%s172 + $0xc] sm:$0xf]
      %v187 = vld [vmem:[%s172 + $0x10] sm:$0xf]
      %v188 = vld [vmem:[%s172 + $0x14] sm:$0xf]
      %v189 = vld [vmem:[%s172 + $0x18] sm:$0xf]
      %v190 = vld [vmem:[%s172 + $0x1c] sm:$0xf]
      %v191 = vld [vmem:[%s172 + $0x20] sm:$0xf]
      %v192 = vld [vmem:[%s172 + $0x24] sm:$0xf]
      %v193 = vld [vmem:[%s172 + $0x28] sm:$0xf]
      %v194 = vld [vmem:[%s172 + $0x2c] sm:$0xf]
      %v195 = vld [vmem:[%s172 + $0x30] sm:$0xf]
      %v196 = vld [vmem:[%s172 + $0x34] sm:$0xf]
      %v197 = vld [vmem:[%s172 + $0x38] sm:$0xf]
      %v198 = vld [vmem:[%s172 + $0x3c] sm:$0xf]
      %v199 = vld [vmem:[%s172 + $0x40] sm:$0xf]
      %v200 = vld [vmem:[%s172 + $0x44] sm:$0xf]
      %v201 = vld [vmem:[%s172 + $0x48] sm:$0xf]
      %v202 = vld [vmem:[%s172 + $0x4c] sm:$0xf]
      %v203 = vld [vmem:[%s172 + $0x50] sm:$0xf]
      %v204 = vld [vmem:[%s172 + $0x54] sm:$0xf]
      %v205 = vld [vmem:[%s172 + $0x58] sm:$0xf]
      %v206 = vld [vmem:[%s172 + $0x5c] sm:$0xf]
      %v207 = vld [vmem:[%s172 + $0x60] sm:$0xf]
      %v208 = vld [vmem:[%s172 + $0x64] sm:$0xf]
      %v209 = vld [vmem:[%s172 + $0x68] sm:$0xf]
      %v210 = vld [vmem:[%s172 + $0x6c] sm:$0xf]
      %v211 = vld [vmem:[%s172 + $0x70] sm:$0xf]
      %v212 = vld [vmem:[%s172 + $0x74] sm:$0xf]
      %v213 = vld [vmem:[%s172 + $0x78] sm:$0xf]
      %v214 = vld [vmem:[%s172 + $0x7c] sm:$0xf]
      %v247 = vunpack.c.l.b16 %v183
      %v248 = vunpack.c.l.b16 %v184
      %v249 = vunpack.c.l.b16 %v185
      %v250 = vunpack.c.l.b16 %v186
      %v251 = vunpack.c.l.b16 %v187
      %v252 = vunpack.c.l.b16 %v188
      %v253 = vunpack.c.l.b16 %v189
      %v254 = vunpack.c.l.b16 %v190
      %v255 = vunpack.c.l.b16 %v191
      %v256 = vunpack.c.l.b16 %v192
      %v257 = vunpack.c.l.b16 %v193
      %v258 = vunpack.c.l.b16 %v194
      %v259 = vunpack.c.l.b16 %v195
      %v260 = vunpack.c.l.b16 %v196
      %v261 = vunpack.c.l.b16 %v197
      %v262 = vunpack.c.l.b16 %v198
      %v263 = vunpack.c.l.b16 %v199
      %v264 = vunpack.c.l.b16 %v200
      %v265 = vunpack.c.l.b16 %v201
      %v266 = vunpack.c.l.b16 %v202
      %v267 = vunpack.c.l.b16 %v203
      %v268 = vunpack.c.l.b16 %v204
      %v269 = vunpack.c.l.b16 %v205
      %v270 = vunpack.c.l.b16 %v206
      %v271 = vunpack.c.l.b16 %v207
      %v272 = vunpack.c.l.b16 %v208
      %v273 = vunpack.c.l.b16 %v209
      %v274 = vunpack.c.l.b16 %v210
      %v275 = vunpack.c.l.b16 %v211
      %v276 = vunpack.c.l.b16 %v212
      %v277 = vunpack.c.l.b16 %v213
      %v278 = vunpack.c.l.b16 %v214
      %v279 = vpack.c.b16 %v248, %v247
      %v280 = vpack.c.b16 %v250, %v249
      %v281 = vpack.c.b16 %v252, %v251
      %v282 = vpack.c.b16 %v254, %v253
      %v283 = vpack.c.b16 %v256, %v255
      %v284 = vpack.c.b16 %v258, %v257
      %v285 = vpack.c.b16 %v260, %v259
      %v286 = vpack.c.b16 %v262, %v261
      %v287 = vpack.c.b16 %v264, %v263
      %v288 = vpack.c.b16 %v266, %v265
      %v289 = vpack.c.b16 %v268, %v267
      %v290 = vpack.c.b16 %v270, %v269
      %v291 = vpack.c.b16 %v272, %v271
      %v292 = vpack.c.b16 %v274, %v273
      %v293 = vpack.c.b16 %v276, %v275
      %v294 = vpack.c.b16 %v278, %v277
      %v296 = vshrl.u32 0, 16
      %v298 = vrot.slane %v296, 7
      %v299 = vshll.u32 0, 16
      %v301 = vor.u32 %v298, %v299
      %v303 = vshrl.u32 %v279, 16
      %v305 = vrot.slane %v303, 7
      %v306 = vshll.u32 %v279, 16
      %v308 = vor.u32 %v305, %v306
      %v310 = vshrl.u32 %v280, 16
      %v312 = vrot.slane %v310, 7
      %v313 = vshll.u32 %v280, 16
      %v315 = vor.u32 %v312, %v313
      %v317 = vshrl.u32 %v281, 16
      %v319 = vrot.slane %v317, 7
      %v320 = vshll.u32 %v281, 16
      %v322 = vor.u32 %v319, %v320
      %v324 = vshrl.u32 %v282, 16
      %v326 = vrot.slane %v324, 7
      %v327 = vshll.u32 %v282, 16
      %v329 = vor.u32 %v326, %v327
      %v331 = vshrl.u32 %v283, 16
      %v333 = vrot.slane %v331, 7
      %v334 = vshll.u32 %v283, 16
      %v336 = vor.u32 %v333, %v334
      %v338 = vshrl.u32 %v284, 16
      %v340 = vrot.slane %v338, 7
      %v341 = vshll.u32 %v284, 16
      %v343 = vor.u32 %v340, %v341
      %v345 = vshrl.u32 %v285, 16
      %v347 = vrot.slane %v345, 7
      %v348 = vshll.u32 %v285, 16
      %v350 = vor.u32 %v347, %v348
      %v352 = vshrl.u32 %v286, 16
      %v354 = vrot.slane %v352, 7
      %v355 = vshll.u32 %v286, 16
      %v357 = vor.u32 %v354, %v355
      %v359 = vshrl.u32 %v287, 16
      %v361 = vrot.slane %v359, 7
      %v362 = vshll.u32 %v287, 16
      %v364 = vor.u32 %v361, %v362
      %v366 = vshrl.u32 %v288, 16
      %v368 = vrot.slane %v366, 7
      %v369 = vshll.u32 %v288, 16
      %v371 = vor.u32 %v368, %v369
      %v373 = vshrl.u32 %v289, 16
      %v375 = vrot.slane %v373, 7
      %v376 = vshll.u32 %v289, 16
      %v378 = vor.u32 %v375, %v376
      %v380 = vshrl.u32 %v290, 16
      %v382 = vrot.slane %v380, 7
      %v383 = vshll.u32 %v290, 16
      %v385 = vor.u32 %v382, %v383
      %v387 = vshrl.u32 %v291, 16
      %v389 = vrot.slane %v387, 7
      %v390 = vshll.u32 %v291, 16
      %v392 = vor.u32 %v389, %v390
      %v394 = vshrl.u32 %v292, 16
      %v396 = vrot.slane %v394, 7
      %v397 = vshll.u32 %v292, 16
      %v399 = vor.u32 %v396, %v397
      %v401 = vshrl.u32 %v293, 16
      %v403 = vrot.slane %v401, 7
      %v404 = vshll.u32 %v293, 16
      %v406 = vor.u32 %v403, %v404
      %v408 = vshrl.u32 %v294, 16
      %v410 = vrot.slane %v408, 7
      %v411 = vshll.u32 %v294, 16
      %v413 = vor.u32 %v410, %v411
      %vm448 = vcmask 1040384
      %vm449 = vsmask.f32 256
      %vm450 = vmand %vm448, %vm449
      %v451 = vsel %vm450, 0, %v301
      %v452 = vsel %vm450, 0, %v308
      %v453 = vsel %vm450, 0, %v315
      %v454 = vsel %vm450, 0, %v322
      %v455 = vsel %vm450, 0, %v329
      %v456 = vsel %vm450, 0, %v336
      %v457 = vsel %vm450, 0, %v343
      %v458 = vsel %vm450, 0, %v350
      %v459 = vsel %vm450, 0, %v357
      %v460 = vsel %vm450, 0, %v364
      %v461 = vsel %vm450, 0, %v371
      %v462 = vsel %vm450, 0, %v378
      %v463 = vsel %vm450, 0, %v385
      %v464 = vsel %vm450, 0, %v392
      %v465 = vsel %vm450, 0, %v399
      %v466 = vsel %vm450, 0, %v406
      %v467 = vsel %vm450, 0, %v413
      %v468 = vsel %vm450, %v298, 0
      %v469 = vsel %vm450, %v305, 0
      %v470 = vsel %vm450, %v312, 0
      %v471 = vsel %vm450, %v319, 0
      %v472 = vsel %vm450, %v326, 0
      %v473 = vsel %vm450, %v333, 0
      %v474 = vsel %vm450, %v340, 0
      %v475 = vsel %vm450, %v347, 0
      %v476 = vsel %vm450, %v354, 0
      %v477 = vsel %vm450, %v361, 0
      %v478 = vsel %vm450, %v368, 0
      %v479 = vsel %vm450, %v375, 0
      %v480 = vsel %vm450, %v382, 0
      %v481 = vsel %vm450, %v389, 0
      %v482 = vsel %vm450, %v396, 0
      %v483 = vsel %vm450, %v403, 0
      %v484 = vsel %vm450, %v410, 0
      %vm485 = vsmask.f32 7424
      %v487 = vshrl.u32 %v451, 16
      %v489 = vshll.u32 %v451, 16
      %v491 = vrot.slane %v489, 1
      %v492 = vor.u32 %v487, %v491
      %v494 = vshll.u32 %v468, 16
      %v496 = vrot.slane %v494, 1
      %v497 = vsel %vm485, %v492, %v496
      %v499 = vshrl.u32 %v452, 16
      %v501 = vshll.u32 %v452, 16
      %v503 = vrot.slane %v501, 1
      %v504 = vor.u32 %v499, %v503
      %v506 = vshll.u32 %v469, 16
      %v508 = vrot.slane %v506, 1
      %v509 = vsel %vm485, %v504, %v508
      %v511 = vshrl.u32 %v453, 16
      %v513 = vshll.u32 %v453, 16
      %v515 = vrot.slane %v513, 1
      %v516 = vor.u32 %v511, %v515
      %v518 = vshll.u32 %v470, 16
      %v520 = vrot.slane %v518, 1
      %v521 = vsel %vm485, %v516, %v520
      %v523 = vshrl.u32 %v454, 16
      %v525 = vshll.u32 %v454, 16
      %v527 = vrot.slane %v525, 1
      %v528 = vor.u32 %v523, %v527
      %v530 = vshll.u32 %v471, 16
      %v532 = vrot.slane %v530, 1
      %v533 = vsel %vm485, %v528, %v532
      %v535 = vshrl.u32 %v455, 16
      %v537 = vshll.u32 %v455, 16
      %v539 = vrot.slane %v537, 1
      %v540 = vor.u32 %v535, %v539
      %v542 = vshll.u32 %v472, 16
      %v544 = vrot.slane %v542, 1
      %v545 = vsel %vm485, %v540, %v544
      %v547 = vshrl.u32 %v456, 16
      %v549 = vshll.u32 %v456, 16
      %v551 = vrot.slane %v549, 1
      %v552 = vor.u32 %v547, %v551
      %v554 = vshll.u32 %v473, 16
      %v556 = vrot.slane %v554, 1
      %v557 = vsel %vm485, %v552, %v556
      %v559 = vshrl.u32 %v457, 16
      %v561 = vshll.u32 %v457, 16
      %v563 = vrot.slane %v561, 1
      %v564 = vor.u32 %v559, %v563
      %v566 = vshll.u32 %v474, 16
      %v568 = vrot.slane %v566, 1
      %v569 = vsel %vm485, %v564, %v568
      %v571 = vshrl.u32 %v458, 16
      %v573 = vshll.u32 %v458, 16
      %v575 = vrot.slane %v573, 1
      %v576 = vor.u32 %v571, %v575
      %v578 = vshll.u32 %v475, 16
      %v580 = vrot.slane %v578, 1
      %v581 = vsel %vm485, %v576, %v580
      %v583 = vshrl.u32 %v459, 16
      %v585 = vshll.u32 %v459, 16
      %v587 = vrot.slane %v585, 1
      %v588 = vor.u32 %v583, %v587
      %v590 = vshll.u32 %v476, 16
      %v592 = vrot.slane %v590, 1
      %v593 = vsel %vm485, %v588, %v592
      %v595 = vshrl.u32 %v460, 16
      %v597 = vshll.u32 %v460, 16
      %v599 = vrot.slane %v597, 1
      %v600 = vor.u32 %v595, %v599
      %v602 = vshll.u32 %v477, 16
      %v604 = vrot.slane %v602, 1
      %v605 = vsel %vm485, %v600, %v604
      %v607 = vshrl.u32 %v461, 16
      %v609 = vshll.u32 %v461, 16
      %v611 = vrot.slane %v609, 1
      %v612 = vor.u32 %v607, %v611
      %v614 = vshll.u32 %v478, 16
      %v616 = vrot.slane %v614, 1
      %v617 = vsel %vm485, %v612, %v616
      %v619 = vshrl.u32 %v462, 16
      %v621 = vshll.u32 %v462, 16
      %v623 = vrot.slane %v621, 1
      %v624 = vor.u32 %v619, %v623
      %v626 = vshll.u32 %v479, 16
      %v628 = vrot.slane %v626, 1
      %v629 = vsel %vm485, %v624, %v628
      %v631 = vshrl.u32 %v463, 16
      %v633 = vshll.u32 %v463, 16
      %v635 = vrot.slane %v633, 1
      %v636 = vor.u32 %v631, %v635
      %v638 = vshll.u32 %v480, 16
      %v640 = vrot.slane %v638, 1
      %v641 = vsel %vm485, %v636, %v640
      %v643 = vshrl.u32 %v464, 16
      %v645 = vshll.u32 %v464, 16
      %v647 = vrot.slane %v645, 1
      %v648 = vor.u32 %v643, %v647
      %v650 = vshll.u32 %v481, 16
      %v652 = vrot.slane %v650, 1
      %v653 = vsel %vm485, %v648, %v652
      %v655 = vshrl.u32 %v465, 16
      %v657 = vshll.u32 %v465, 16
      %v659 = vrot.slane %v657, 1
      %v660 = vor.u32 %v655, %v659
      %v662 = vshll.u32 %v482, 16
      %v664 = vrot.slane %v662, 1
      %v665 = vsel %vm485, %v660, %v664
      %v667 = vshrl.u32 %v466, 16
      %v669 = vshll.u32 %v466, 16
      %v671 = vrot.slane %v669, 1
      %v672 = vor.u32 %v667, %v671
      %v674 = vshll.u32 %v483, 16
      %v676 = vrot.slane %v674, 1
      %v677 = vsel %vm485, %v672, %v676
      %678 = vrot.lane.b32.xlu0 %v497, 4
      %v679 = vpop.permute.xlu0 %678
      %680 = vrot.lane.b32.xlu0 %v509, 4
      %v681 = vpop.permute.xlu0 %680
      %682 = vrot.lane.b32.xlu0 %v521, 4
      %v683 = vpop.permute.xlu0 %682
      %684 = vrot.lane.b32.xlu0 %v533, 4
      %v685 = vpop.permute.xlu0 %684
      %686 = vrot.lane.b32.xlu0 %v545, 4
      %v687 = vpop.permute.xlu0 %686
      %688 = vrot.lane.b32.xlu0 %v557, 4
      %v689 = vpop.permute.xlu0 %688
      %690 = vrot.lane.b32.xlu0 %v569, 4
      %v691 = vpop.permute.xlu0 %690
      %692 = vrot.lane.b32.xlu0 %v581, 4
      %v693 = vpop.permute.xlu0 %692
      %694 = vrot.lane.b32.xlu0 %v593, 4
      %v695 = vpop.permute.xlu0 %694
      %696 = vrot.lane.b32.xlu0 %v605, 4
      %v697 = vpop.permute.xlu0 %696
      %698 = vrot.lane.b32.xlu0 %v617, 4
      %v699 = vpop.permute.xlu0 %698
      %700 = vrot.lane.b32.xlu0 %v629, 4
      %v701 = vpop.permute.xlu0 %700
      %702 = vrot.lane.b32.xlu0 %v641, 4
      %v703 = vpop.permute.xlu0 %702
      %704 = vrot.lane.b32.xlu0 %v653, 4
      %v705 = vpop.permute.xlu0 %704
      %706 = vrot.lane.b32.xlu0 %v665, 4
      %v707 = vpop.permute.xlu0 %706
      %708 = vrot.lane.b32.xlu0 %v677, 4
      %v709 = vpop.permute.xlu0 %708
      %vm742 = vcmask 1046528
      %v743 = vrot.slane %v451, 1
      %v744 = vrot.slane %v468, 1
      %v745 = vsel %vm742, %v743, %v744
      %v746 = vrot.slane %v452, 1
      %v747 = vrot.slane %v469, 1
      %v748 = vsel %vm742, %v746, %v747
      %v749 = vrot.slane %v453, 1
      %v750 = vrot.slane %v470, 1
      %v751 = vsel %vm742, %v749, %v750
      %v752 = vrot.slane %v454, 1
      %v753 = vrot.slane %v471, 1
      %v754 = vsel %vm742, %v752, %v753
      %v755 = vrot.slane %v455, 1
      %v756 = vrot.slane %v472, 1
      %v757 = vsel %vm742, %v755, %v756
      %v758 = vrot.slane %v456, 1
      %v759 = vrot.slane %v473, 1
      %v760 = vsel %vm742, %v758, %v759
      %v761 = vrot.slane %v457, 1
      %v762 = vrot.slane %v474, 1
      %v763 = vsel %vm742, %v761, %v762
      %v764 = vrot.slane %v458, 1
      %v765 = vrot.slane %v475, 1
      %v766 = vsel %vm742, %v764, %v765
      %v767 = vrot.slane %v459, 1
      %v768 = vrot.slane %v476, 1
      %v769 = vsel %vm742, %v767, %v768
      %v770 = vrot.slane %v460, 1
      %v771 = vrot.slane %v477, 1
      %v772 = vsel %vm742, %v770, %v771
      %v773 = vrot.slane %v461, 1
      %v774 = vrot.slane %v478, 1
      %v775 = vsel %vm742, %v773, %v774
      %v776 = vrot.slane %v462, 1
      %v777 = vrot.slane %v479, 1
      %v778 = vsel %vm742, %v776, %v777
      %v779 = vrot.slane %v463, 1
      %v780 = vrot.slane %v480, 1
      %v781 = vsel %vm742, %v779, %v780
      %v782 = vrot.slane %v464, 1
      %v783 = vrot.slane %v481, 1
      %v784 = vsel %vm742, %v782, %v783
      %v785 = vrot.slane %v465, 1
      %v786 = vrot.slane %v482, 1
      %v787 = vsel %vm742, %v785, %v786
      %v788 = vrot.slane %v466, 1
      %v789 = vrot.slane %v483, 1
      %v790 = vsel %vm742, %v788, %v789
      %791 = vrot.lane.b32.xlu0 %v745, 8
      %v792 = vpop.permute.xlu0 %791
      %793 = vrot.lane.b32.xlu0 %v748, 8
      %v794 = vpop.permute.xlu0 %793
      %795 = vrot.lane.b32.xlu0 %v751, 8
      %v796 = vpop.permute.xlu0 %795
      %797 = vrot.lane.b32.xlu0 %v754, 8
      %v798 = vpop.permute.xlu0 %797
      %799 = vrot.lane.b32.xlu0 %v757, 8
      %v800 = vpop.permute.xlu0 %799
      %801 = vrot.lane.b32.xlu0 %v760, 8
      %v802 = vpop.permute.xlu0 %801
      %803 = vrot.lane.b32.xlu0 %v763, 8
      %v804 = vpop.permute.xlu0 %803
      %805 = vrot.lane.b32.xlu0 %v766, 8
      %v806 = vpop.permute.xlu0 %805
      %807 = vrot.lane.b32.xlu0 %v769, 8
      %v808 = vpop.permute.xlu0 %807
      %809 = vrot.lane.b32.xlu0 %v772, 8
      %v810 = vpop.permute.xlu0 %809
      %811 = vrot.lane.b32.xlu0 %v775, 8
      %v812 = vpop.permute.xlu0 %811
      %813 = vrot.lane.b32.xlu0 %v778, 8
      %v814 = vpop.permute.xlu0 %813
      %815 = vrot.lane.b32.xlu0 %v781, 8
      %v816 = vpop.permute.xlu0 %815
      %817 = vrot.lane.b32.xlu0 %v784, 8
      %v818 = vpop.permute.xlu0 %817
      %819 = vrot.lane.b32.xlu0 %v787, 8
      %v820 = vpop.permute.xlu0 %819
      %821 = vrot.lane.b32.xlu0 %v790, 8
      %v822 = vpop.permute.xlu0 %821
      %vm823 = vcmask 31744
      %v825 = vsel %vm823, %v451, %v679
      %v827 = vsel %vm823, %v452, %v681
      %v829 = vsel %vm823, %v453, %v683
      %v831 = vsel %vm823, %v454, %v685
      %v833 = vsel %vm823, %v455, %v687
      %v835 = vsel %vm823, %v456, %v689
      %v837 = vsel %vm823, %v457, %v691
      %v839 = vsel %vm823, %v458, %v693
      %v841 = vsel %vm823, %v459, %v695
      %v843 = vsel %vm823, %v460, %v697
      %v845 = vsel %vm823, %v461, %v699
      %v847 = vsel %vm823, %v462, %v701
      %v849 = vsel %vm823, %v463, %v703
      %v851 = vsel %vm823, %v464, %v705
      %v853 = vsel %vm823, %v465, %v707
      %v855 = vsel %vm823, %v466, %v709
      %vm856 = vcmask 64512
      %v858 = vsel %vm856, %v825, %v792
      %v860 = vsel %vm856, %v827, %v794
      %v862 = vsel %vm856, %v829, %v796
      %v864 = vsel %vm856, %v831, %v798
      %v866 = vsel %vm856, %v833, %v800
      %v868 = vsel %vm856, %v835, %v802
      %v870 = vsel %vm856, %v837, %v804
      %v872 = vsel %vm856, %v839, %v806
      %v874 = vsel %vm856, %v841, %v808
      %v876 = vsel %vm856, %v843, %v810
      %v878 = vsel %vm856, %v845, %v812
      %v880 = vsel %vm856, %v847, %v814
      %v882 = vsel %vm856, %v849, %v816
      %v884 = vsel %vm856, %v851, %v818
      %v886 = vsel %vm856, %v853, %v820
      %v888 = vsel %vm856, %v855, %v822
      %v889 = vld [vmem:[%s1] sm:$0xf]
      %v890 = vld [vmem:[%s1 + $0x4] sm:$0x3]
      %v892 = vshrl.u32 %v467, 16
      %v894 = vshll.u32 %v467, 16
      %v896 = vrot.slane %v894, 1
      %v897 = vor.u32 %v892, %v896
      %v899 = vshll.u32 %v484, 16
      %v901 = vrot.slane %v899, 1
      %v902 = vsel %vm485, %v897, %v901
      %903 = vrot.lane.b32.xlu0 %v902, 4
      %v904 = vpop.permute.xlu0 %903
      %v907 = vrot.slane %v467, 1
      %v908 = vrot.slane %v484, 1
      %v909 = vsel %vm742, %v907, %v908
      %910 = vrot.lane.b32.xlu0 %v909, 8
      %v911 = vpop.permute.xlu0 %910
      %v913 = vsel %vm823, %v467, %v904
      %v915 = vsel %vm856, %v913, %v911
      %s916 = scalar_lea.vmem %s1, 8
      %v917 = vld [vmem:[%s916] sm:$0xf]
      %v918 = vld [vmem:[%s916 + $0x4] sm:$0x3]
      %v921 = vunpack.c.l.b16 %v917
      %v922 = vunpack.c.l.b16 %v918
      %v923 = vpack.c.b16 %v922, %v921
      %vm924 = vcmask 97280
      %v925 = vsel %vm924, %v860, 0
      %v927 = vsel %vm924, %v862, 0
      %v929 = vsel %vm924, %v864, 0
      %v931 = vsel %vm924, %v866, 0
      %v933 = vsel %vm924, %v868, 0
      %v935 = vsel %vm924, %v870, 0
      %v937 = vsel %vm924, %v872, 0
      %v939 = vsel %vm924, %v874, 0
      %v941 = vsel %vm924, %v876, 0
      %v943 = vsel %vm924, %v878, 0
      %v945 = vsel %vm924, %v880, 0
      %v947 = vsel %vm924, %v882, 0
      %v949 = vsel %vm924, %v884, 0
      %v951 = vsel %vm924, %v886, 0
      %v953 = vsel %vm924, %v888, 0
      %v955 = vsel %vm924, %v915, 0
      %vm957 = vcmask 1045504
      %v959 = vsel %vm957, %v923, 0
      %961 = vmatprep.subr.bf16.mxu0 0
      %962 = vmatpush1.bf16.msra.mxu0 %v959
      %963 = vmatprep.subr.bf16.mxu0 0
      %964 = vmatpush1.bf16.msra.mxu0 0
      %965 = vmatprep.subr.bf16.mxu0 0
      %966 = vmatpush1.bf16.msra.mxu0 0
      %967 = vmatprep.subr.bf16.mxu0 0
      %968 = vmatpush1.bf16.msra.mxu0 0
      %969 = vmatprep.subr.bf16.mxu0 0
      %970 = vmatpush1.bf16.msra.mxu0 0
      %971 = vmatprep.subr.bf16.mxu0 0
      %972 = vmatpush1.bf16.msra.mxu0 0
      %973 = vmatprep.subr.bf16.mxu0 0
      %974 = vmatpush1.bf16.msra.mxu0 0
      %975 = vmatprep.subr.bf16.mxu0 0
      %976 = vmatpush1.bf16.msra.mxu0 0
      %977 = vmatprep.subr.bf16.mxu0 0
      %978 = vmatpush1.bf16.msra.mxu0 0
      %979 = vmatprep.subr.bf16.mxu0 0
      %980 = vmatpush1.bf16.msra.mxu0 0
      %981 = vmatprep.subr.bf16.mxu0 0
      %982 = vmatpush1.bf16.msra.mxu0 0
      %983 = vmatprep.subr.bf16.mxu0 0
      %984 = vmatpush1.bf16.msra.mxu0 0
      %985 = vmatprep.subr.bf16.mxu0 0
      %986 = vmatpush1.bf16.msra.mxu0 0
      %987 = vmatprep.subr.bf16.mxu0 0
      %988 = vmatpush1.bf16.msra.mxu0 0
      %989 = vmatprep.subr.bf16.mxu0 0
      %990 = vmatpush1.bf16.msra.mxu0 0
      %991 = vmatprep.subr.bf16.mxu0 0
      %992 = vmatpush1.bf16.msra.mxu0 0
      %993 = vmatprep.mubr.bf16.mxu0 0
      %994 = vmatmul.mubr.bf16.gmra.mrb[0].mxu0 %v925
      %v995 = vpop.f32.mrb[0].mxu0
      %v996 = vadd.f32 0.0, %v995
      %v997 = vpop.f32.mrb[0].mxu0
      %v998 = vpop.f32.mrb[0].mxu0
      %v999 = vadd.f32 0.0, %v998
      %v1000 = vpop.f32.mrb[0].mxu0
      %1001 = vmatprep.mubr.bf16.mxu0 0
      %1002 = vmatmul.mubr.bf16.gmra.mrb[0].mxu0 %v927
      %v1003 = vpop.f32.mrb[0].mxu0
      %v1004 = vadd.f32 0.0, %v1003
      %v1005 = vpop.f32.mrb[0].mxu0
      %v1006 = vpop.f32.mrb[0].mxu0
      %v1007 = vadd.f32 0.0, %v1006
      %v1008 = vpop.f32.mrb[0].mxu0
      %1009 = vmatprep.mubr.bf16.mxu0 0
      %1010 = vmatmul.mubr.bf16.gmra.mrb[0].mxu0 %v929
      %v1011 = vpop.f32.mrb[0].mxu0
      %v1012 = vadd.f32 0.0, %v1011
      %v1013 = vpop.f32.mrb[0].mxu0
      %v1014 = vpop.f32.mrb[0].mxu0
      %v1015 = vadd.f32 0.0, %v1014
      %v1016 = vpop.f32.mrb[0].mxu0
      %1017 = vmatprep.mubr.bf16.mxu0 0
      %1018 = vmatmul.mubr.bf16.gmra.mrb[0].mxu0 %v931
      %v1019 = vpop.f32.mrb[0].mxu0
      %v1020 = vadd.f32 0.0, %v1019
      %v1021 = vpop.f32.mrb[0].mxu0
      %v1022 = vpop.f32.mrb[0].mxu0
      %v1023 = vadd.f32 0.0, %v1022
      %v1024 = vpop.f32.mrb[0].mxu0
      %1025 = vmatprep.mubr.bf16.mxu0 0
      %1026 = vmatmul.mubr.bf16.gmra.mrb[0].mxu0 %v933
      %v1027 = vpop.f32.mrb[0].mxu0
      %v1028 = vadd.f32 0.0, %v1027
      %v1029 = vpop.f32.mrb[0].mxu0
      %v1030 = vpop.f32.mrb[0].mxu0
      %v1031 = vadd.f32 0.0, %v1030
      %v1032 = vpop.f32.mrb[0].mxu0
      %1033 = vmatprep.mubr.bf16.mxu0 0
      %1034 = vmatmul.mubr.bf16.gmra.mrb[0].mxu0 %v935
      %v1035 = vpop.f32.mrb[0].mxu0
      %v1036 = vadd.f32 0.0, %v1035
      %v1037 = vpop.f32.mrb[0].mxu0
      %v1038 = vpop.f32.mrb[0].mxu0
      %v1039 = vadd.f32 0.0, %v1038
      %v1040 = vpop.f32.mrb[0].mxu0
      %1041 = vmatprep.mubr.bf16.mxu0 0
      %1042 = vmatmul.mubr.bf16.gmra.mrb[0].mxu0 %v937
      %v1043 = vpop.f32.mrb[0].mxu0
      %v1044 = vadd.f32 0.0, %v1043
      %v1045 = vpop.f32.mrb[0].mxu0
      %v1046 = vpop.f32.mrb[0].mxu0
      %v1047 = vadd.f32 0.0, %v1046
      %v1048 = vpop.f32.mrb[0].mxu0
      %1049 = vmatprep.mubr.bf16.mxu0 0
      %1050 = vmatmul.mubr.bf16.gmra.mrb[0].mxu0 %v939
      %v1051 = vpop.f32.mrb[0].mxu0
      %v1052 = vadd.f32 0.0, %v1051
      %v1053 = vpop.f32.mrb[0].mxu0
      %v1054 = vpop.f32.mrb[0].mxu0
      %v1055 = vadd.f32 0.0, %v1054
      %v1056 = vpop.f32.mrb[0].mxu0
      %1057 = vmatprep.mubr.bf16.mxu0 0
      %1058 = vmatmul.mubr.bf16.gmra.mrb[0].mxu0 %v941
      %v1059 = vpop.f32.mrb[0].mxu0
      %v1060 = vadd.f32 0.0, %v1059
      %v1061 = vpop.f32.mrb[0].mxu0
      %v1062 = vpop.f32.mrb[0].mxu0
      %v1063 = vadd.f32 0.0, %v1062
      %v1064 = vpop.f32.mrb[0].mxu0
      %1065 = vmatprep.mubr.bf16.mxu0 0
      %1066 = vmatmul.mubr.bf16.gmra.mrb[0].mxu0 %v943
      %v1067 = vpop.f32.mrb[0].mxu0
      %v1068 = vadd.f32 0.0, %v1067
      %v1069 = vpop.f32.mrb[0].mxu0
      %v1070 = vpop.f32.mrb[0].mxu0
      %v1071 = vadd.f32 0.0, %v1070
      %v1072 = vpop.f32.mrb[0].mxu0
      %1073 = vmatprep.mubr.bf16.mxu0 0
      %1074 = vmatmul.mubr.bf16.gmra.mrb[0].mxu0 %v945
      %v1075 = vpop.f32.mrb[0].mxu0
      %v1076 = vadd.f32 0.0, %v1075
      %v1077 = vpop.f32.mrb[0].mxu0
      %v1078 = vpop.f32.mrb[0].mxu0
      %v1079 = vadd.f32 0.0, %v1078
      %v1080 = vpop.f32.mrb[0].mxu0
      %1081 = vmatprep.mubr.bf16.mxu0 0
      %1082 = vmatmul.mubr.bf16.gmra.mrb[0].mxu0 %v947
      %v1083 = vpop.f32.mrb[0].mxu0
      %v1084 = vadd.f32 0.0, %v1083
      %v1085 = vpop.f32.mrb[0].mxu0
      %v1086 = vpop.f32.mrb[0].mxu0
      %v1087 = vadd.f32 0.0, %v1086
      %v1088 = vpop.f32.mrb[0].mxu0
      %1089 = vmatprep.mubr.bf16.mxu0 0
      %1090 = vmatmul.mubr.bf16.gmra.mrb[0].mxu0 %v949
      %v1091 = vpop.f32.mrb[0].mxu0
      %v1092 = vadd.f32 0.0, %v1091
      %v1093 = vpop.f32.mrb[0].mxu0
      %v1094 = vpop.f32.mrb[0].mxu0
      %v1095 = vadd.f32 0.0, %v1094
      %v1096 = vpop.f32.mrb[0].mxu0
      %1097 = vmatprep.mubr.bf16.mxu0 0
      %1098 = vmatmul.mubr.bf16.gmra.mrb[0].mxu0 %v951
      %v1099 = vpop.f32.mrb[0].mxu0
      %v1100 = vadd.f32 0.0, %v1099
      %v1101 = vpop.f32.mrb[0].mxu0
      %v1102 = vpop.f32.mrb[0].mxu0
      %v1103 = vadd.f32 0.0, %v1102
      %v1104 = vpop.f32.mrb[0].mxu0
      %1105 = vmatprep.mubr.bf16.mxu0 0
      %1106 = vmatmul.mubr.bf16.gmra.mrb[0].mxu0 %v953
      %v1107 = vpop.f32.mrb[0].mxu0
      %v1108 = vadd.f32 0.0, %v1107
      %v1109 = vpop.f32.mrb[0].mxu0
      %v1110 = vpop.f32.mrb[0].mxu0
      %v1111 = vadd.f32 0.0, %v1110
      %v1112 = vpop.f32.mrb[0].mxu0
      %1113 = vmatprep.mubr.bf16.mxu0 0
      %1114 = vmatmul.mubr.bf16.gmra.mrb[0].mxu0 %v955
      %v1115 = vpop.f32.mrb[0].mxu0
      %v1116 = vadd.f32 0.0, %v1115
      %v1117 = vpop.f32.mrb[0].mxu0
      %v1118 = vpop.f32.mrb[0].mxu0
      %v1119 = vadd.f32 0.0, %v1118
      %v1120 = vpop.f32.mrb[0].mxu0
      %1121 = vdwg.mxu0
      %v1124 = vunpack.c.l.b16 %v889
      %v1125 = vunpack.c.l.b16 %v890
      %v1126 = vpack.c.b16 %v1125, %v1124
      %v1127 = vsel %vm924, %v858, 0
      %v1130 = vsel %vm957, %v1126, 0
      %1132 = vmatprep.subr.bf16.mxu0 0
      %1133 = vmatpush1.bf16.msra.mxu0 %v1130
      %1134 = vmatprep.subr.bf16.mxu0 0
      %1135 = vmatpush1.bf16.msra.mxu0 0
      %1136 = vmatprep.subr.bf16.mxu0 0
      %1137 = vmatpush1.bf16.msra.mxu0 0
      %1138 = vmatprep.subr.bf16.mxu0 0
      %1139 = vmatpush1.bf16.msra.mxu0 0
      %1140 = vmatprep.subr.bf16.mxu0 0
      %1141 = vmatpush1.bf16.msra.mxu0 0
      %1142 = vmatprep.subr.bf16.mxu0 0
      %1143 = vmatpush1.bf16.msra.mxu0 0
      %1144 = vmatprep.subr.bf16.mxu0 0
      %1145 = vmatpush1.bf16.msra.mxu0 0
      %1146 = vmatprep.subr.bf16.mxu0 0
      %1147 = vmatpush1.bf16.msra.mxu0 0
      %1148 = vmatprep.subr.bf16.mxu0 0
      %1149 = vmatpush1.bf16.msra.mxu0 0
      %1150 = vmatprep.subr.bf16.mxu0 0
      %1151 = vmatpush1.bf16.msra.mxu0 0
      %1152 = vmatprep.subr.bf16.mxu0 0
      %1153 = vmatpush1.bf16.msra.mxu0 0
      %1154 = vmatprep.subr.bf16.mxu0 0
      %1155 = vmatpush1.bf16.msra.mxu0 0
      %1156 = vmatprep.subr.bf16.mxu0 0
      %1157 = vmatpush1.bf16.msra.mxu0 0
      %1158 = vmatprep.subr.bf16.mxu0 0
      %1159 = vmatpush1.bf16.msra.mxu0 0
      %1160 = vmatprep.subr.bf16.mxu0 0
      %1161 = vmatpush1.bf16.msra.mxu0 0
      %1162 = vmatprep.subr.bf16.mxu0 0
      %1163 = vmatpush1.bf16.msra.mxu0 0
      %1164 = vmatprep.mubr.bf16.mxu0 0
      %1165 = vmatmul.mubr.bf16.gmra.mrb[0].mxu0 %v1127
      %v1166 = vpop.f32.mrb[0].mxu0
      %v1167 = vadd.f32 %v996, %v1166
      %v1168 = vpop.f32.mrb[0].mxu0
      %v1169 = vpop.f32.mrb[0].mxu0
      %v1170 = vadd.f32 %v999, %v1169
      %v1171 = vpop.f32.mrb[0].mxu0
      %1172 = vmatprep.mubr.bf16.mxu0 0
      %1173 = vmatmul.mubr.bf16.gmra.mrb[0].mxu0 %v925
      %v1174 = vpop.f32.mrb[0].mxu0
      %v1175 = vadd.f32 %v1004, %v1174
      %v1176 = vpop.f32.mrb[0].mxu0
      %v1177 = vpop.f32.mrb[0].mxu0
      %v1178 = vadd.f32 %v1007, %v1177
      %v1179 = vpop.f32.mrb[0].mxu0
      %1180 = vmatprep.mubr.bf16.mxu0 0
      %1181 = vmatmul.mubr.bf16.gmra.mrb[0].mxu0 %v927
      %v1182 = vpop.f32.mrb[0].mxu0
      %v1183 = vadd.f32 %v1012, %v1182
      %v1184 = vpop.f32.mrb[0].mxu0
      %v1185 = vpop.f32.mrb[0].mxu0
      %v1186 = vadd.f32 %v1015, %v1185
      %v1187 = vpop.f32.mrb[0].mxu0
      %1188 = vmatprep.mubr.bf16.mxu0 0
      %1189 = vmatmul.mubr.bf16.gmra.mrb[0].mxu0 %v929
      %v1190 = vpop.f32.mrb[0].mxu0
      %v1191 = vadd.f32 %v1020, %v1190
      %v1192 = vpop.f32.mrb[0].mxu0
      %v1193 = vpop.f32.mrb[0].mxu0
      %v1194 = vadd.f32 %v1023, %v1193
      %v1195 = vpop.f32.mrb[0].mxu0
      %1196 = vmatprep.mubr.bf16.mxu0 0
      %1197 = vmatmul.mubr.bf16.gmra.mrb[0].mxu0 %v931
      %v1198 = vpop.f32.mrb[0].mxu0
      %v1199 = vadd.f32 %v1028, %v1198
      %v1200 = vpop.f32.mrb[0].mxu0
      %v1201 = vpop.f32.mrb[0].mxu0
      %v1202 = vadd.f32 %v1031, %v1201
      %v1203 = vpop.f32.mrb[0].mxu0
      %1204 = vmatprep.mubr.bf16.mxu0 0
      %1205 = vmatmul.mubr.bf16.gmra.mrb[0].mxu0 %v933
      %v1206 = vpop.f32.mrb[0].mxu0
      %v1207 = vadd.f32 %v1036, %v1206
      %v1208 = vpop.f32.mrb[0].mxu0
      %v1209 = vpop.f32.mrb[0].mxu0
      %v1210 = vadd.f32 %v1039, %v1209
      %v1211 = vpop.f32.mrb[0].mxu0
      %1212 = vmatprep.mubr.bf16.mxu0 0
      %1213 = vmatmul.mubr.bf16.gmra.mrb[0].mxu0 %v935
      %v1214 = vpop.f32.mrb[0].mxu0
      %v1215 = vadd.f32 %v1044, %v1214
      %v1216 = vpop.f32.mrb[0].mxu0
      %v1217 = vpop.f32.mrb[0].mxu0
      %v1218 = vadd.f32 %v1047, %v1217
      %v1219 = vpop.f32.mrb[0].mxu0
      %1220 = vmatprep.mubr.bf16.mxu0 0
      %1221 = vmatmul.mubr.bf16.gmra.mrb[0].mxu0 %v937
      %v1222 = vpop.f32.mrb[0].mxu0
      %v1223 = vadd.f32 %v1052, %v1222
      %v1224 = vpop.f32.mrb[0].mxu0
      %v1225 = vpop.f32.mrb[0].mxu0
      %v1226 = vadd.f32 %v1055, %v1225
      %v1227 = vpop.f32.mrb[0].mxu0
      %1228 = vmatprep.mubr.bf16.mxu0 0
      %1229 = vmatmul.mubr.bf16.gmra.mrb[0].mxu0 %v939
      %v1230 = vpop.f32.mrb[0].mxu0
      %v1231 = vadd.f32 %v1060, %v1230
      %v1232 = vpop.f32.mrb[0].mxu0
      %v1233 = vpop.f32.mrb[0].mxu0
      %v1234 = vadd.f32 %v1063, %v1233
      %v1235 = vpop.f32.mrb[0].mxu0
      %1236 = vmatprep.mubr.bf16.mxu0 0
      %1237 = vmatmul.mubr.bf16.gmra.mrb[0].mxu0 %v941
      %v1238 = vpop.f32.mrb[0].mxu0
      %v1239 = vadd.f32 %v1068, %v1238
      %v1240 = vpop.f32.mrb[0].mxu0
      %v1241 = vpop.f32.mrb[0].mxu0
      %v1242 = vadd.f32 %v1071, %v1241
      %v1243 = vpop.f32.mrb[0].mxu0
      %1244 = vmatprep.mubr.bf16.mxu0 0
      %1245 = vmatmul.mubr.bf16.gmra.mrb[0].mxu0 %v943
      %v1246 = vpop.f32.mrb[0].mxu0
      %v1247 = vadd.f32 %v1076, %v1246
      %v1248 = vpop.f32.mrb[0].mxu0
      %v1249 = vpop.f32.mrb[0].mxu0
      %v1250 = vadd.f32 %v1079, %v1249
      %v1251 = vpop.f32.mrb[0].mxu0
      %1252 = vmatprep.mubr.bf16.mxu0 0
      %1253 = vmatmul.mubr.bf16.gmra.mrb[0].mxu0 %v945
      %v1254 = vpop.f32.mrb[0].mxu0
      %v1255 = vadd.f32 %v1084, %v1254
      %v1256 = vpop.f32.mrb[0].mxu0
      %v1257 = vpop.f32.mrb[0].mxu0
      %v1258 = vadd.f32 %v1087, %v1257
      %v1259 = vpop.f32.mrb[0].mxu0
      %1260 = vmatprep.mubr.bf16.mxu0 0
      %1261 = vmatmul.mubr.bf16.gmra.mrb[0].mxu0 %v947
      %v1262 = vpop.f32.mrb[0].mxu0
      %v1263 = vadd.f32 %v1092, %v1262
      %v1264 = vpop.f32.mrb[0].mxu0
      %v1265 = vpop.f32.mrb[0].mxu0
      %v1266 = vadd.f32 %v1095, %v1265
      %v1267 = vpop.f32.mrb[0].mxu0
      %1268 = vmatprep.mubr.bf16.mxu0 0
      %1269 = vmatmul.mubr.bf16.gmra.mrb[0].mxu0 %v949
      %v1270 = vpop.f32.mrb[0].mxu0
      %v1271 = vadd.f32 %v1100, %v1270
      %v1272 = vpop.f32.mrb[0].mxu0
      %v1273 = vpop.f32.mrb[0].mxu0
      %v1274 = vadd.f32 %v1103, %v1273
      %v1275 = vpop.f32.mrb[0].mxu0
      %1276 = vmatprep.mubr.bf16.mxu0 0
      %1277 = vmatmul.mubr.bf16.gmra.mrb[0].mxu0 %v951
      %v1278 = vpop.f32.mrb[0].mxu0
      %v1279 = vadd.f32 %v1108, %v1278
      %v1280 = vpop.f32.mrb[0].mxu0
      %v1281 = vpop.f32.mrb[0].mxu0
      %v1282 = vadd.f32 %v1111, %v1281
      %v1283 = vpop.f32.mrb[0].mxu0
      %1284 = vmatprep.mubr.bf16.mxu0 0
      %1285 = vmatmul.mubr.bf16.gmra.mrb[0].mxu0 %v953
      %v1286 = vpop.f32.mrb[0].mxu0
      %v1287 = vadd.f32 %v1116, %v1286
      %v1288 = vpop.f32.mrb[0].mxu0
      %v1289 = vpop.f32.mrb[0].mxu0
      %v1290 = vadd.f32 %v1119, %v1289
      %v1291 = vpop.f32.mrb[0].mxu0
      %1292 = vdwg.mxu0
      %s1293 = scalar_lea.vmem %s1, 16
      %v1294 = vld [vmem:[%s1293] sm:$0xf]
      %v1295 = vld [vmem:[%s1293 + $0x4] sm:$0x3]
      %v1298 = vunpack.c.l.b16 %v1294
      %v1299 = vunpack.c.l.b16 %v1295
      %v1300 = vpack.c.b16 %v1299, %v1298
      %v1302 = vsel %vm957, %v1300, 0
      %1304 = vmatprep.subr.bf16.mxu0 0
      %1305 = vmatpush1.bf16.msra.mxu0 %v1302
      %1306 = vmatprep.subr.bf16.mxu0 0
      %1307 = vmatpush1.bf16.msra.mxu0 0
      %1308 = vmatprep.subr.bf16.mxu0 0
      %1309 = vmatpush1.bf16.msra.mxu0 0
      %1310 = vmatprep.subr.bf16.mxu0 0
      %1311 = vmatpush1.bf16.msra.mxu0 0
      %1312 = vmatprep.subr.bf16.mxu0 0
      %1313 = vmatpush1.bf16.msra.mxu0 0
      %1314 = vmatprep.subr.bf16.mxu0 0
      %1315 = vmatpush1.bf16.msra.mxu0 0
      %1316 = vmatprep.subr.bf16.mxu0 0
      %1317 = vmatpush1.bf16.msra.mxu0 0
      %1318 = vmatprep.subr.bf16.mxu0 0
      %1319 = vmatpush1.bf16.msra.mxu0 0
      %1320 = vmatprep.subr.bf16.mxu0 0
      %1321 = vmatpush1.bf16.msra.mxu0 0
      %1322 = vmatprep.subr.bf16.mxu0 0
      %1323 = vmatpush1.bf16.msra.mxu0 0
      %1324 = vmatprep.subr.bf16.mxu0 0
      %1325 = vmatpush1.bf16.msra.mxu0 0
      %1326 = vmatprep.subr.bf16.mxu0 0
      %1327 = vmatpush1.bf16.msra.mxu0 0
      %1328 = vmatprep.subr.bf16.mxu0 0
      %1329 = vmatpush1.bf16.msra.mxu0 0
      %1330 = vmatprep.subr.bf16.mxu0 0
      %1331 = vmatpush1.bf16.msra.mxu0 0
      %1332 = vmatprep.subr.bf16.mxu0 0
      %1333 = vmatpush1.bf16.msra.mxu0 0
      %1334 = vmatprep.subr.bf16.mxu0 0
      %1335 = vmatpush1.bf16.msra.mxu0 0
      %1336 = vmatprep.mubr.bf16.mxu0 0
      %1337 = vmatmul.mubr.bf16.gmra.mrb[0].mxu0 %v927
      %v1338 = vpop.f32.mrb[0].mxu0
      %v1339 = vadd.f32 0.0, %v1338
      %v1340 = vpop.f32.mrb[0].mxu0
      %v1341 = vpop.f32.mrb[0].mxu0
      %v1342 = vadd.f32 0.0, %v1341
      %v1343 = vpop.f32.mrb[0].mxu0
      %1344 = vmatprep.mubr.bf16.mxu0 0
      %1345 = vmatmul.mubr.bf16.gmra.mrb[0].mxu0 %v929
      %v1346 = vpop.f32.mrb[0].mxu0
      %v1347 = vadd.f32 0.0, %v1346
      %v1348 = vpop.f32.mrb[0].mxu0
      %v1349 = vpop.f32.mrb[0].mxu0
      %v1350 = vadd.f32 0.0, %v1349
      %v1351 = vpop.f32.mrb[0].mxu0
      %1352 = vmatprep.mubr.bf16.mxu0 0
      %1353 = vmatmul.mubr.bf16.gmra.mrb[0].mxu0 %v931
      %v1354 = vpop.f32.mrb[0].mxu0
      %v1355 = vadd.f32 0.0, %v1354
      %v1356 = vpop.f32.mrb[0].mxu0
      %v1357 = vpop.f32.mrb[0].mxu0
      %v1358 = vadd.f32 0.0, %v1357
      %v1359 = vpop.f32.mrb[0].mxu0
      %1360 = vmatprep.mubr.bf16.mxu0 0
      %1361 = vmatmul.mubr.bf16.gmra.mrb[0].mxu0 %v933
      %v1362 = vpop.f32.mrb[0].mxu0
      %v1363 = vadd.f32 0.0, %v1362
      %v1364 = vpop.f32.mrb[0].mxu0
      %v1365 = vpop.f32.mrb[0].mxu0
      %v1366 = vadd.f32 0.0, %v1365
      %v1367 = vpop.f32.mrb[0].mxu0
      %1368 = vmatprep.mubr.bf16.mxu0 0
      %1369 = vmatmul.mubr.bf16.gmra.mrb[0].mxu0 %v935
      %v1370 = vpop.f32.mrb[0].mxu0
      %v1371 = vadd.f32 0.0, %v1370
      %v1372 = vpop.f32.mrb[0].mxu0
      %v1373 = vpop.f32.mrb[0].mxu0
      %v1374 = vadd.f32 0.0, %v1373
      %v1375 = vpop.f32.mrb[0].mxu0
      %1376 = vmatprep.mubr.bf16.mxu0 0
      %1377 = vmatmul.mubr.bf16.gmra.mrb[0].mxu0 %v937
      %v1378 = vpop.f32.mrb[0].mxu0
      %v1379 = vadd.f32 0.0, %v1378
      %v1380 = vpop.f32.mrb[0].mxu0
      %v1381 = vpop.f32.mrb[0].mxu0
      %v1382 = vadd.f32 0.0, %v1381
      %v1383 = vpop.f32.mrb[0].mxu0
      %1384 = vmatprep.mubr.bf16.mxu0 0
      %1385 = vmatmul.mubr.bf16.gmra.mrb[0].mxu0 %v939
      %v1386 = vpop.f32.mrb[0].mxu0
      %v1387 = vadd.f32 0.0, %v1386
      %v1388 = vpop.f32.mrb[0].mxu0
      %v1389 = vpop.f32.mrb[0].mxu0
      %v1390 = vadd.f32 0.0, %v1389
      %v1391 = vpop.f32.mrb[0].mxu0
      %1392 = vmatprep.mubr.bf16.mxu0 0
      %1393 = vmatmul.mubr.bf16.gmra.mrb[0].mxu0 %v941
      %v1394 = vpop.f32.mrb[0].mxu0
      %v1395 = vadd.f32 0.0, %v1394
      %v1396 = vpop.f32.mrb[0].mxu0
      %v1397 = vpop.f32.mrb[0].mxu0
      %v1398 = vadd.f32 0.0, %v1397
      %v1399 = vpop.f32.mrb[0].mxu0
      %1400 = vmatprep.mubr.bf16.mxu0 0
      %1401 = vmatmul.mubr.bf16.gmra.mrb[0].mxu0 %v943
      %v1402 = vpop.f32.mrb[0].mxu0
      %v1403 = vadd.f32 0.0, %v1402
      %v1404 = vpop.f32.mrb[0].mxu0
      %v1405 = vpop.f32.mrb[0].mxu0
      %v1406 = vadd.f32 0.0, %v1405
      %v1407 = vpop.f32.mrb[0].mxu0
      %1408 = vmatprep.mubr.bf16.mxu0 0
      %1409 = vmatmul.mubr.bf16.gmra.mrb[0].mxu0 %v945
      %v1410 = vpop.f32.mrb[0].mxu0
      %v1411 = vadd.f32 0.0, %v1410
      %v1412 = vpop.f32.mrb[0].mxu0
      %v1413 = vpop.f32.mrb[0].mxu0
      %v1414 = vadd.f32 0.0, %v1413
      %v1415 = vpop.f32.mrb[0].mxu0
      %1416 = vmatprep.mubr.bf16.mxu0 0
      %1417 = vmatmul.mubr.bf16.gmra.mrb[0].mxu0 %v947
      %v1418 = vpop.f32.mrb[0].mxu0
      %v1419 = vadd.f32 0.0, %v1418
      %v1420 = vpop.f32.mrb[0].mxu0
      %v1421 = vpop.f32.mrb[0].mxu0
      %v1422 = vadd.f32 0.0, %v1421
      %v1423 = vpop.f32.mrb[0].mxu0
      %1424 = vmatprep.mubr.bf16.mxu0 0
      %1425 = vmatmul.mubr.bf16.gmra.mrb[0].mxu0 %v949
      %v1426 = vpop.f32.mrb[0].mxu0
      %v1427 = vadd.f32 0.0, %v1426
      %v1428 = vpop.f32.mrb[0].mxu0
      %v1429 = vpop.f32.mrb[0].mxu0
      %v1430 = vadd.f32 0.0, %v1429
      %v1431 = vpop.f32.mrb[0].mxu0
      %1432 = vmatprep.mubr.bf16.mxu0 0
      %1433 = vmatmul.mubr.bf16.gmra.mrb[0].mxu0 %v951
      %v1434 = vpop.f32.mrb[0].mxu0
      %v1435 = vadd.f32 0.0, %v1434
      %v1436 = vpop.f32.mrb[0].mxu0
      %v1437 = vpop.f32.mrb[0].mxu0
      %v1438 = vadd.f32 0.0, %v1437
      %v1439 = vpop.f32.mrb[0].mxu0
      %1440 = vmatprep.mubr.bf16.mxu0 0
      %1441 = vmatmul.mubr.bf16.gmra.mrb[0].mxu0 %v953
      %v1442 = vpop.f32.mrb[0].mxu0
      %v1443 = vadd.f32 0.0, %v1442
      %v1444 = vpop.f32.mrb[0].mxu0
      %v1445 = vpop.f32.mrb[0].mxu0
      %v1446 = vadd.f32 0.0, %v1445
      %v1447 = vpop.f32.mrb[0].mxu0
      %1448 = vmatprep.mubr.bf16.mxu0 0
      %1449 = vmatmul.mubr.bf16.gmra.mrb[0].mxu0 %v955
      %v1450 = vpop.f32.mrb[0].mxu0
      %v1451 = vadd.f32 0.0, %v1450
      %v1452 = vpop.f32.mrb[0].mxu0
      %v1453 = vpop.f32.mrb[0].mxu0
      %v1454 = vadd.f32 0.0, %v1453
      %v1455 = vpop.f32.mrb[0].mxu0
      %1456 = vmatprep.mubr.bf16.mxu0 0
      %1457 = vmatmul.mubr.bf16.gmra.mrb[0].mxu0 %v1127
      %v1458 = vpop.f32.mrb[0].mxu0
      %v1459 = vadd.f32 0.0, %v1458
      %v1460 = vpop.f32.mrb[0].mxu0
      %v1461 = vpop.f32.mrb[0].mxu0
      %v1462 = vadd.f32 0.0, %v1461
      %v1463 = vpop.f32.mrb[0].mxu0
      %1464 = vdwg.mxu0
      %v1465 = vadd.f32 %v1167, %v1339
      %v1466 = vadd.f32 %v1170, %v1342
      %v1467 = vadd.f32 %v1175, %v1347
      %v1468 = vadd.f32 %v1178, %v1350
      %v1469 = vadd.f32 %v1183, %v1355
      %v1470 = vadd.f32 %v1186, %v1358
      %v1471 = vadd.f32 %v1191, %v1363
      %v1472 = vadd.f32 %v1194, %v1366
      %v1473 = vadd.f32 %v1199, %v1371
      %v1474 = vadd.f32 %v1202, %v1374
      %v1475 = vadd.f32 %v1207, %v1379
      %v1476 = vadd.f32 %v1210, %v1382
      %v1477 = vadd.f32 %v1215, %v1387
      %v1478 = vadd.f32 %v1218, %v1390
      %v1479 = vadd.f32 %v1223, %v1395
      %v1480 = vadd.f32 %v1226, %v1398
      %v1481 = vadd.f32 %v1231, %v1403
      %v1482 = vadd.f32 %v1234, %v1406
      %v1483 = vadd.f32 %v1239, %v1411
      %v1484 = vadd.f32 %v1242, %v1414
      %v1485 = vadd.f32 %v1247, %v1419
      %v1486 = vadd.f32 %v1250, %v1422
      %v1487 = vadd.f32 %v1255, %v1427
      %v1488 = vadd.f32 %v1258, %v1430
      %v1489 = vadd.f32 %v1263, %v1435
      %v1490 = vadd.f32 %v1266, %v1438
      %v1491 = vadd.f32 %v1271, %v1443
      %v1492 = vadd.f32 %v1274, %v1446
      %v1493 = vadd.f32 %v1279, %v1451
      %v1494 = vadd.f32 %v1282, %v1454
      %v1495 = vadd.f32 %v1287, %v1459
      %v1496 = vadd.f32 %v1290, %v1462
      %v1497 = vsel %vm823, %v1465, 0.0
      %v1498 = vsel %vm823, %v1466, 0.0
      %v1499 = vadd.f32 %v1497, %v1498
      %v1500 = vsel %vm823, %v1467, 0.0
      %v1501 = vadd.f32 %v1499, %v1500
      %v1502 = vsel %vm823, %v1468, 0.0
      %v1503 = vadd.f32 %v1501, %v1502
      %v1504 = vsel %vm823, %v1469, 0.0
      %v1505 = vadd.f32 %v1503, %v1504
      %v1506 = vsel %vm823, %v1470, 0.0
      %v1507 = vadd.f32 %v1505, %v1506
      %v1508 = vsel %vm823, %v1471, 0.0
      %v1509 = vadd.f32 %v1507, %v1508
      %v1510 = vsel %vm823, %v1472, 0.0
      %v1511 = vadd.f32 %v1509, %v1510
      %v1512 = vsel %vm823, %v1473, 0.0
      %v1513 = vadd.f32 %v1511, %v1512
      %v1514 = vsel %vm823, %v1474, 0.0
      %v1515 = vadd.f32 %v1513, %v1514
      %v1516 = vsel %vm823, %v1475, 0.0
      %v1517 = vadd.f32 %v1515, %v1516
      %v1518 = vsel %vm823, %v1476, 0.0
      %v1519 = vadd.f32 %v1517, %v1518
      %v1520 = vsel %vm823, %v1477, 0.0
      %v1521 = vadd.f32 %v1519, %v1520
      %v1522 = vsel %vm823, %v1478, 0.0
      %v1523 = vadd.f32 %v1521, %v1522
      %v1524 = vsel %vm823, %v1479, 0.0
      %v1525 = vadd.f32 %v1523, %v1524
      %v1526 = vsel %vm823, %v1480, 0.0
      %v1527 = vadd.f32 %v1525, %v1526
      %v1528 = vsel %vm823, %v1481, 0.0
      %v1529 = vadd.f32 %v1527, %v1528
      %v1530 = vsel %vm823, %v1482, 0.0
      %v1531 = vadd.f32 %v1529, %v1530
      %v1532 = vsel %vm823, %v1483, 0.0
      %v1533 = vadd.f32 %v1531, %v1532
      %v1534 = vsel %vm823, %v1484, 0.0
      %v1535 = vadd.f32 %v1533, %v1534
      %v1536 = vsel %vm823, %v1485, 0.0
      %v1537 = vadd.f32 %v1535, %v1536
      %v1538 = vsel %vm823, %v1486, 0.0
      %v1539 = vadd.f32 %v1537, %v1538
      %v1540 = vsel %vm823, %v1487, 0.0
      %v1541 = vadd.f32 %v1539, %v1540
      %v1542 = vsel %vm823, %v1488, 0.0
      %v1543 = vadd.f32 %v1541, %v1542
      %v1544 = vsel %vm823, %v1489, 0.0
      %v1545 = vadd.f32 %v1543, %v1544
      %v1546 = vsel %vm823, %v1490, 0.0
      %v1547 = vadd.f32 %v1545, %v1546
      %v1548 = vsel %vm823, %v1491, 0.0
      %v1549 = vadd.f32 %v1547, %v1548
      %v1550 = vsel %vm823, %v1492, 0.0
      %v1551 = vadd.f32 %v1549, %v1550
      %v1552 = vsel %vm823, %v1493, 0.0
      %v1553 = vadd.f32 %v1551, %v1552
      %v1554 = vsel %vm823, %v1494, 0.0
      %v1555 = vadd.f32 %v1553, %v1554
      %v1556 = vsel %vm823, %v1495, 0.0
      %v1557 = vadd.f32 %v1555, %v1556
      %v1558 = vsel %vm823, %v1496, 0.0
      %v1559 = vadd.f32 %v1557, %v1558
      %v1560 = vrot.slane %v1559, 4
      %v1561 = vadd.f32 %v1559, %v1560
      %v1562 = vrot.slane %v1561, 2
      %v1563 = vadd.f32 %v1561, %v1562
      %v1564 = vrot.slane %v1563, 1
      %v1565 = vadd.f32 %v1563, %v1564
      %v1566 = vmul.f32 %v1465, %v1465
      %v1567 = vmul.f32 %v1466, %v1466
      %v1568 = vmul.f32 %v1467, %v1467
      %v1569 = vmul.f32 %v1468, %v1468
      %v1570 = vmul.f32 %v1469, %v1469
      %v1571 = vmul.f32 %v1470, %v1470
      %v1572 = vmul.f32 %v1471, %v1471
      %v1573 = vmul.f32 %v1472, %v1472
      %v1574 = vmul.f32 %v1473, %v1473
      %v1575 = vmul.f32 %v1474, %v1474
      %v1576 = vmul.f32 %v1475, %v1475
      %v1577 = vmul.f32 %v1476, %v1476
      %v1578 = vmul.f32 %v1477, %v1477
      %v1579 = vmul.f32 %v1478, %v1478
      %v1580 = vmul.f32 %v1479, %v1479
      %v1581 = vmul.f32 %v1480, %v1480
      %v1582 = vmul.f32 %v1481, %v1481
      %v1583 = vmul.f32 %v1482, %v1482
      %v1584 = vmul.f32 %v1483, %v1483
      %v1585 = vmul.f32 %v1484, %v1484
      %v1586 = vmul.f32 %v1485, %v1485
      %v1587 = vmul.f32 %v1486, %v1486
      %v1588 = vmul.f32 %v1487, %v1487
      %v1589 = vmul.f32 %v1488, %v1488
      %v1590 = vmul.f32 %v1489, %v1489
      %v1591 = vmul.f32 %v1490, %v1490
      %v1592 = vmul.f32 %v1491, %v1491
      %v1593 = vmul.f32 %v1492, %v1492
      %v1594 = vmul.f32 %v1493, %v1493
      %v1595 = vmul.f32 %v1494, %v1494
      %v1596 = vmul.f32 %v1495, %v1495
      %v1597 = vmul.f32 %v1496, %v1496
      %v1598 = vsel %vm823, %v1566, 0.0
      %v1599 = vsel %vm823, %v1567, 0.0
      %v1600 = vadd.f32 %v1598, %v1599
      %v1601 = vsel %vm823, %v1568, 0.0
      %v1602 = vadd.f32 %v1600, %v1601
      %v1603 = vsel %vm823, %v1569, 0.0
      %v1604 = vadd.f32 %v1602, %v1603
      %v1605 = vsel %vm823, %v1570, 0.0
      %v1606 = vadd.f32 %v1604, %v1605
      %v1607 = vsel %vm823, %v1571, 0.0
      %v1608 = vadd.f32 %v1606, %v1607
      %v1609 = vsel %vm823, %v1572, 0.0
      %v1610 = vadd.f32 %v1608, %v1609
      %v1611 = vsel %vm823, %v1573, 0.0
      %v1612 = vadd.f32 %v1610, %v1611
      %v1613 = vsel %vm823, %v1574, 0.0
      %v1614 = vadd.f32 %v1612, %v1613
      %v1615 = vsel %vm823, %v1575, 0.0
      %v1616 = vadd.f32 %v1614, %v1615
      %v1617 = vsel %vm823, %v1576, 0.0
      %v1618 = vadd.f32 %v1616, %v1617
      %v1619 = vsel %vm823, %v1577, 0.0
      %v1620 = vadd.f32 %v1618, %v1619
      %v1621 = vsel %vm823, %v1578, 0.0
      %v1622 = vadd.f32 %v1620, %v1621
      %v1623 = vsel %vm823, %v1579, 0.0
      %v1624 = vadd.f32 %v1622, %v1623
      %v1625 = vsel %vm823, %v1580, 0.0
      %v1626 = vadd.f32 %v1624, %v1625
      %v1627 = vsel %vm823, %v1581, 0.0
      %v1628 = vadd.f32 %v1626, %v1627
      %v1629 = vsel %vm823, %v1582, 0.0
      %v1630 = vadd.f32 %v1628, %v1629
      %v1631 = vsel %vm823, %v1583, 0.0
      %v1632 = vadd.f32 %v1630, %v1631
      %v1633 = vsel %vm823, %v1584, 0.0
      %v1634 = vadd.f32 %v1632, %v1633
      %v1635 = vsel %vm823, %v1585, 0.0
      %v1636 = vadd.f32 %v1634, %v1635
      %v1637 = vsel %vm823, %v1586, 0.0
      %v1638 = vadd.f32 %v1636, %v1637
      %v1639 = vsel %vm823, %v1587, 0.0
      %v1640 = vadd.f32 %v1638, %v1639
      %v1641 = vsel %vm823, %v1588, 0.0
      %v1642 = vadd.f32 %v1640, %v1641
      %v1643 = vsel %vm823, %v1589, 0.0
      %v1644 = vadd.f32 %v1642, %v1643
      %v1645 = vsel %vm823, %v1590, 0.0
      %v1646 = vadd.f32 %v1644, %v1645
      %v1647 = vsel %vm823, %v1591, 0.0
      %v1648 = vadd.f32 %v1646, %v1647
      %v1649 = vsel %vm823, %v1592, 0.0
      %v1650 = vadd.f32 %v1648, %v1649
      %v1651 = vsel %vm823, %v1593, 0.0
      %v1652 = vadd.f32 %v1650, %v1651
      %v1653 = vsel %vm823, %v1594, 0.0
      %v1654 = vadd.f32 %v1652, %v1653
      %v1655 = vsel %vm823, %v1595, 0.0
      %v1656 = vadd.f32 %v1654, %v1655
      %v1657 = vsel %vm823, %v1596, 0.0
      %v1658 = vadd.f32 %v1656, %v1657
      %v1659 = vsel %vm823, %v1597, 0.0
      %v1660 = vadd.f32 %v1658, %v1659
      %v1661 = vrot.slane %v1660, 4
      %v1662 = vadd.f32 %v1660, %v1661
      %v1663 = vrot.slane %v1662, 2
      %v1664 = vadd.f32 %v1662, %v1663
      %v1665 = vrot.slane %v1664, 1
      %v1666 = vadd.f32 %v1664, %v1665
      %vm1667 = vcmask 1040384
      %v1668 = vsel %vm1667, %v1565, %v1666
      %vm1669 = vcmask 25600
      %1670 = vst.msk [vmem:[%s181] sm:$0x3] %vm1669, %v1668
      %v1671 = vpack.c.bf16 %v1466, %v1465
      %v1672 = vpack.c.bf16 %v1468, %v1467
      %v1673 = vpack.c.bf16 %v1470, %v1469
      %v1674 = vpack.c.bf16 %v1472, %v1471
      %v1675 = vpack.c.bf16 %v1474, %v1473
      %v1676 = vpack.c.bf16 %v1476, %v1475
      %v1677 = vpack.c.bf16 %v1478, %v1477
      %v1678 = vpack.c.bf16 %v1480, %v1479
      %v1679 = vpack.c.bf16 %v1482, %v1481
      %v1680 = vpack.c.bf16 %v1484, %v1483
      %v1681 = vpack.c.bf16 %v1486, %v1485
      %v1682 = vpack.c.bf16 %v1488, %v1487
      %v1683 = vpack.c.bf16 %v1490, %v1489
      %v1684 = vpack.c.bf16 %v1492, %v1491
      %v1685 = vpack.c.bf16 %v1494, %v1493
      %v1686 = vpack.c.bf16 %v1496, %v1495
      %v1703 = vunpack.c.l.b16 %v1671
      %v1704 = vunpack.c.h.b16 %v1671
      %v1705 = vunpack.c.l.b16 %v1672
      %v1706 = vunpack.c.h.b16 %v1672
      %v1707 = vunpack.c.l.b16 %v1673
      %v1708 = vunpack.c.h.b16 %v1673
      %v1709 = vunpack.c.l.b16 %v1674
      %v1710 = vunpack.c.h.b16 %v1674
      %v1711 = vunpack.c.l.b16 %v1675
      %v1712 = vunpack.c.h.b16 %v1675
      %v1713 = vunpack.c.l.b16 %v1676
      %v1714 = vunpack.c.h.b16 %v1676
      %v1715 = vunpack.c.l.b16 %v1677
      %v1716 = vunpack.c.h.b16 %v1677
      %v1717 = vunpack.c.l.b16 %v1678
      %v1718 = vunpack.c.h.b16 %v1678
      %v1719 = vunpack.c.l.b16 %v1679
      %v1720 = vunpack.c.h.b16 %v1679
      %v1721 = vunpack.c.l.b16 %v1680
      %v1722 = vunpack.c.h.b16 %v1680
      %v1723 = vunpack.c.l.b16 %v1681
      %v1724 = vunpack.c.h.b16 %v1681
      %v1725 = vunpack.c.l.b16 %v1682
      %v1726 = vunpack.c.h.b16 %v1682
      %v1727 = vunpack.c.l.b16 %v1683
      %v1728 = vunpack.c.h.b16 %v1683
      %v1729 = vunpack.c.l.b16 %v1684
      %v1730 = vunpack.c.h.b16 %v1684
      %v1731 = vunpack.c.l.b16 %v1685
      %v1732 = vunpack.c.h.b16 %v1685
      %v1733 = vunpack.c.l.b16 %v1686
      %v1734 = vunpack.c.h.b16 %v1686
      %v1735 = vpack.c.b16 %v1703, %v1703
      %v1736 = vpack.c.b16 %v1704, %v1704
      %v1737 = vpack.c.b16 %v1705, %v1705
      %v1738 = vpack.c.b16 %v1706, %v1706
      %v1739 = vpack.c.b16 %v1707, %v1707
      %v1740 = vpack.c.b16 %v1708, %v1708
      %v1741 = vpack.c.b16 %v1709, %v1709
      %v1742 = vpack.c.b16 %v1710, %v1710
      %v1743 = vpack.c.b16 %v1711, %v1711
      %v1744 = vpack.c.b16 %v1712, %v1712
      %v1745 = vpack.c.b16 %v1713, %v1713
      %v1746 = vpack.c.b16 %v1714, %v1714
      %v1747 = vpack.c.b16 %v1715, %v1715
      %v1748 = vpack.c.b16 %v1716, %v1716
      %v1749 = vpack.c.b16 %v1717, %v1717
      %v1750 = vpack.c.b16 %v1718, %v1718
      %v1751 = vpack.c.b16 %v1719, %v1719
      %v1752 = vpack.c.b16 %v1720, %v1720
      %v1753 = vpack.c.b16 %v1721, %v1721
      %v1754 = vpack.c.b16 %v1722, %v1722
      %v1755 = vpack.c.b16 %v1723, %v1723
      %v1756 = vpack.c.b16 %v1724, %v1724
      %v1757 = vpack.c.b16 %v1725, %v1725
      %v1758 = vpack.c.b16 %v1726, %v1726
      %v1759 = vpack.c.b16 %v1727, %v1727
      %v1760 = vpack.c.b16 %v1728, %v1728
      %v1761 = vpack.c.b16 %v1729, %v1729
      %v1762 = vpack.c.b16 %v1730, %v1730
      %v1763 = vpack.c.b16 %v1731, %v1731
      %v1764 = vpack.c.b16 %v1732, %v1732
      %v1765 = vpack.c.b16 %v1733, %v1733
      %v1766 = vpack.c.b16 %v1734, %v1734
      %vm1799 = vcmask 27648
      %1800 = vst.msk [vmem:[%s177] sm:$0xf] %vm1799, %v1735
      %1801 = vst.msk [vmem:[%s177 + $0x4] sm:$0xf] %vm1799, %v1736
      %1802 = vst.msk [vmem:[%s177 + $0x8] sm:$0xf] %vm1799, %v1737
      %1803 = vst.msk [vmem:[%s177 + $0xc] sm:$0xf] %vm1799, %v1738
      %1804 = vst.msk [vmem:[%s177 + $0x10] sm:$0xf] %vm1799, %v1739
      %1805 = vst.msk [vmem:[%s177 + $0x14] sm:$0xf] %vm1799, %v1740
      %1806 = vst.msk [vmem:[%s177 + $0x18] sm:$0xf] %vm1799, %v1741
      %1807 = vst.msk [vmem:[%s177 + $0x1c] sm:$0xf] %vm1799, %v1742
      %1808 = vst.msk [vmem:[%s177 + $0x20] sm:$0xf] %vm1799, %v1743
      %1809 = vst.msk [vmem:[%s177 + $0x24] sm:$0xf] %vm1799, %v1744
      %1810 = vst.msk [vmem:[%s177 + $0x28] sm:$0xf] %vm1799, %v1745
      %1811 = vst.msk [vmem:[%s177 + $0x2c] sm:$0xf] %vm1799, %v1746
      %1812 = vst.msk [vmem:[%s177 + $0x30] sm:$0xf] %vm1799, %v1747
      %1813 = vst.msk [vmem:[%s177 + $0x34] sm:$0xf] %vm1799, %v1748
      %1814 = vst.msk [vmem:[%s177 + $0x38] sm:$0xf] %vm1799, %v1749
      %1815 = vst.msk [vmem:[%s177 + $0x3c] sm:$0xf] %vm1799, %v1750
      %1816 = vst.msk [vmem:[%s177 + $0x40] sm:$0xf] %vm1799, %v1751
      %1817 = vst.msk [vmem:[%s177 + $0x44] sm:$0xf] %vm1799, %v1752
      %1818 = vst.msk [vmem:[%s177 + $0x48] sm:$0xf] %vm1799, %v1753
      %1819 = vst.msk [vmem:[%s177 + $0x4c] sm:$0xf] %vm1799, %v1754
      %1820 = vst.msk [vmem:[%s177 + $0x50] sm:$0xf] %vm1799, %v1755
      %1821 = vst.msk [vmem:[%s177 + $0x54] sm:$0xf] %vm1799, %v1756
      %1822 = vst.msk [vmem:[%s177 + $0x58] sm:$0xf] %vm1799, %v1757
      %1823 = vst.msk [vmem:[%s177 + $0x5c] sm:$0xf] %vm1799, %v1758
      %1824 = vst.msk [vmem:[%s177 + $0x60] sm:$0xf] %vm1799, %v1759
      %1825 = vst.msk [vmem:[%s177 + $0x64] sm:$0xf] %vm1799, %v1760
      %1826 = vst.msk [vmem:[%s177 + $0x68] sm:$0xf] %vm1799, %v1761
      %1827 = vst.msk [vmem:[%s177 + $0x6c] sm:$0xf] %vm1799, %v1762
      %1828 = vst.msk [vmem:[%s177 + $0x70] sm:$0xf] %vm1799, %v1763
      %1829 = vst.msk [vmem:[%s177 + $0x74] sm:$0xf] %vm1799, %v1764
      %1830 = vst.msk [vmem:[%s177 + $0x78] sm:$0xf] %vm1799, %v1765
      %1831 = vst.msk [vmem:[%s177 + $0x7c] sm:$0xf] %vm1799, %v1766
      %p1832 = scmp.lt.s32.totalorder %s15, 1
      %s1833 = scalar_select %p1832, %s15, 1
      %s1834 = smul.addr %s1833, 32
      %s1835 = smul.addr %s1834, 4
      %s1836 = scalar_lea.vmem %s2, %s1835
      %p1837 = scmp.lt.s32.totalorder %s15, 1
      %s1838 = scalar_select %p1837, %s15, 1
      %s1839 = smul.addr %s1838, 2
      %s1840 = scalar_lea.vmem %s3, %s1839
      // Predicated region
      $region29: #{basic_block_forward.3} parent=27 // pred_check
        %p1841 = pneg %p80
      $region30: #{basic_block_forward.3} parent=27 // pred_check_branch
        %1843 = sbr.rel (%p1841) target = $region32
      $region31: #{basic_block_forward.3} parent=27 // pred_region
        _
      $region32: #{basic_block_forward.3} parent=27 // pred_fallthru
        _
      // Predicated region
      $region33: #{basic_block_forward.3} parent=27 // pred_check
        %p1844 = pneg %p106
      $region34: #{basic_block_forward.3} parent=27 // pred_check_branch
        %1846 = sbr.rel (%p1844) target = $region36
      $region35: #{basic_block_forward.3} parent=27 // pred_region
        _
      $region36: #{basic_block_forward.3} parent=27 // pred_fallthru
        _
    $region28: #{basic_block_forward.3} parent=5 // pred_fallthru
      _
    %p1847 = scmp.le.s32.totalorder 2, %s10
    // Predicated region
    $region37: #{basic_block_forward.3} parent=5 // pred_check
      %p1848 = pneg %p1847
    $region38: #{basic_block_forward.3} parent=5 // pred_check_branch
      %1850 = sbr.rel (%p1848) target = $region40
    $region39: #{basic_block_forward.3} parent=5 // pred_region
      %s1851 = ssub.s32 %s10, 2
      // Predicated region
      $region41: #{basic_block_forward.3} parent=39 // pred_check
        %p1852 = pneg %p86
      $region42: #{basic_block_forward.3} parent=39 // pred_check_branch
        %1854 = sbr.rel (%p1852) target = $region44
      $region43: #{basic_block_forward.3} parent=39 // pred_region
        %p1855 = scmp.lt.s32.totalorder %s16, 1
        %s1856 = scalar_select %p1855, %s16, 1
        %s1857 = smul.addr %s1856, 32
        %s1858 = smul.addr %s1857, 4
        %s1859 = scalar_lea.vmem %s2, %s1858
      $region44: #{basic_block_forward.3} parent=39 // pred_fallthru
        _
      // Predicated region
      $region45: #{basic_block_forward.3} parent=39 // pred_check
        %p1860 = pneg %p112
      $region46: #{basic_block_forward.3} parent=39 // pred_check_branch
        %1862 = sbr.rel (%p1860) target = $region48
      $region47: #{basic_block_forward.3} parent=39 // pred_region
        %p1863 = scmp.lt.s32.totalorder %s16, 1
        %s1864 = scalar_select %p1863, %s16, 1
        %s1865 = smul.addr %s1864, 2
        %s1866 = scalar_lea.vmem %s3, %s1865
      $region48: #{basic_block_forward.3} parent=39 // pred_fallthru
        _
    $region40: #{basic_block_forward.3} parent=5 // pred_fallthru
      _
  $region6: #{basic_block_forward.3} parent=0 // loop_footer
    %s14 = sadd.s32 1, %s10
  $region7: #{basic_block_forward.3} parent=0 // loop_footer_branch
    %9 = sbr.rel target = $region3
  $region8: #{basic_block_forward.3} parent=0 // loop_exit
    _

// kernel: basic_block_forward.4
$region0: #{basic_block_forward.4}
  #allocation0 [shape = 'u32[]', space=smem, size = 0x4, offset = 0x4, fixed_abs, tag = 'smem constant byte address 0x4 - core index']
  #allocation1 [shape = 'u32[144,128]{1,0:T(1,128)}', space=vmem, size = 0x12000, scoped, tag = 'internal scratch']
  %s0 = inlined_call_operand.vmem [shape: bf16[2,16,16,4], index: 0, kind: input, shape index: {}]
  %s1 = inlined_call_operand.vmem [shape: f32[1,4], index: 1, kind: input, shape index: {}]
  %s2 = inlined_call_operand.vmem [shape: f32[1,4], index: 2, kind: input, shape index: {}]
  %s3 = inlined_call_operand.vmem [shape: bf16[3,12,4], index: 3, kind: input, shape index: {}]
  %s4 = inlined_call_operand.vmem [shape: bf16[2,16,16,4], index: 4, kind: output, shape index: {0}]
  %s5 = inlined_call_operand.vmem [shape: f32[2,2,4], index: 5, kind: output, shape index: {1}]
  %6 = xla_tuple %s4, %s5
  %s7 = sld [smem:[#allocation0]]
  $region57: #{basic_block_forward.4} parent=0
    _
  %s9 = ssub.s32 1, %s7
  %s10 = scalar_select 0, %s9, %s7
  loop: start=0, step=1, limit=4
  $region2: #{basic_block_forward.4} parent=0 // loop_pre_header
    _
  $region3: #{basic_block_forward.4} parent=0 // loop_header
    %s12 = sphi 0, %s16
    %p13 = scmp.ge.s32.totalorder %s12, 4
    %s22 = sphi 0, %s24
    %s25 = sphi 0, %s22
    %s26 = sphi 0, %s25
    %s42 = sphi 0, %s26
    %s46 = sphi 0, %s46
    %s48 = sphi 0, %s46
    %s49 = sphi 0, %s48
    %s63 = sphi 0, %s49
    %s67 = sphi 0, %s67
    %s69 = sphi 0, %s67
    %s70 = sphi 0, %s69
    %s84 = sphi 0, %s70
    %s88 = sphi 0, %s88
    %s90 = sphi 0, %s88
    %s91 = sphi 0, %s90
    %s105 = sphi 0, %s91
    %s111 = sphi 0, %s113
    %s114 = sphi 0, %s111
    %s115 = sphi 0, %s114
    %s131 = sphi 0, %s115
    %s137 = sphi 0, %s139
    %s140 = sphi 0, %s137
    %s141 = sphi 0, %s140
    %s157 = sphi 0, %s141
  $region4: #{basic_block_forward.4} parent=0 // loop_header_branch
    %15 = sbr.rel (%p13) target = $region8
  $region5: #{basic_block_forward.4} parent=0 // loop_body
    %s17 = ssub.s32 %s12, 1
    %s18 = ssub.s32 %s12, 2
    %s19 = sadd.s32 %s12, 1
    %s20 = ssub.s32 %s12, %s19
    %p21 = scmp.eq.s32.totalorder %s20, 0
    %s23 = sadd.s32 %s22, 1
    %s24 = scalar_select %p21, %s22, %s23
    %p27 = pneg %p21
    %p28 = scmp.eq.s32.totalorder %s12, 1
    %p29 = por %p27, %p28
    %p30 = scmp.ne.s32.totalorder %s22, %s25
    %p31 = scmp.eq.s32.totalorder %s12, 0
    %p32 = por %p30, %p31
    %p33 = scmp.ne.s32.totalorder %s22, %s25
    %p34 = scmp.eq.s32.totalorder %s17, 1
    %p35 = por %p33, %p34
    %p36 = scmp.ne.s32.totalorder %s25, %s26
    %p37 = scmp.eq.s32.totalorder %s17, 0
    %p38 = por %p36, %p37
    %p39 = scmp.ne.s32.totalorder %s25, %s26
    %p40 = scmp.eq.s32.totalorder %s18, 1
    %p41 = por %p39, %p40
    %p43 = scmp.ne.s32.totalorder %s26, %s42
    %p44 = scmp.eq.s32.totalorder %s18, 0
    %p45 = por %p43, %p44
    %s47 = sadd.s32 %s46, 1
    %p50 = scmp.eq.s32.totalorder %s12, 1
    %p51 = scmp.ne.s32.totalorder %s46, %s48
    %p52 = scmp.eq.s32.totalorder %s12, 0
    %p53 = por %p51, %p52
    %p54 = scmp.ne.s32.totalorder %s46, %s48
    %p55 = scmp.eq.s32.totalorder %s17, 1
    %p56 = por %p54, %p55
    %p57 = scmp.ne.s32.totalorder %s48, %s49
    %p58 = scmp.eq.s32.totalorder %s17, 0
    %p59 = por %p57, %p58
    %p60 = scmp.ne.s32.totalorder %s48, %s49
    %p61 = scmp.eq.s32.totalorder %s18, 1
    %p62 = por %p60, %p61
    %p64 = scmp.ne.s32.totalorder %s49, %s63
    %p65 = scmp.eq.s32.totalorder %s18, 0
    %p66 = por %p64, %p65
    %s68 = sadd.s32 %s67, 1
    %p71 = scmp.eq.s32.totalorder %s12, 1
    %p72 = scmp.ne.s32.totalorder %s67, %s69
    %p73 = scmp.eq.s32.totalorder %s12, 0
    %p74 = por %p72, %p73
    %p75 = scmp.ne.s32.totalorder %s67, %s69
    %p76 = scmp.eq.s32.totalorder %s17, 1
    %p77 = por %p75, %p76
    %p78 = scmp.ne.s32.totalorder %s69, %s70
    %p79 = scmp.eq.s32.totalorder %s17, 0
    %p80 = por %p78, %p79
    %p81 = scmp.ne.s32.totalorder %s69, %s70
    %p82 = scmp.eq.s32.totalorder %s18, 1
    %p83 = por %p81, %p82
    %p85 = scmp.ne.s32.totalorder %s70, %s84
    %p86 = scmp.eq.s32.totalorder %s18, 0
    %p87 = por %p85, %p86
    %s89 = sadd.s32 %s88, 1
    %p92 = scmp.eq.s32.totalorder %s12, 1
    %p93 = scmp.ne.s32.totalorder %s88, %s90
    %p94 = scmp.eq.s32.totalorder %s12, 0
    %p95 = por %p93, %p94
    %p96 = scmp.ne.s32.totalorder %s88, %s90
    %p97 = scmp.eq.s32.totalorder %s17, 1
    %p98 = por %p96, %p97
    %p99 = scmp.ne.s32.totalorder %s90, %s91
    %p100 = scmp.eq.s32.totalorder %s17, 0
    %p101 = por %p99, %p100
    %p102 = scmp.ne.s32.totalorder %s90, %s91
    %p103 = scmp.eq.s32.totalorder %s18, 1
    %p104 = por %p102, %p103
    %p106 = scmp.ne.s32.totalorder %s91, %s105
    %p107 = scmp.eq.s32.totalorder %s18, 0
    %p108 = por %p106, %p107
    %s109 = ssub.s32 %s12, %s19
    %p110 = scmp.eq.s32.totalorder %s109, 0
    %s112 = sadd.s32 %s111, 1
    %s113 = scalar_select %p110, %s111, %s112
    %p116 = pneg %p110
    %p117 = scmp.eq.s32.totalorder %s12, 1
    %p118 = por %p116, %p117
    %p119 = scmp.ne.s32.totalorder %s111, %s114
    %p120 = scmp.eq.s32.totalorder %s12, 0
    %p121 = por %p119, %p120
    %p122 = scmp.ne.s32.totalorder %s111, %s114
    %p123 = scmp.eq.s32.totalorder %s17, 1
    %p124 = por %p122, %p123
    %p125 = scmp.ne.s32.totalorder %s114, %s115
    %p126 = scmp.eq.s32.totalorder %s17, 0
    %p127 = por %p125, %p126
    %p128 = scmp.ne.s32.totalorder %s114, %s115
    %p129 = scmp.eq.s32.totalorder %s18, 1
    %p130 = por %p128, %p129
    %p132 = scmp.ne.s32.totalorder %s115, %s131
    %p133 = scmp.eq.s32.totalorder %s18, 0
    %p134 = por %p132, %p133
    %s135 = ssub.s32 %s12, %s19
    %p136 = scmp.eq.s32.totalorder %s135, 0
    %s138 = sadd.s32 %s137, 1
    %s139 = scalar_select %p136, %s137, %s138
    %p142 = pneg %p136
    %p143 = scmp.eq.s32.totalorder %s12, 1
    %p144 = por %p142, %p143
    %p145 = scmp.ne.s32.totalorder %s137, %s140
    %p146 = scmp.eq.s32.totalorder %s12, 0
    %p147 = por %p145, %p146
    %p148 = scmp.ne.s32.totalorder %s137, %s140
    %p149 = scmp.eq.s32.totalorder %s17, 1
    %p150 = por %p148, %p149
    %p151 = scmp.ne.s32.totalorder %s140, %s141
    %p152 = scmp.eq.s32.totalorder %s17, 0
    %p153 = por %p151, %p152
    %p154 = scmp.ne.s32.totalorder %s140, %s141
    %p155 = scmp.eq.s32.totalorder %s18, 1
    %p156 = por %p154, %p155
    %p158 = scmp.ne.s32.totalorder %s141, %s157
    %p159 = scmp.eq.s32.totalorder %s18, 0
    %p160 = por %p158, %p159
    %p161 = scmp.le.s32.totalorder 1, %s12
    %p162 = scmp.lt.s32.totalorder %s12, 3
    %p163 = pnand %p161, %p162
    %p164 = pneg %p163
    // Predicated region
    $region9: #{basic_block_forward.4} parent=5 // pred_check
      _
    $region10: #{basic_block_forward.4} parent=5 // pred_check_branch
      %166 = sbr.rel (%p163) target = $region12
    $region11: #{basic_block_forward.4} parent=5 // pred_region
      %s167 = ssub.s32 %s12, 1
      // Predicated region
      $region13: #{basic_block_forward.4} parent=11 // pred_check
        %p168 = pneg %p59
      $region14: #{basic_block_forward.4} parent=11 // pred_check_branch
        %170 = sbr.rel (%p168) target = $region16
      $region15: #{basic_block_forward.4} parent=11 // pred_region
        _
      $region16: #{basic_block_forward.4} parent=11 // pred_fallthru
        _
      // Predicated region
      $region17: #{basic_block_forward.4} parent=11 // pred_check
        %p171 = pneg %p80
      $region18: #{basic_block_forward.4} parent=11 // pred_check_branch
        %173 = sbr.rel (%p171) target = $region20
      $region19: #{basic_block_forward.4} parent=11 // pred_region
        _
      $region20: #{basic_block_forward.4} parent=11 // pred_fallthru
        _
      // Predicated region
      $region21: #{basic_block_forward.4} parent=11 // pred_check
        %p174 = pneg %p101
      $region22: #{basic_block_forward.4} parent=11 // pred_check_branch
        %176 = sbr.rel (%p174) target = $region24
      $region23: #{basic_block_forward.4} parent=11 // pred_region
        _
      $region24: #{basic_block_forward.4} parent=11 // pred_fallthru
        _
    $region12: #{basic_block_forward.4} parent=5 // pred_fallthru
      _
    %p177 = scmp.lt.s32.totalorder %s12, 2
    // Predicated region
    $region25: #{basic_block_forward.4} parent=5 // pred_check
      %p178 = pneg %p177
    $region26: #{basic_block_forward.4} parent=5 // pred_check_branch
      %180 = sbr.rel (%p178) target = $region28
    $region27: #{basic_block_forward.4} parent=5 // pred_region
      // Predicated region
      $region29: #{basic_block_forward.4} parent=27 // pred_check
        %p181 = pneg %p32
      $region30: #{basic_block_forward.4} parent=27 // pred_check_branch
        %183 = sbr.rel (%p181) target = $region32
      $region31: #{basic_block_forward.4} parent=27 // pred_region
        %p184 = scmp.lt.s32.totalorder %s12, 1
        %s185 = scalar_select %p184, %s12, 1
        %s186 = smul.addr %s185, 32
        %s187 = smul.addr %s186, 4
        %s188 = scalar_lea.vmem %s0, %s187
      $region32: #{basic_block_forward.4} parent=27 // pred_fallthru
        _
    $region28: #{basic_block_forward.4} parent=5 // pred_fallthru
      _
    %p189 = scmp.le.s32.totalorder 1, %s12
    %p190 = scmp.lt.s32.totalorder %s12, 3
    %p191 = pnand %p189, %p190
    %p192 = pneg %p191
    // Predicated region
    $region33: #{basic_block_forward.4} parent=5 // pred_check
      _
    $region34: #{basic_block_forward.4} parent=5 // pred_check_branch
      %194 = sbr.rel (%p191) target = $region36
    $region35: #{basic_block_forward.4} parent=5 // pred_region
      %s195 = ssub.s32 %s12, 1
      %p196 = scmp.lt.s32.totalorder %s17, 1
      %s197 = scalar_select %p196, %s17, 1
      %s198 = smul.addr %s197, 32
      %s199 = smul.addr %s198, 4
      %s200 = scalar_lea.vmem %s0, %s199
      %p201 = pneg %p38
      %p202 = pneg %p35
      %p203 = pneg %p59
      %p204 = pneg %p56
      %p205 = pneg %p80
      %p206 = pneg %p77
      %p207 = pneg %p101
      %p208 = pneg %p98
      %p209 = pneg %p127
      %p210 = pneg %p124
      %p211 = scmp.lt.s32.totalorder %s17, 1
      %s212 = scalar_select %p211, %s17, 1
      %s213 = smul.addr %s212, 32
      %s214 = smul.addr %s213, 4
      %s215 = scalar_lea.vmem %s4, %s214
      %p216 = pneg %p153
      %p217 = pneg %p150
      %p218 = scmp.lt.s32.totalorder %s17, 1
      %s219 = scalar_select %p218, %s17, 1
      %s220 = smul.addr %s219, 2
      %s221 = scalar_lea.vmem %s5, %s220
      %p222 = scmp.lt.s32.totalorder %s17, 1
      %s223 = scalar_select %p222, %s17, 1
      %s224 = smul.addr %s223, 32
      %s225 = smul.addr %s224, 4
      %s226 = scalar_lea.vmem %s0, %s225
      %p227 = scmp.lt.s32.totalorder %s17, 1
      %s228 = scalar_select %p227, %s17, 1
      %s229 = smul.addr %s228, 32
      %s230 = smul.addr %s229, 4
      %s231 = scalar_lea.vmem %s4, %s230
      %p232 = scmp.lt.s32.totalorder %s17, 1
      %s233 = scalar_select %p232, %s17, 1
      %s234 = smul.addr %s233, 2
      %s235 = scalar_lea.vmem %s5, %s234
      %v237 = vld [vmem:[%s226] sm:$0xf]
      %v238 = vld [vmem:[%s226 + $0x4] sm:$0xf]
      %v239 = vld [vmem:[%s226 + $0x8] sm:$0xf]
      %v240 = vld [vmem:[%s226 + $0xc] sm:$0xf]
      %v241 = vld [vmem:[%s226 + $0x10] sm:$0xf]
      %v242 = vld [vmem:[%s226 + $0x14] sm:$0xf]
      %v243 = vld [vmem:[%s226 + $0x18] sm:$0xf]
      %v244 = vld [vmem:[%s226 + $0x1c] sm:$0xf]
      %v245 = vld [vmem:[%s226 + $0x20] sm:$0xf]
      %v246 = vld [vmem:[%s226 + $0x24] sm:$0xf]
      %v247 = vld [vmem:[%s226 + $0x28] sm:$0xf]
      %v248 = vld [vmem:[%s226 + $0x2c] sm:$0xf]
      %v249 = vld [vmem:[%s226 + $0x30] sm:$0xf]
      %v250 = vld [vmem:[%s226 + $0x34] sm:$0xf]
      %v251 = vld [vmem:[%s226 + $0x38] sm:$0xf]
      %v252 = vld [vmem:[%s226 + $0x3c] sm:$0xf]
      %v253 = vld [vmem:[%s226 + $0x40] sm:$0xf]
      %v254 = vld [vmem:[%s226 + $0x44] sm:$0xf]
      %v255 = vld [vmem:[%s226 + $0x48] sm:$0xf]
      %v256 = vld [vmem:[%s226 + $0x4c] sm:$0xf]
      %v257 = vld [vmem:[%s226 + $0x50] sm:$0xf]
      %v258 = vld [vmem:[%s226 + $0x54] sm:$0xf]
      %v259 = vld [vmem:[%s226 + $0x58] sm:$0xf]
      %v260 = vld [vmem:[%s226 + $0x5c] sm:$0xf]
      %v261 = vld [vmem:[%s226 + $0x60] sm:$0xf]
      %v262 = vld [vmem:[%s226 + $0x64] sm:$0xf]
      %v263 = vld [vmem:[%s226 + $0x68] sm:$0xf]
      %v264 = vld [vmem:[%s226 + $0x6c] sm:$0xf]
      %v265 = vld [vmem:[%s226 + $0x70] sm:$0xf]
      %v266 = vld [vmem:[%s226 + $0x74] sm:$0xf]
      %v267 = vld [vmem:[%s226 + $0x78] sm:$0xf]
      %v268 = vld [vmem:[%s226 + $0x7c] sm:$0xf]
      %v269 = vunpack.c.l.bf16 %v237
      %v270 = vunpack.c.l.bf16 %v238
      %v271 = vunpack.c.l.bf16 %v239
      %v272 = vunpack.c.l.bf16 %v240
      %v273 = vunpack.c.l.bf16 %v241
      %v274 = vunpack.c.l.bf16 %v242
      %v275 = vunpack.c.l.bf16 %v243
      %v276 = vunpack.c.l.bf16 %v244
      %v277 = vunpack.c.l.bf16 %v245
      %v278 = vunpack.c.l.bf16 %v246
      %v279 = vunpack.c.l.bf16 %v247
      %v280 = vunpack.c.l.bf16 %v248
      %v281 = vunpack.c.l.bf16 %v249
      %v282 = vunpack.c.l.bf16 %v250
      %v283 = vunpack.c.l.bf16 %v251
      %v284 = vunpack.c.l.bf16 %v252
      %v285 = vunpack.c.l.bf16 %v253
      %v286 = vunpack.c.l.bf16 %v254
      %v287 = vunpack.c.l.bf16 %v255
      %v288 = vunpack.c.l.bf16 %v256
      %v289 = vunpack.c.l.bf16 %v257
      %v290 = vunpack.c.l.bf16 %v258
      %v291 = vunpack.c.l.bf16 %v259
      %v292 = vunpack.c.l.bf16 %v260
      %v293 = vunpack.c.l.bf16 %v261
      %v294 = vunpack.c.l.bf16 %v262
      %v295 = vunpack.c.l.bf16 %v263
      %v296 = vunpack.c.l.bf16 %v264
      %v297 = vunpack.c.l.bf16 %v265
      %v298 = vunpack.c.l.bf16 %v266
      %v299 = vunpack.c.l.bf16 %v267
      %v300 = vunpack.c.l.bf16 %v268
      %v301 = vld [vmem:[%s1] sm:$0x1]
      %v303 = vlaneseq
      %v304 = vshrl.u32 %v303, 7
      %v305 = vsub.s32 0, %v304
      %v306 = vrot.slane %v301, %v305
      %v308 = vmul.f32 %v269, %v306
      %v309 = vmul.f32 %v270, %v306
      %v310 = vmul.f32 %v271, %v306
      %v311 = vmul.f32 %v272, %v306
      %v312 = vmul.f32 %v273, %v306
      %v313 = vmul.f32 %v274, %v306
      %v314 = vmul.f32 %v275, %v306
      %v315 = vmul.f32 %v276, %v306
      %v316 = vmul.f32 %v277, %v306
      %v317 = vmul.f32 %v278, %v306
      %v318 = vmul.f32 %v279, %v306
      %v319 = vmul.f32 %v280, %v306
      %v320 = vmul.f32 %v281, %v306
      %v321 = vmul.f32 %v282, %v306
      %v322 = vmul.f32 %v283, %v306
      %v323 = vmul.f32 %v284, %v306
      %v324 = vmul.f32 %v285, %v306
      %v325 = vmul.f32 %v286, %v306
      %v326 = vmul.f32 %v287, %v306
      %v327 = vmul.f32 %v288, %v306
      %v328 = vmul.f32 %v289, %v306
      %v329 = vmul.f32 %v290, %v306
      %v330 = vmul.f32 %v291, %v306
      %v331 = vmul.f32 %v292, %v306
      %v332 = vmul.f32 %v293, %v306
      %v333 = vmul.f32 %v294, %v306
      %v334 = vmul.f32 %v295, %v306
      %v335 = vmul.f32 %v296, %v306
      %v336 = vmul.f32 %v297, %v306
      %v337 = vmul.f32 %v298, %v306
      %v338 = vmul.f32 %v299, %v306
      %v339 = vmul.f32 %v300, %v306
      %v340 = vld [vmem:[%s2] sm:$0x1]
      %v342 = vlaneseq
      %v343 = vshrl.u32 %v342, 7
      %v344 = vsub.s32 0, %v343
      %v345 = vrot.slane %v340, %v344
      %v347 = vadd.f32 %v308, %v345
      %v348 = vadd.f32 %v309, %v345
      %v349 = vadd.f32 %v310, %v345
      %v350 = vadd.f32 %v311, %v345
      %v351 = vadd.f32 %v312, %v345
      %v352 = vadd.f32 %v313, %v345
      %v353 = vadd.f32 %v314, %v345
      %v354 = vadd.f32 %v315, %v345
      %v355 = vadd.f32 %v316, %v345
      %v356 = vadd.f32 %v317, %v345
      %v357 = vadd.f32 %v318, %v345
      %v358 = vadd.f32 %v319, %v345
      %v359 = vadd.f32 %v320, %v345
      %v360 = vadd.f32 %v321, %v345
      %v361 = vadd.f32 %v322, %v345
      %v362 = vadd.f32 %v323, %v345
      %v363 = vadd.f32 %v324, %v345
      %v364 = vadd.f32 %v325, %v345
      %v365 = vadd.f32 %v326, %v345
      %v366 = vadd.f32 %v327, %v345
      %v367 = vadd.f32 %v328, %v345
      %v368 = vadd.f32 %v329, %v345
      %v369 = vadd.f32 %v330, %v345
      %v370 = vadd.f32 %v331, %v345
      %v371 = vadd.f32 %v332, %v345
      %v372 = vadd.f32 %v333, %v345
      %v373 = vadd.f32 %v334, %v345
      %v374 = vadd.f32 %v335, %v345
      %v375 = vadd.f32 %v336, %v345
      %v376 = vadd.f32 %v337, %v345
      %v377 = vadd.f32 %v338, %v345
      %v378 = vadd.f32 %v339, %v345
      %v379 = vmax.f32 %v347, 0.0
      %v380 = vmax.f32 %v348, 0.0
      %v381 = vmax.f32 %v349, 0.0
      %v382 = vmax.f32 %v350, 0.0
      %v383 = vmax.f32 %v351, 0.0
      %v384 = vmax.f32 %v352, 0.0
      %v385 = vmax.f32 %v353, 0.0
      %v386 = vmax.f32 %v354, 0.0
      %v387 = vmax.f32 %v355, 0.0
      %v388 = vmax.f32 %v356, 0.0
      %v389 = vmax.f32 %v357, 0.0
      %v390 = vmax.f32 %v358, 0.0
      %v391 = vmax.f32 %v359, 0.0
      %v392 = vmax.f32 %v360, 0.0
      %v393 = vmax.f32 %v361, 0.0
      %v394 = vmax.f32 %v362, 0.0
      %v395 = vmax.f32 %v363, 0.0
      %v396 = vmax.f32 %v364, 0.0
      %v397 = vmax.f32 %v365, 0.0
      %v398 = vmax.f32 %v366, 0.0
      %v399 = vmax.f32 %v367, 0.0
      %v400 = vmax.f32 %v368, 0.0
      %v401 = vmax.f32 %v369, 0.0
      %v402 = vmax.f32 %v370, 0.0
      %v403 = vmax.f32 %v371, 0.0
      %v404 = vmax.f32 %v372, 0.0
      %v405 = vmax.f32 %v373, 0.0
      %v406 = vmax.f32 %v374, 0.0
      %v407 = vmax.f32 %v375, 0.0
      %v408 = vmax.f32 %v376, 0.0
      %v409 = vmax.f32 %v377, 0.0
      %v410 = vmax.f32 %v378, 0.0
      %v411 = vpack.c.bf16 %v380, %v379
      %v412 = vpack.c.bf16 %v382, %v381
      %v413 = vpack.c.bf16 %v384, %v383
      %v414 = vpack.c.bf16 %v386, %v385
      %v415 = vpack.c.bf16 %v388, %v387
      %v416 = vpack.c.bf16 %v390, %v389
      %v417 = vpack.c.bf16 %v392, %v391
      %v418 = vpack.c.bf16 %v394, %v393
      %v419 = vpack.c.bf16 %v396, %v395
      %v420 = vpack.c.bf16 %v398, %v397
      %v421 = vpack.c.bf16 %v400, %v399
      %v422 = vpack.c.bf16 %v402, %v401
      %v423 = vpack.c.bf16 %v404, %v403
      %v424 = vpack.c.bf16 %v406, %v405
      %v425 = vpack.c.bf16 %v408, %v407
      %v426 = vpack.c.bf16 %v410, %v409
      %v428 = vshrl.u32 0, 16
      %v430 = vrot.slane %v428, 7
      %v431 = vshll.u32 0, 16
      %v433 = vor.u32 %v430, %v431
      %v435 = vshrl.u32 %v411, 16
      %v437 = vrot.slane %v435, 7
      %v438 = vshll.u32 %v411, 16
      %v440 = vor.u32 %v437, %v438
      %v442 = vshrl.u32 %v412, 16
      %v444 = vrot.slane %v442, 7
      %v445 = vshll.u32 %v412, 16
      %v447 = vor.u32 %v444, %v445
      %v449 = vshrl.u32 %v413, 16
      %v451 = vrot.slane %v449, 7
      %v452 = vshll.u32 %v413, 16
      %v454 = vor.u32 %v451, %v452
      %v456 = vshrl.u32 %v414, 16
      %v458 = vrot.slane %v456, 7
      %v459 = vshll.u32 %v414, 16
      %v461 = vor.u32 %v458, %v459
      %v463 = vshrl.u32 %v415, 16
      %v465 = vrot.slane %v463, 7
      %v466 = vshll.u32 %v415, 16
      %v468 = vor.u32 %v465, %v466
      %v470 = vshrl.u32 %v416, 16
      %v472 = vrot.slane %v470, 7
      %v473 = vshll.u32 %v416, 16
      %v475 = vor.u32 %v472, %v473
      %v477 = vshrl.u32 %v417, 16
      %v479 = vrot.slane %v477, 7
      %v480 = vshll.u32 %v417, 16
      %v482 = vor.u32 %v479, %v480
      %v484 = vshrl.u32 %v418, 16
      %v486 = vrot.slane %v484, 7
      %v487 = vshll.u32 %v418, 16
      %v489 = vor.u32 %v486, %v487
      %v491 = vshrl.u32 %v419, 16
      %v493 = vrot.slane %v491, 7
      %v494 = vshll.u32 %v419, 16
      %v496 = vor.u32 %v493, %v494
      %v498 = vshrl.u32 %v420, 16
      %v500 = vrot.slane %v498, 7
      %v501 = vshll.u32 %v420, 16
      %v503 = vor.u32 %v500, %v501
      %v505 = vshrl.u32 %v421, 16
      %v507 = vrot.slane %v505, 7
      %v508 = vshll.u32 %v421, 16
      %v510 = vor.u32 %v507, %v508
      %v512 = vshrl.u32 %v422, 16
      %v514 = vrot.slane %v512, 7
      %v515 = vshll.u32 %v422, 16
      %v517 = vor.u32 %v514, %v515
      %v519 = vshrl.u32 %v423, 16
      %v521 = vrot.slane %v519, 7
      %v522 = vshll.u32 %v423, 16
      %v524 = vor.u32 %v521, %v522
      %v526 = vshrl.u32 %v424, 16
      %v528 = vrot.slane %v526, 7
      %v529 = vshll.u32 %v424, 16
      %v531 = vor.u32 %v528, %v529
      %v533 = vshrl.u32 %v425, 16
      %v535 = vrot.slane %v533, 7
      %v536 = vshll.u32 %v425, 16
      %v538 = vor.u32 %v535, %v536
      %v540 = vshrl.u32 %v426, 16
      %v542 = vrot.slane %v540, 7
      %v543 = vshll.u32 %v426, 16
      %v545 = vor.u32 %v542, %v543
      %vm580 = vcmask 1040384
      %vm581 = vsmask.f32 256
      %vm582 = vmand %vm580, %vm581
      %v583 = vsel %vm582, 0, %v433
      %v584 = vsel %vm582, 0, %v440
      %v585 = vsel %vm582, 0, %v447
      %v586 = vsel %vm582, 0, %v454
      %v587 = vsel %vm582, 0, %v461
      %v588 = vsel %vm582, 0, %v468
      %v589 = vsel %vm582, 0, %v475
      %v590 = vsel %vm582, 0, %v482
      %v591 = vsel %vm582, 0, %v489
      %v592 = vsel %vm582, 0, %v496
      %v593 = vsel %vm582, 0, %v503
      %v594 = vsel %vm582, 0, %v510
      %v595 = vsel %vm582, 0, %v517
      %v596 = vsel %vm582, 0, %v524
      %v597 = vsel %vm582, 0, %v531
      %v598 = vsel %vm582, 0, %v538
      %v599 = vsel %vm582, 0, %v545
      %v600 = vsel %vm582, %v430, 0
      %v601 = vsel %vm582, %v437, 0
      %v602 = vsel %vm582, %v444, 0
      %v603 = vsel %vm582, %v451, 0
      %v604 = vsel %vm582, %v458, 0
      %v605 = vsel %vm582, %v465, 0
      %v606 = vsel %vm582, %v472, 0
      %v607 = vsel %vm582, %v479, 0
      %v608 = vsel %vm582, %v486, 0
      %v609 = vsel %vm582, %v493, 0
      %v610 = vsel %vm582, %v500, 0
      %v611 = vsel %vm582, %v507, 0
      %v612 = vsel %vm582, %v514, 0
      %v613 = vsel %vm582, %v521, 0
      %v614 = vsel %vm582, %v528, 0
      %v615 = vsel %vm582, %v535, 0
      %v616 = vsel %vm582, %v542, 0
      %vm617 = vsmask.f32 7424
      %v619 = vshrl.u32 %v583, 16
      %v621 = vshll.u32 %v583, 16
      %v623 = vrot.slane %v621, 1
      %v624 = vor.u32 %v619, %v623
      %v626 = vshll.u32 %v600, 16
      %v628 = vrot.slane %v626, 1
      %v629 = vsel %vm617, %v624, %v628
      %v631 = vshrl.u32 %v584, 16
      %v633 = vshll.u32 %v584, 16
      %v635 = vrot.slane %v633, 1
      %v636 = vor.u32 %v631, %v635
      %v638 = vshll.u32 %v601, 16
      %v640 = vrot.slane %v638, 1
      %v641 = vsel %vm617, %v636, %v640
      %v643 = vshrl.u32 %v585, 16
      %v645 = vshll.u32 %v585, 16
      %v647 = vrot.slane %v645, 1
      %v648 = vor.u32 %v643, %v647
      %v650 = vshll.u32 %v602, 16
      %v652 = vrot.slane %v650, 1
      %v653 = vsel %vm617, %v648, %v652
      %v655 = vshrl.u32 %v586, 16
      %v657 = vshll.u32 %v586, 16
      %v659 = vrot.slane %v657, 1
      %v660 = vor.u32 %v655, %v659
      %v662 = vshll.u32 %v603, 16
      %v664 = vrot.slane %v662, 1
      %v665 = vsel %vm617, %v660, %v664
      %v667 = vshrl.u32 %v587, 16
      %v669 = vshll.u32 %v587, 16
      %v671 = vrot.slane %v669, 1
      %v672 = vor.u32 %v667, %v671
      %v674 = vshll.u32 %v604, 16
      %v676 = vrot.slane %v674, 1
      %v677 = vsel %vm617, %v672, %v676
      %v679 = vshrl.u32 %v588, 16
      %v681 = vshll.u32 %v588, 16
      %v683 = vrot.slane %v681, 1
      %v684 = vor.u32 %v679, %v683
      %v686 = vshll.u32 %v605, 16
      %v688 = vrot.slane %v686, 1
      %v689 = vsel %vm617, %v684, %v688
      %v691 = vshrl.u32 %v589, 16
      %v693 = vshll.u32 %v589, 16
      %v695 = vrot.slane %v693, 1
      %v696 = vor.u32 %v691, %v695
      %v698 = vshll.u32 %v606, 16
      %v700 = vrot.slane %v698, 1
      %v701 = vsel %vm617, %v696, %v700
      %v703 = vshrl.u32 %v590, 16
      %v705 = vshll.u32 %v590, 16
      %v707 = vrot.slane %v705, 1
      %v708 = vor.u32 %v703, %v707
      %v710 = vshll.u32 %v607, 16
      %v712 = vrot.slane %v710, 1
      %v713 = vsel %vm617, %v708, %v712
      %v715 = vshrl.u32 %v591, 16
      %v717 = vshll.u32 %v591, 16
      %v719 = vrot.slane %v717, 1
      %v720 = vor.u32 %v715, %v719
      %v722 = vshll.u32 %v608, 16
      %v724 = vrot.slane %v722, 1
      %v725 = vsel %vm617, %v720, %v724
      %v727 = vshrl.u32 %v592, 16
      %v729 = vshll.u32 %v592, 16
      %v731 = vrot.slane %v729, 1
      %v732 = vor.u32 %v727, %v731
      %v734 = vshll.u32 %v609, 16
      %v736 = vrot.slane %v734, 1
      %v737 = vsel %vm617, %v732, %v736
      %v739 = vshrl.u32 %v593, 16
      %v741 = vshll.u32 %v593, 16
      %v743 = vrot.slane %v741, 1
      %v744 = vor.u32 %v739, %v743
      %v746 = vshll.u32 %v610, 16
      %v748 = vrot.slane %v746, 1
      %v749 = vsel %vm617, %v744, %v748
      %v751 = vshrl.u32 %v594, 16
      %v753 = vshll.u32 %v594, 16
      %v755 = vrot.slane %v753, 1
      %v756 = vor.u32 %v751, %v755
      %v758 = vshll.u32 %v611, 16
      %v760 = vrot.slane %v758, 1
      %v761 = vsel %vm617, %v756, %v760
      %v763 = vshrl.u32 %v595, 16
      %v765 = vshll.u32 %v595, 16
      %v767 = vrot.slane %v765, 1
      %v768 = vor.u32 %v763, %v767
      %v770 = vshll.u32 %v612, 16
      %v772 = vrot.slane %v770, 1
      %v773 = vsel %vm617, %v768, %v772
      %v775 = vshrl.u32 %v596, 16
      %v777 = vshll.u32 %v596, 16
      %v779 = vrot.slane %v777, 1
      %v780 = vor.u32 %v775, %v779
      %v782 = vshll.u32 %v613, 16
      %v784 = vrot.slane %v782, 1
      %v785 = vsel %vm617, %v780, %v784
      %v787 = vshrl.u32 %v597, 16
      %v789 = vshll.u32 %v597, 16
      %v791 = vrot.slane %v789, 1
      %v792 = vor.u32 %v787, %v791
      %v794 = vshll.u32 %v614, 16
      %v796 = vrot.slane %v794, 1
      %v797 = vsel %vm617, %v792, %v796
      %v799 = vshrl.u32 %v598, 16
      %v801 = vshll.u32 %v598, 16
      %v803 = vrot.slane %v801, 1
      %v804 = vor.u32 %v799, %v803
      %v806 = vshll.u32 %v615, 16
      %v808 = vrot.slane %v806, 1
      %v809 = vsel %vm617, %v804, %v808
      %810 = vrot.lane.b32.xlu0 %v629, 4
      %v811 = vpop.permute.xlu0 %810
      %812 = vrot.lane.b32.xlu0 %v641, 4
      %v813 = vpop.permute.xlu0 %812
      %814 = vrot.lane.b32.xlu0 %v653, 4
      %v815 = vpop.permute.xlu0 %814
      %816 = vrot.lane.b32.xlu0 %v665, 4
      %v817 = vpop.permute.xlu0 %816
      %818 = vrot.lane.b32.xlu0 %v677, 4
      %v819 = vpop.permute.xlu0 %818
      %820 = vrot.lane.b32.xlu0 %v689, 4
      %v821 = vpop.permute.xlu0 %820
      %822 = vrot.lane.b32.xlu0 %v701, 4
      %v823 = vpop.permute.xlu0 %822
      %824 = vrot.lane.b32.xlu0 %v713, 4
      %v825 = vpop.permute.xlu0 %824
      %826 = vrot.lane.b32.xlu0 %v725, 4
      %v827 = vpop.permute.xlu0 %826
      %828 = vrot.lane.b32.xlu0 %v737, 4
      %v829 = vpop.permute.xlu0 %828
      %830 = vrot.lane.b32.xlu0 %v749, 4
      %v831 = vpop.permute.xlu0 %830
      %832 = vrot.lane.b32.xlu0 %v761, 4
      %v833 = vpop.permute.xlu0 %832
      %834 = vrot.lane.b32.xlu0 %v773, 4
      %v835 = vpop.permute.xlu0 %834
      %836 = vrot.lane.b32.xlu0 %v785, 4
      %v837 = vpop.permute.xlu0 %836
      %838 = vrot.lane.b32.xlu0 %v797, 4
      %v839 = vpop.permute.xlu0 %838
      %840 = vrot.lane.b32.xlu0 %v809, 4
      %v841 = vpop.permute.xlu0 %840
      %vm874 = vcmask 1046528
      %v875 = vrot.slane %v583, 1
      %v876 = vrot.slane %v600, 1
      %v877 = vsel %vm874, %v875, %v876
      %v878 = vrot.slane %v584, 1
      %v879 = vrot.slane %v601, 1
      %v880 = vsel %vm874, %v878, %v879
      %v881 = vrot.slane %v585, 1
      %v882 = vrot.slane %v602, 1
      %v883 = vsel %vm874, %v881, %v882
      %v884 = vrot.slane %v586, 1
      %v885 = vrot.slane %v603, 1
      %v886 = vsel %vm874, %v884, %v885
      %v887 = vrot.slane %v587, 1
      %v888 = vrot.slane %v604, 1
      %v889 = vsel %vm874, %v887, %v888
      %v890 = vrot.slane %v588, 1
      %v891 = vrot.slane %v605, 1
      %v892 = vsel %vm874, %v890, %v891
      %v893 = vrot.slane %v589, 1
      %v894 = vrot.slane %v606, 1
      %v895 = vsel %vm874, %v893, %v894
      %v896 = vrot.slane %v590, 1
      %v897 = vrot.slane %v607, 1
      %v898 = vsel %vm874, %v896, %v897
      %v899 = vrot.slane %v591, 1
      %v900 = vrot.slane %v608, 1
      %v901 = vsel %vm874, %v899, %v900
      %v902 = vrot.slane %v592, 1
      %v903 = vrot.slane %v609, 1
      %v904 = vsel %vm874, %v902, %v903
      %v905 = vrot.slane %v593, 1
      %v906 = vrot.slane %v610, 1
      %v907 = vsel %vm874, %v905, %v906
      %v908 = vrot.slane %v594, 1
      %v909 = vrot.slane %v611, 1
      %v910 = vsel %vm874, %v908, %v909
      %v911 = vrot.slane %v595, 1
      %v912 = vrot.slane %v612, 1
      %v913 = vsel %vm874, %v911, %v912
      %v914 = vrot.slane %v596, 1
      %v915 = vrot.slane %v613, 1
      %v916 = vsel %vm874, %v914, %v915
      %v917 = vrot.slane %v597, 1
      %v918 = vrot.slane %v614, 1
      %v919 = vsel %vm874, %v917, %v918
      %v920 = vrot.slane %v598, 1
      %v921 = vrot.slane %v615, 1
      %v922 = vsel %vm874, %v920, %v921
      %923 = vrot.lane.b32.xlu0 %v877, 8
      %v924 = vpop.permute.xlu0 %923
      %925 = vrot.lane.b32.xlu0 %v880, 8
      %v926 = vpop.permute.xlu0 %925
      %927 = vrot.lane.b32.xlu0 %v883, 8
      %v928 = vpop.permute.xlu0 %927
      %929 = vrot.lane.b32.xlu0 %v886, 8
      %v930 = vpop.permute.xlu0 %929
      %931 = vrot.lane.b32.xlu0 %v889, 8
      %v932 = vpop.permute.xlu0 %931
      %933 = vrot.lane.b32.xlu0 %v892, 8
      %v934 = vpop.permute.xlu0 %933
      %935 = vrot.lane.b32.xlu0 %v895, 8
      %v936 = vpop.permute.xlu0 %935
      %937 = vrot.lane.b32.xlu0 %v898, 8
      %v938 = vpop.permute.xlu0 %937
      %939 = vrot.lane.b32.xlu0 %v901, 8
      %v940 = vpop.permute.xlu0 %939
      %941 = vrot.lane.b32.xlu0 %v904, 8
      %v942 = vpop.permute.xlu0 %941
      %943 = vrot.lane.b32.xlu0 %v907, 8
      %v944 = vpop.permute.xlu0 %943
      %945 = vrot.lane.b32.xlu0 %v910, 8
      %v946 = vpop.permute.xlu0 %945
      %947 = vrot.lane.b32.xlu0 %v913, 8
      %v948 = vpop.permute.xlu0 %947
      %949 = vrot.lane.b32.xlu0 %v916, 8
      %v950 = vpop.permute.xlu0 %949
      %951 = vrot.lane.b32.xlu0 %v919, 8
      %v952 = vpop.permute.xlu0 %951
      %953 = vrot.lane.b32.xlu0 %v922, 8
      %v954 = vpop.permute.xlu0 %953
      %vm955 = vcmask 31744
      %v957 = vsel %vm955, %v583, %v811
      %v959 = vsel %vm955, %v584, %v813
      %v961 = vsel %vm955, %v585, %v815
      %v963 = vsel %vm955, %v586, %v817
      %v965 = vsel %vm955, %v587, %v819
      %v967 = vsel %vm955, %v588, %v821
      %v969 = vsel %vm955, %v589, %v823
      %v971 = vsel %vm955, %v590, %v825
      %v973 = vsel %vm955, %v591, %v827
      %v975 = vsel %vm955, %v592, %v829
      %v977 = vsel %vm955, %v593, %v831
      %v979 = vsel %vm955, %v594, %v833
      %v981 = vsel %vm955, %v595, %v835
      %v983 = vsel %vm955, %v596, %v837
      %v985 = vsel %vm955, %v597, %v839
      %v987 = vsel %vm955, %v598, %v841
      %vm988 = vcmask 64512
      %v990 = vsel %vm988, %v957, %v924
      %v992 = vsel %vm988, %v959, %v926
      %v994 = vsel %vm988, %v961, %v928
      %v996 = vsel %vm988, %v963, %v930
      %v998 = vsel %vm988, %v965, %v932
      %v1000 = vsel %vm988, %v967, %v934
      %v1002 = vsel %vm988, %v969, %v936
      %v1004 = vsel %vm988, %v971, %v938
      %v1006 = vsel %vm988, %v973, %v940
      %v1008 = vsel %vm988, %v975, %v942
      %v1010 = vsel %vm988, %v977, %v944
      %v1012 = vsel %vm988, %v979, %v946
      %v1014 = vsel %vm988, %v981, %v948
      %v1016 = vsel %vm988, %v983, %v950
      %v1018 = vsel %vm988, %v985, %v952
      %v1020 = vsel %vm988, %v987, %v954
      %v1021 = vld [vmem:[%s3] sm:$0xf]
      %v1022 = vld [vmem:[%s3 + $0x4] sm:$0x3]
      %v1024 = vshrl.u32 %v599, 16
      %v1026 = vshll.u32 %v599, 16
      %v1028 = vrot.slane %v1026, 1
      %v1029 = vor.u32 %v1024, %v1028
      %v1031 = vshll.u32 %v616, 16
      %v1033 = vrot.slane %v1031, 1
      %v1034 = vsel %vm617, %v1029, %v1033
      %1035 = vrot.lane.b32.xlu0 %v1034, 4
      %v1036 = vpop.permute.xlu0 %1035
      %v1039 = vrot.slane %v599, 1
      %v1040 = vrot.slane %v616, 1
      %v1041 = vsel %vm874, %v1039, %v1040
      %1042 = vrot.lane.b32.xlu0 %v1041, 8
      %v1043 = vpop.permute.xlu0 %1042
      %v1045 = vsel %vm955, %v599, %v1036
      %v1047 = vsel %vm988, %v1045, %v1043
      %s1048 = scalar_lea.vmem %s3, 8
      %v1049 = vld [vmem:[%s1048] sm:$0xf]
      %v1050 = vld [vmem:[%s1048 + $0x4] sm:$0x3]
      %v1053 = vunpack.c.l.b16 %v1049
      %v1054 = vunpack.c.l.b16 %v1050
      %v1055 = vpack.c.b16 %v1054, %v1053
      %vm1056 = vcmask 97280
      %v1057 = vsel %vm1056, %v992, 0
      %v1059 = vsel %vm1056, %v994, 0
      %v1061 = vsel %vm1056, %v996, 0
      %v1063 = vsel %vm1056, %v998, 0
      %v1065 = vsel %vm1056, %v1000, 0
      %v1067 = vsel %vm1056, %v1002, 0
      %v1069 = vsel %vm1056, %v1004, 0
      %v1071 = vsel %vm1056, %v1006, 0
      %v1073 = vsel %vm1056, %v1008, 0
      %v1075 = vsel %vm1056, %v1010, 0
      %v1077 = vsel %vm1056, %v1012, 0
      %v1079 = vsel %vm1056, %v1014, 0
      %v1081 = vsel %vm1056, %v1016, 0
      %v1083 = vsel %vm1056, %v1018, 0
      %v1085 = vsel %vm1056, %v1020, 0
      %v1087 = vsel %vm1056, %v1047, 0
      %vm1089 = vcmask 1045504
      %v1091 = vsel %vm1089, %v1055, 0
      %1093 = vmatprep.subr.bf16.mxu0 0
      %1094 = vmatpush1.bf16.msra.mxu0 %v1091
      %1095 = vmatprep.subr.bf16.mxu0 0
      %1096 = vmatpush1.bf16.msra.mxu0 0
      %1097 = vmatprep.subr.bf16.mxu0 0
      %1098 = vmatpush1.bf16.msra.mxu0 0
      %1099 = vmatprep.subr.bf16.mxu0 0
      %1100 = vmatpush1.bf16.msra.mxu0 0
      %1101 = vmatprep.subr.bf16.mxu0 0
      %1102 = vmatpush1.bf16.msra.mxu0 0
      %1103 = vmatprep.subr.bf16.mxu0 0
      %1104 = vmatpush1.bf16.msra.mxu0 0
      %1105 = vmatprep.subr.bf16.mxu0 0
      %1106 = vmatpush1.bf16.msra.mxu0 0
      %1107 = vmatprep.subr.bf16.mxu0 0
      %1108 = vmatpush1.bf16.msra.mxu0 0
      %1109 = vmatprep.subr.bf16.mxu0 0
      %1110 = vmatpush1.bf16.msra.mxu0 0
      %1111 = vmatprep.subr.bf16.mxu0 0
      %1112 = vmatpush1.bf16.msra.mxu0 0
      %1113 = vmatprep.subr.bf16.mxu0 0
      %1114 = vmatpush1.bf16.msra.mxu0 0
      %1115 = vmatprep.subr.bf16.mxu0 0
      %1116 = vmatpush1.bf16.msra.mxu0 0
      %1117 = vmatprep.subr.bf16.mxu0 0
      %1118 = vmatpush1.bf16.msra.mxu0 0
      %1119 = vmatprep.subr.bf16.mxu0 0
      %1120 = vmatpush1.bf16.msra.mxu0 0
      %1121 = vmatprep.subr.bf16.mxu0 0
      %1122 = vmatpush1.bf16.msra.mxu0 0
      %1123 = vmatprep.subr.bf16.mxu0 0
      %1124 = vmatpush1.bf16.msra.mxu0 0
      %1125 = vmatprep.mubr.bf16.mxu0 0
      %1126 = vmatmul.mubr.bf16.gmra.mrb[0].mxu0 %v1057
      %v1127 = vpop.f32.mrb[0].mxu0
      %v1128 = vadd.f32 0.0, %v1127
      %v1129 = vpop.f32.mrb[0].mxu0
      %v1130 = vpop.f32.mrb[0].mxu0
      %v1131 = vadd.f32 0.0, %v1130
      %v1132 = vpop.f32.mrb[0].mxu0
      %1133 = vmatprep.mubr.bf16.mxu0 0
      %1134 = vmatmul.mubr.bf16.gmra.mrb[0].mxu0 %v1059
      %v1135 = vpop.f32.mrb[0].mxu0
      %v1136 = vadd.f32 0.0, %v1135
      %v1137 = vpop.f32.mrb[0].mxu0
      %v1138 = vpop.f32.mrb[0].mxu0
      %v1139 = vadd.f32 0.0, %v1138
      %v1140 = vpop.f32.mrb[0].mxu0
      %1141 = vmatprep.mubr.bf16.mxu0 0
      %1142 = vmatmul.mubr.bf16.gmra.mrb[0].mxu0 %v1061
      %v1143 = vpop.f32.mrb[0].mxu0
      %v1144 = vadd.f32 0.0, %v1143
      %v1145 = vpop.f32.mrb[0].mxu0
      %v1146 = vpop.f32.mrb[0].mxu0
      %v1147 = vadd.f32 0.0, %v1146
      %v1148 = vpop.f32.mrb[0].mxu0
      %1149 = vmatprep.mubr.bf16.mxu0 0
      %1150 = vmatmul.mubr.bf16.gmra.mrb[0].mxu0 %v1063
      %v1151 = vpop.f32.mrb[0].mxu0
      %v1152 = vadd.f32 0.0, %v1151
      %v1153 = vpop.f32.mrb[0].mxu0
      %v1154 = vpop.f32.mrb[0].mxu0
      %v1155 = vadd.f32 0.0, %v1154
      %v1156 = vpop.f32.mrb[0].mxu0
      %1157 = vmatprep.mubr.bf16.mxu0 0
      %1158 = vmatmul.mubr.bf16.gmra.mrb[0].mxu0 %v1065
      %v1159 = vpop.f32.mrb[0].mxu0
      %v1160 = vadd.f32 0.0, %v1159
      %v1161 = vpop.f32.mrb[0].mxu0
      %v1162 = vpop.f32.mrb[0].mxu0
      %v1163 = vadd.f32 0.0, %v1162
      %v1164 = vpop.f32.mrb[0].mxu0
      %1165 = vmatprep.mubr.bf16.mxu0 0
      %1166 = vmatmul.mubr.bf16.gmra.mrb[0].mxu0 %v1067
      %v1167 = vpop.f32.mrb[0].mxu0
      %v1168 = vadd.f32 0.0, %v1167
      %v1169 = vpop.f32.mrb[0].mxu0
      %v1170 = vpop.f32.mrb[0].mxu0
      %v1171 = vadd.f32 0.0, %v1170
      %v1172 = vpop.f32.mrb[0].mxu0
      %1173 = vmatprep.mubr.bf16.mxu0 0
      %1174 = vmatmul.mubr.bf16.gmra.mrb[0].mxu0 %v1069
      %v1175 = vpop.f32.mrb[0].mxu0
      %v1176 = vadd.f32 0.0, %v1175
      %v1177 = vpop.f32.mrb[0].mxu0
      %v1178 = vpop.f32.mrb[0].mxu0
      %v1179 = vadd.f32 0.0, %v1178
      %v1180 = vpop.f32.mrb[0].mxu0
      %1181 = vmatprep.mubr.bf16.mxu0 0
      %1182 = vmatmul.mubr.bf16.gmra.mrb[0].mxu0 %v1071
      %v1183 = vpop.f32.mrb[0].mxu0
      %v1184 = vadd.f32 0.0, %v1183
      %v1185 = vpop.f32.mrb[0].mxu0
      %v1186 = vpop.f32.mrb[0].mxu0
      %v1187 = vadd.f32 0.0, %v1186
      %v1188 = vpop.f32.mrb[0].mxu0
      %1189 = vmatprep.mubr.bf16.mxu0 0
      %1190 = vmatmul.mubr.bf16.gmra.mrb[0].mxu0 %v1073
      %v1191 = vpop.f32.mrb[0].mxu0
      %v1192 = vadd.f32 0.0, %v1191
      %v1193 = vpop.f32.mrb[0].mxu0
      %v1194 = vpop.f32.mrb[0].mxu0
      %v1195 = vadd.f32 0.0, %v1194
      %v1196 = vpop.f32.mrb[0].mxu0
      %1197 = vmatprep.mubr.bf16.mxu0 0
      %1198 = vmatmul.mubr.bf16.gmra.mrb[0].mxu0 %v1075
      %v1199 = vpop.f32.mrb[0].mxu0
      %v1200 = vadd.f32 0.0, %v1199
      %v1201 = vpop.f32.mrb[0].mxu0
      %v1202 = vpop.f32.mrb[0].mxu0
      %v1203 = vadd.f32 0.0, %v1202
      %v1204 = vpop.f32.mrb[0].mxu0
      %1205 = vmatprep.mubr.bf16.mxu0 0
      %1206 = vmatmul.mubr.bf16.gmra.mrb[0].mxu0 %v1077
      %v1207 = vpop.f32.mrb[0].mxu0
      %v1208 = vadd.f32 0.0, %v1207
      %v1209 = vpop.f32.mrb[0].mxu0
      %v1210 = vpop.f32.mrb[0].mxu0
      %v1211 = vadd.f32 0.0, %v1210
      %v1212 = vpop.f32.mrb[0].mxu0
      %1213 = vmatprep.mubr.bf16.mxu0 0
      %1214 = vmatmul.mubr.bf16.gmra.mrb[0].mxu0 %v1079
      %v1215 = vpop.f32.mrb[0].mxu0
      %v1216 = vadd.f32 0.0, %v1215
      %v1217 = vpop.f32.mrb[0].mxu0
      %v1218 = vpop.f32.mrb[0].mxu0
      %v1219 = vadd.f32 0.0, %v1218
      %v1220 = vpop.f32.mrb[0].mxu0
      %1221 = vmatprep.mubr.bf16.mxu0 0
      %1222 = vmatmul.mubr.bf16.gmra.mrb[0].mxu0 %v1081
      %v1223 = vpop.f32.mrb[0].mxu0
      %v1224 = vadd.f32 0.0, %v1223
      %v1225 = vpop.f32.mrb[0].mxu0
      %v1226 = vpop.f32.mrb[0].mxu0
      %v1227 = vadd.f32 0.0, %v1226
      %v1228 = vpop.f32.mrb[0].mxu0
      %1229 = vmatprep.mubr.bf16.mxu0 0
      %1230 = vmatmul.mubr.bf16.gmra.mrb[0].mxu0 %v1083
      %v1231 = vpop.f32.mrb[0].mxu0
      %v1232 = vadd.f32 0.0, %v1231
      %v1233 = vpop.f32.mrb[0].mxu0
      %v1234 = vpop.f32.mrb[0].mxu0
      %v1235 = vadd.f32 0.0, %v1234
      %v1236 = vpop.f32.mrb[0].mxu0
      %1237 = vmatprep.mubr.bf16.mxu0 0
      %1238 = vmatmul.mubr.bf16.gmra.mrb[0].mxu0 %v1085
      %v1239 = vpop.f32.mrb[0].mxu0
      %v1240 = vadd.f32 0.0, %v1239
      %v1241 = vpop.f32.mrb[0].mxu0
      %v1242 = vpop.f32.mrb[0].mxu0
      %v1243 = vadd.f32 0.0, %v1242
      %v1244 = vpop.f32.mrb[0].mxu0
      %1245 = vmatprep.mubr.bf16.mxu0 0
      %1246 = vmatmul.mubr.bf16.gmra.mrb[0].mxu0 %v1087
      %v1247 = vpop.f32.mrb[0].mxu0
      %v1248 = vadd.f32 0.0, %v1247
      %v1249 = vpop.f32.mrb[0].mxu0
      %v1250 = vpop.f32.mrb[0].mxu0
      %v1251 = vadd.f32 0.0, %v1250
      %v1252 = vpop.f32.mrb[0].mxu0
      %1253 = vdwg.mxu0
      %v1256 = vunpack.c.l.b16 %v1021
      %v1257 = vunpack.c.l.b16 %v1022
      %v1258 = vpack.c.b16 %v1257, %v1256
      %v1259 = vsel %vm1056, %v990, 0
      %v1262 = vsel %vm1089, %v1258, 0
      %1264 = vmatprep.subr.bf16.mxu0 0
      %1265 = vmatpush1.bf16.msra.mxu0 %v1262
      %1266 = vmatprep.subr.bf16.mxu0 0
      %1267 = vmatpush1.bf16.msra.mxu0 0
      %1268 = vmatprep.subr.bf16.mxu0 0
      %1269 = vmatpush1.bf16.msra.mxu0 0
      %1270 = vmatprep.subr.bf16.mxu0 0
      %1271 = vmatpush1.bf16.msra.mxu0 0
      %1272 = vmatprep.subr.bf16.mxu0 0
      %1273 = vmatpush1.bf16.msra.mxu0 0
      %1274 = vmatprep.subr.bf16.mxu0 0
      %1275 = vmatpush1.bf16.msra.mxu0 0
      %1276 = vmatprep.subr.bf16.mxu0 0
      %1277 = vmatpush1.bf16.msra.mxu0 0
      %1278 = vmatprep.subr.bf16.mxu0 0
      %1279 = vmatpush1.bf16.msra.mxu0 0
      %1280 = vmatprep.subr.bf16.mxu0 0
      %1281 = vmatpush1.bf16.msra.mxu0 0
      %1282 = vmatprep.subr.bf16.mxu0 0
      %1283 = vmatpush1.bf16.msra.mxu0 0
      %1284 = vmatprep.subr.bf16.mxu0 0
      %1285 = vmatpush1.bf16.msra.mxu0 0
      %1286 = vmatprep.subr.bf16.mxu0 0
      %1287 = vmatpush1.bf16.msra.mxu0 0
      %1288 = vmatprep.subr.bf16.mxu0 0
      %1289 = vmatpush1.bf16.msra.mxu0 0
      %1290 = vmatprep.subr.bf16.mxu0 0
      %1291 = vmatpush1.bf16.msra.mxu0 0
      %1292 = vmatprep.subr.bf16.mxu0 0
      %1293 = vmatpush1.bf16.msra.mxu0 0
      %1294 = vmatprep.subr.bf16.mxu0 0
      %1295 = vmatpush1.bf16.msra.mxu0 0
      %1296 = vmatprep.mubr.bf16.mxu0 0
      %1297 = vmatmul.mubr.bf16.gmra.mrb[0].mxu0 %v1259
      %v1298 = vpop.f32.mrb[0].mxu0
      %v1299 = vadd.f32 %v1128, %v1298
      %v1300 = vpop.f32.mrb[0].mxu0
      %v1301 = vpop.f32.mrb[0].mxu0
      %v1302 = vadd.f32 %v1131, %v1301
      %v1303 = vpop.f32.mrb[0].mxu0
      %1304 = vmatprep.mubr.bf16.mxu0 0
      %1305 = vmatmul.mubr.bf16.gmra.mrb[0].mxu0 %v1057
      %v1306 = vpop.f32.mrb[0].mxu0
      %v1307 = vadd.f32 %v1136, %v1306
      %v1308 = vpop.f32.mrb[0].mxu0
      %v1309 = vpop.f32.mrb[0].mxu0
      %v1310 = vadd.f32 %v1139, %v1309
      %v1311 = vpop.f32.mrb[0].mxu0
      %1312 = vmatprep.mubr.bf16.mxu0 0
      %1313 = vmatmul.mubr.bf16.gmra.mrb[0].mxu0 %v1059
      %v1314 = vpop.f32.mrb[0].mxu0
      %v1315 = vadd.f32 %v1144, %v1314
      %v1316 = vpop.f32.mrb[0].mxu0
      %v1317 = vpop.f32.mrb[0].mxu0
      %v1318 = vadd.f32 %v1147, %v1317
      %v1319 = vpop.f32.mrb[0].mxu0
      %1320 = vmatprep.mubr.bf16.mxu0 0
      %1321 = vmatmul.mubr.bf16.gmra.mrb[0].mxu0 %v1061
      %v1322 = vpop.f32.mrb[0].mxu0
      %v1323 = vadd.f32 %v1152, %v1322
      %v1324 = vpop.f32.mrb[0].mxu0
      %v1325 = vpop.f32.mrb[0].mxu0
      %v1326 = vadd.f32 %v1155, %v1325
      %v1327 = vpop.f32.mrb[0].mxu0
      %1328 = vmatprep.mubr.bf16.mxu0 0
      %1329 = vmatmul.mubr.bf16.gmra.mrb[0].mxu0 %v1063
      %v1330 = vpop.f32.mrb[0].mxu0
      %v1331 = vadd.f32 %v1160, %v1330
      %v1332 = vpop.f32.mrb[0].mxu0
      %v1333 = vpop.f32.mrb[0].mxu0
      %v1334 = vadd.f32 %v1163, %v1333
      %v1335 = vpop.f32.mrb[0].mxu0
      %1336 = vmatprep.mubr.bf16.mxu0 0
      %1337 = vmatmul.mubr.bf16.gmra.mrb[0].mxu0 %v1065
      %v1338 = vpop.f32.mrb[0].mxu0
      %v1339 = vadd.f32 %v1168, %v1338
      %v1340 = vpop.f32.mrb[0].mxu0
      %v1341 = vpop.f32.mrb[0].mxu0
      %v1342 = vadd.f32 %v1171, %v1341
      %v1343 = vpop.f32.mrb[0].mxu0
      %1344 = vmatprep.mubr.bf16.mxu0 0
      %1345 = vmatmul.mubr.bf16.gmra.mrb[0].mxu0 %v1067
      %v1346 = vpop.f32.mrb[0].mxu0
      %v1347 = vadd.f32 %v1176, %v1346
      %v1348 = vpop.f32.mrb[0].mxu0
      %v1349 = vpop.f32.mrb[0].mxu0
      %v1350 = vadd.f32 %v1179, %v1349
      %v1351 = vpop.f32.mrb[0].mxu0
      %1352 = vmatprep.mubr.bf16.mxu0 0
      %1353 = vmatmul.mubr.bf16.gmra.mrb[0].mxu0 %v1069
      %v1354 = vpop.f32.mrb[0].mxu0
      %v1355 = vadd.f32 %v1184, %v1354
      %v1356 = vpop.f32.mrb[0].mxu0
      %v1357 = vpop.f32.mrb[0].mxu0
      %v1358 = vadd.f32 %v1187, %v1357
      %v1359 = vpop.f32.mrb[0].mxu0
      %1360 = vmatprep.mubr.bf16.mxu0 0
      %1361 = vmatmul.mubr.bf16.gmra.mrb[0].mxu0 %v1071
      %v1362 = vpop.f32.mrb[0].mxu0
      %v1363 = vadd.f32 %v1192, %v1362
      %v1364 = vpop.f32.mrb[0].mxu0
      %v1365 = vpop.f32.mrb[0].mxu0
      %v1366 = vadd.f32 %v1195, %v1365
      %v1367 = vpop.f32.mrb[0].mxu0
      %1368 = vmatprep.mubr.bf16.mxu0 0
      %1369 = vmatmul.mubr.bf16.gmra.mrb[0].mxu0 %v1073
      %v1370 = vpop.f32.mrb[0].mxu0
      %v1371 = vadd.f32 %v1200, %v1370
      %v1372 = vpop.f32.mrb[0].mxu0
      %v1373 = vpop.f32.mrb[0].mxu0
      %v1374 = vadd.f32 %v1203, %v1373
      %v1375 = vpop.f32.mrb[0].mxu0
      %1376 = vmatprep.mubr.bf16.mxu0 0
      %1377 = vmatmul.mubr.bf16.gmra.mrb[0].mxu0 %v1075
      %v1378 = vpop.f32.mrb[0].mxu0
      %v1379 = vadd.f32 %v1208, %v1378
      %v1380 = vpop.f32.mrb[0].mxu0
      %v1381 = vpop.f32.mrb[0].mxu0
      %v1382 = vadd.f32 %v1211, %v1381
      %v1383 = vpop.f32.mrb[0].mxu0
      %1384 = vmatprep.mubr.bf16.mxu0 0
      %1385 = vmatmul.mubr.bf16.gmra.mrb[0].mxu0 %v1077
      %v1386 = vpop.f32.mrb[0].mxu0
      %v1387 = vadd.f32 %v1216, %v1386
      %v1388 = vpop.f32.mrb[0].mxu0
      %v1389 = vpop.f32.mrb[0].mxu0
      %v1390 = vadd.f32 %v1219, %v1389
      %v1391 = vpop.f32.mrb[0].mxu0
      %1392 = vmatprep.mubr.bf16.mxu0 0
      %1393 = vmatmul.mubr.bf16.gmra.mrb[0].mxu0 %v1079
      %v1394 = vpop.f32.mrb[0].mxu0
      %v1395 = vadd.f32 %v1224, %v1394
      %v1396 = vpop.f32.mrb[0].mxu0
      %v1397 = vpop.f32.mrb[0].mxu0
      %v1398 = vadd.f32 %v1227, %v1397
      %v1399 = vpop.f32.mrb[0].mxu0
      %1400 = vmatprep.mubr.bf16.mxu0 0
      %1401 = vmatmul.mubr.bf16.gmra.mrb[0].mxu0 %v1081
      %v1402 = vpop.f32.mrb[0].mxu0
      %v1403 = vadd.f32 %v1232, %v1402
      %v1404 = vpop.f32.mrb[0].mxu0
      %v1405 = vpop.f32.mrb[0].mxu0
      %v1406 = vadd.f32 %v1235, %v1405
      %v1407 = vpop.f32.mrb[0].mxu0
      %1408 = vmatprep.mubr.bf16.mxu0 0
      %1409 = vmatmul.mubr.bf16.gmra.mrb[0].mxu0 %v1083
      %v1410 = vpop.f32.mrb[0].mxu0
      %v1411 = vadd.f32 %v1240, %v1410
      %v1412 = vpop.f32.mrb[0].mxu0
      %v1413 = vpop.f32.mrb[0].mxu0
      %v1414 = vadd.f32 %v1243, %v1413
      %v1415 = vpop.f32.mrb[0].mxu0
      %1416 = vmatprep.mubr.bf16.mxu0 0
      %1417 = vmatmul.mubr.bf16.gmra.mrb[0].mxu0 %v1085
      %v1418 = vpop.f32.mrb[0].mxu0
      %v1419 = vadd.f32 %v1248, %v1418
      %v1420 = vpop.f32.mrb[0].mxu0
      %v1421 = vpop.f32.mrb[0].mxu0
      %v1422 = vadd.f32 %v1251, %v1421
      %v1423 = vpop.f32.mrb[0].mxu0
      %1424 = vdwg.mxu0
      %s1425 = scalar_lea.vmem %s3, 16
      %v1426 = vld [vmem:[%s1425] sm:$0xf]
      %v1427 = vld [vmem:[%s1425 + $0x4] sm:$0x3]
      %v1430 = vunpack.c.l.b16 %v1426
      %v1431 = vunpack.c.l.b16 %v1427
      %v1432 = vpack.c.b16 %v1431, %v1430
      %v1434 = vsel %vm1089, %v1432, 0
      %1436 = vmatprep.subr.bf16.mxu0 0
      %1437 = vmatpush1.bf16.msra.mxu0 %v1434
      %1438 = vmatprep.subr.bf16.mxu0 0
      %1439 = vmatpush1.bf16.msra.mxu0 0
      %1440 = vmatprep.subr.bf16.mxu0 0
      %1441 = vmatpush1.bf16.msra.mxu0 0
      %1442 = vmatprep.subr.bf16.mxu0 0
      %1443 = vmatpush1.bf16.msra.mxu0 0
      %1444 = vmatprep.subr.bf16.mxu0 0
      %1445 = vmatpush1.bf16.msra.mxu0 0
      %1446 = vmatprep.subr.bf16.mxu0 0
      %1447 = vmatpush1.bf16.msra.mxu0 0
      %1448 = vmatprep.subr.bf16.mxu0 0
      %1449 = vmatpush1.bf16.msra.mxu0 0
      %1450 = vmatprep.subr.bf16.mxu0 0
      %1451 = vmatpush1.bf16.msra.mxu0 0
      %1452 = vmatprep.subr.bf16.mxu0 0
      %1453 = vmatpush1.bf16.msra.mxu0 0
      %1454 = vmatprep.subr.bf16.mxu0 0
      %1455 = vmatpush1.bf16.msra.mxu0 0
      %1456 = vmatprep.subr.bf16.mxu0 0
      %1457 = vmatpush1.bf16.msra.mxu0 0
      %1458 = vmatprep.subr.bf16.mxu0 0
      %1459 = vmatpush1.bf16.msra.mxu0 0
      %1460 = vmatprep.subr.bf16.mxu0 0
      %1461 = vmatpush1.bf16.msra.mxu0 0
      %1462 = vmatprep.subr.bf16.mxu0 0
      %1463 = vmatpush1.bf16.msra.mxu0 0
      %1464 = vmatprep.subr.bf16.mxu0 0
      %1465 = vmatpush1.bf16.msra.mxu0 0
      %1466 = vmatprep.subr.bf16.mxu0 0
      %1467 = vmatpush1.bf16.msra.mxu0 0
      %1468 = vmatprep.mubr.bf16.mxu0 0
      %1469 = vmatmul.mubr.bf16.gmra.mrb[0].mxu0 %v1059
      %v1470 = vpop.f32.mrb[0].mxu0
      %v1471 = vadd.f32 0.0, %v1470
      %v1472 = vpop.f32.mrb[0].mxu0
      %v1473 = vpop.f32.mrb[0].mxu0
      %v1474 = vadd.f32 0.0, %v1473
      %v1475 = vpop.f32.mrb[0].mxu0
      %1476 = vmatprep.mubr.bf16.mxu0 0
      %1477 = vmatmul.mubr.bf16.gmra.mrb[0].mxu0 %v1061
      %v1478 = vpop.f32.mrb[0].mxu0
      %v1479 = vadd.f32 0.0, %v1478
      %v1480 = vpop.f32.mrb[0].mxu0
      %v1481 = vpop.f32.mrb[0].mxu0
      %v1482 = vadd.f32 0.0, %v1481
      %v1483 = vpop.f32.mrb[0].mxu0
      %1484 = vmatprep.mubr.bf16.mxu0 0
      %1485 = vmatmul.mubr.bf16.gmra.mrb[0].mxu0 %v1063
      %v1486 = vpop.f32.mrb[0].mxu0
      %v1487 = vadd.f32 0.0, %v1486
      %v1488 = vpop.f32.mrb[0].mxu0
      %v1489 = vpop.f32.mrb[0].mxu0
      %v1490 = vadd.f32 0.0, %v1489
      %v1491 = vpop.f32.mrb[0].mxu0
      %1492 = vmatprep.mubr.bf16.mxu0 0
      %1493 = vmatmul.mubr.bf16.gmra.mrb[0].mxu0 %v1065
      %v1494 = vpop.f32.mrb[0].mxu0
      %v1495 = vadd.f32 0.0, %v1494
      %v1496 = vpop.f32.mrb[0].mxu0
      %v1497 = vpop.f32.mrb[0].mxu0
      %v1498 = vadd.f32 0.0, %v1497
      %v1499 = vpop.f32.mrb[0].mxu0
      %1500 = vmatprep.mubr.bf16.mxu0 0
      %1501 = vmatmul.mubr.bf16.gmra.mrb[0].mxu0 %v1067
      %v1502 = vpop.f32.mrb[0].mxu0
      %v1503 = vadd.f32 0.0, %v1502
      %v1504 = vpop.f32.mrb[0].mxu0
      %v1505 = vpop.f32.mrb[0].mxu0
      %v1506 = vadd.f32 0.0, %v1505
      %v1507 = vpop.f32.mrb[0].mxu0
      %1508 = vmatprep.mubr.bf16.mxu0 0
      %1509 = vmatmul.mubr.bf16.gmra.mrb[0].mxu0 %v1069
      %v1510 = vpop.f32.mrb[0].mxu0
      %v1511 = vadd.f32 0.0, %v1510
      %v1512 = vpop.f32.mrb[0].mxu0
      %v1513 = vpop.f32.mrb[0].mxu0
      %v1514 = vadd.f32 0.0, %v1513
      %v1515 = vpop.f32.mrb[0].mxu0
      %1516 = vmatprep.mubr.bf16.mxu0 0
      %1517 = vmatmul.mubr.bf16.gmra.mrb[0].mxu0 %v1071
      %v1518 = vpop.f32.mrb[0].mxu0
      %v1519 = vadd.f32 0.0, %v1518
      %v1520 = vpop.f32.mrb[0].mxu0
      %v1521 = vpop.f32.mrb[0].mxu0
      %v1522 = vadd.f32 0.0, %v1521
      %v1523 = vpop.f32.mrb[0].mxu0
      %1524 = vmatprep.mubr.bf16.mxu0 0
      %1525 = vmatmul.mubr.bf16.gmra.mrb[0].mxu0 %v1073
      %v1526 = vpop.f32.mrb[0].mxu0
      %v1527 = vadd.f32 0.0, %v1526
      %v1528 = vpop.f32.mrb[0].mxu0
      %v1529 = vpop.f32.mrb[0].mxu0
      %v1530 = vadd.f32 0.0, %v1529
      %v1531 = vpop.f32.mrb[0].mxu0
      %1532 = vmatprep.mubr.bf16.mxu0 0
      %1533 = vmatmul.mubr.bf16.gmra.mrb[0].mxu0 %v1075
      %v1534 = vpop.f32.mrb[0].mxu0
      %v1535 = vadd.f32 0.0, %v1534
      %v1536 = vpop.f32.mrb[0].mxu0
      %v1537 = vpop.f32.mrb[0].mxu0
      %v1538 = vadd.f32 0.0, %v1537
      %v1539 = vpop.f32.mrb[0].mxu0
      %1540 = vmatprep.mubr.bf16.mxu0 0
      %1541 = vmatmul.mubr.bf16.gmra.mrb[0].mxu0 %v1077
      %v1542 = vpop.f32.mrb[0].mxu0
      %v1543 = vadd.f32 0.0, %v1542
      %v1544 = vpop.f32.mrb[0].mxu0
      %v1545 = vpop.f32.mrb[0].mxu0
      %v1546 = vadd.f32 0.0, %v1545
      %v1547 = vpop.f32.mrb[0].mxu0
      %1548 = vmatprep.mubr.bf16.mxu0 0
      %1549 = vmatmul.mubr.bf16.gmra.mrb[0].mxu0 %v1079
      %v1550 = vpop.f32.mrb[0].mxu0
      %v1551 = vadd.f32 0.0, %v1550
      %v1552 = vpop.f32.mrb[0].mxu0
      %v1553 = vpop.f32.mrb[0].mxu0
      %v1554 = vadd.f32 0.0, %v1553
      %v1555 = vpop.f32.mrb[0].mxu0
      %1556 = vmatprep.mubr.bf16.mxu0 0
      %1557 = vmatmul.mubr.bf16.gmra.mrb[0].mxu0 %v1081
      %v1558 = vpop.f32.mrb[0].mxu0
      %v1559 = vadd.f32 0.0, %v1558
      %v1560 = vpop.f32.mrb[0].mxu0
      %v1561 = vpop.f32.mrb[0].mxu0
      %v1562 = vadd.f32 0.0, %v1561
      %v1563 = vpop.f32.mrb[0].mxu0
      %1564 = vmatprep.mubr.bf16.mxu0 0
      %1565 = vmatmul.mubr.bf16.gmra.mrb[0].mxu0 %v1083
      %v1566 = vpop.f32.mrb[0].mxu0
      %v1567 = vadd.f32 0.0, %v1566
      %v1568 = vpop.f32.mrb[0].mxu0
      %v1569 = vpop.f32.mrb[0].mxu0
      %v1570 = vadd.f32 0.0, %v1569
      %v1571 = vpop.f32.mrb[0].mxu0
      %1572 = vmatprep.mubr.bf16.mxu0 0
      %1573 = vmatmul.mubr.bf16.gmra.mrb[0].mxu0 %v1085
      %v1574 = vpop.f32.mrb[0].mxu0
      %v1575 = vadd.f32 0.0, %v1574
      %v1576 = vpop.f32.mrb[0].mxu0
      %v1577 = vpop.f32.mrb[0].mxu0
      %v1578 = vadd.f32 0.0, %v1577
      %v1579 = vpop.f32.mrb[0].mxu0
      %1580 = vmatprep.mubr.bf16.mxu0 0
      %1581 = vmatmul.mubr.bf16.gmra.mrb[0].mxu0 %v1087
      %v1582 = vpop.f32.mrb[0].mxu0
      %v1583 = vadd.f32 0.0, %v1582
      %v1584 = vpop.f32.mrb[0].mxu0
      %v1585 = vpop.f32.mrb[0].mxu0
      %v1586 = vadd.f32 0.0, %v1585
      %v1587 = vpop.f32.mrb[0].mxu0
      %1588 = vmatprep.mubr.bf16.mxu0 0
      %1589 = vmatmul.mubr.bf16.gmra.mrb[0].mxu0 %v1259
      %v1590 = vpop.f32.mrb[0].mxu0
      %v1591 = vadd.f32 0.0, %v1590
      %v1592 = vpop.f32.mrb[0].mxu0
      %v1593 = vpop.f32.mrb[0].mxu0
      %v1594 = vadd.f32 0.0, %v1593
      %v1595 = vpop.f32.mrb[0].mxu0
      %1596 = vdwg.mxu0
      %v1597 = vadd.f32 %v1299, %v1471
      %v1598 = vadd.f32 %v1302, %v1474
      %v1599 = vadd.f32 %v1307, %v1479
      %v1600 = vadd.f32 %v1310, %v1482
      %v1601 = vadd.f32 %v1315, %v1487
      %v1602 = vadd.f32 %v1318, %v1490
      %v1603 = vadd.f32 %v1323, %v1495
      %v1604 = vadd.f32 %v1326, %v1498
      %v1605 = vadd.f32 %v1331, %v1503
      %v1606 = vadd.f32 %v1334, %v1506
      %v1607 = vadd.f32 %v1339, %v1511
      %v1608 = vadd.f32 %v1342, %v1514
      %v1609 = vadd.f32 %v1347, %v1519
      %v1610 = vadd.f32 %v1350, %v1522
      %v1611 = vadd.f32 %v1355, %v1527
      %v1612 = vadd.f32 %v1358, %v1530
      %v1613 = vadd.f32 %v1363, %v1535
      %v1614 = vadd.f32 %v1366, %v1538
      %v1615 = vadd.f32 %v1371, %v1543
      %v1616 = vadd.f32 %v1374, %v1546
      %v1617 = vadd.f32 %v1379, %v1551
      %v1618 = vadd.f32 %v1382, %v1554
      %v1619 = vadd.f32 %v1387, %v1559
      %v1620 = vadd.f32 %v1390, %v1562
      %v1621 = vadd.f32 %v1395, %v1567
      %v1622 = vadd.f32 %v1398, %v1570
      %v1623 = vadd.f32 %v1403, %v1575
      %v1624 = vadd.f32 %v1406, %v1578
      %v1625 = vadd.f32 %v1411, %v1583
      %v1626 = vadd.f32 %v1414, %v1586
      %v1627 = vadd.f32 %v1419, %v1591
      %v1628 = vadd.f32 %v1422, %v1594
      %v1629 = vsel %vm955, %v1597, 0.0
      %v1630 = vsel %vm955, %v1598, 0.0
      %v1631 = vadd.f32 %v1629, %v1630
      %v1632 = vsel %vm955, %v1599, 0.0
      %v1633 = vadd.f32 %v1631, %v1632
      %v1634 = vsel %vm955, %v1600, 0.0
      %v1635 = vadd.f32 %v1633, %v1634
      %v1636 = vsel %vm955, %v1601, 0.0
      %v1637 = vadd.f32 %v1635, %v1636
      %v1638 = vsel %vm955, %v1602, 0.0
      %v1639 = vadd.f32 %v1637, %v1638
      %v1640 = vsel %vm955, %v1603, 0.0
      %v1641 = vadd.f32 %v1639, %v1640
      %v1642 = vsel %vm955, %v1604, 0.0
      %v1643 = vadd.f32 %v1641, %v1642
      %v1644 = vsel %vm955, %v1605, 0.0
      %v1645 = vadd.f32 %v1643, %v1644
      %v1646 = vsel %vm955, %v1606, 0.0
      %v1647 = vadd.f32 %v1645, %v1646
      %v1648 = vsel %vm955, %v1607, 0.0
      %v1649 = vadd.f32 %v1647, %v1648
      %v1650 = vsel %vm955, %v1608, 0.0
      %v1651 = vadd.f32 %v1649, %v1650
      %v1652 = vsel %vm955, %v1609, 0.0
      %v1653 = vadd.f32 %v1651, %v1652
      %v1654 = vsel %vm955, %v1610, 0.0
      %v1655 = vadd.f32 %v1653, %v1654
      %v1656 = vsel %vm955, %v1611, 0.0
      %v1657 = vadd.f32 %v1655, %v1656
      %v1658 = vsel %vm955, %v1612, 0.0
      %v1659 = vadd.f32 %v1657, %v1658
      %v1660 = vsel %vm955, %v1613, 0.0
      %v1661 = vadd.f32 %v1659, %v1660
      %v1662 = vsel %vm955, %v1614, 0.0
      %v1663 = vadd.f32 %v1661, %v1662
      %v1664 = vsel %vm955, %v1615, 0.0
      %v1665 = vadd.f32 %v1663, %v1664
      %v1666 = vsel %vm955, %v1616, 0.0
      %v1667 = vadd.f32 %v1665, %v1666
      %v1668 = vsel %vm955, %v1617, 0.0
      %v1669 = vadd.f32 %v1667, %v1668
      %v1670 = vsel %vm955, %v1618, 0.0
      %v1671 = vadd.f32 %v1669, %v1670
      %v1672 = vsel %vm955, %v1619, 0.0
      %v1673 = vadd.f32 %v1671, %v1672
      %v1674 = vsel %vm955, %v1620, 0.0
      %v1675 = vadd.f32 %v1673, %v1674
      %v1676 = vsel %vm955, %v1621, 0.0
      %v1677 = vadd.f32 %v1675, %v1676
      %v1678 = vsel %vm955, %v1622, 0.0
      %v1679 = vadd.f32 %v1677, %v1678
      %v1680 = vsel %vm955, %v1623, 0.0
      %v1681 = vadd.f32 %v1679, %v1680
      %v1682 = vsel %vm955, %v1624, 0.0
      %v1683 = vadd.f32 %v1681, %v1682
      %v1684 = vsel %vm955, %v1625, 0.0
      %v1685 = vadd.f32 %v1683, %v1684
      %v1686 = vsel %vm955, %v1626, 0.0
      %v1687 = vadd.f32 %v1685, %v1686
      %v1688 = vsel %vm955, %v1627, 0.0
      %v1689 = vadd.f32 %v1687, %v1688
      %v1690 = vsel %vm955, %v1628, 0.0
      %v1691 = vadd.f32 %v1689, %v1690
      %v1692 = vrot.slane %v1691, 4
      %v1693 = vadd.f32 %v1691, %v1692
      %v1694 = vrot.slane %v1693, 2
      %v1695 = vadd.f32 %v1693, %v1694
      %v1696 = vrot.slane %v1695, 1
      %v1697 = vadd.f32 %v1695, %v1696
      %v1698 = vmul.f32 %v1597, %v1597
      %v1699 = vmul.f32 %v1598, %v1598
      %v1700 = vmul.f32 %v1599, %v1599
      %v1701 = vmul.f32 %v1600, %v1600
      %v1702 = vmul.f32 %v1601, %v1601
      %v1703 = vmul.f32 %v1602, %v1602
      %v1704 = vmul.f32 %v1603, %v1603
      %v1705 = vmul.f32 %v1604, %v1604
      %v1706 = vmul.f32 %v1605, %v1605
      %v1707 = vmul.f32 %v1606, %v1606
      %v1708 = vmul.f32 %v1607, %v1607
      %v1709 = vmul.f32 %v1608, %v1608
      %v1710 = vmul.f32 %v1609, %v1609
      %v1711 = vmul.f32 %v1610, %v1610
      %v1712 = vmul.f32 %v1611, %v1611
      %v1713 = vmul.f32 %v1612, %v1612
      %v1714 = vmul.f32 %v1613, %v1613
      %v1715 = vmul.f32 %v1614, %v1614
      %v1716 = vmul.f32 %v1615, %v1615
      %v1717 = vmul.f32 %v1616, %v1616
      %v1718 = vmul.f32 %v1617, %v1617
      %v1719 = vmul.f32 %v1618, %v1618
      %v1720 = vmul.f32 %v1619, %v1619
      %v1721 = vmul.f32 %v1620, %v1620
      %v1722 = vmul.f32 %v1621, %v1621
      %v1723 = vmul.f32 %v1622, %v1622
      %v1724 = vmul.f32 %v1623, %v1623
      %v1725 = vmul.f32 %v1624, %v1624
      %v1726 = vmul.f32 %v1625, %v1625
      %v1727 = vmul.f32 %v1626, %v1626
      %v1728 = vmul.f32 %v1627, %v1627
      %v1729 = vmul.f32 %v1628, %v1628
      %v1730 = vsel %vm955, %v1698, 0.0
      %v1731 = vsel %vm955, %v1699, 0.0
      %v1732 = vadd.f32 %v1730, %v1731
      %v1733 = vsel %vm955, %v1700, 0.0
      %v1734 = vadd.f32 %v1732, %v1733
      %v1735 = vsel %vm955, %v1701, 0.0
      %v1736 = vadd.f32 %v1734, %v1735
      %v1737 = vsel %vm955, %v1702, 0.0
      %v1738 = vadd.f32 %v1736, %v1737
      %v1739 = vsel %vm955, %v1703, 0.0
      %v1740 = vadd.f32 %v1738, %v1739
      %v1741 = vsel %vm955, %v1704, 0.0
      %v1742 = vadd.f32 %v1740, %v1741
      %v1743 = vsel %vm955, %v1705, 0.0
      %v1744 = vadd.f32 %v1742, %v1743
      %v1745 = vsel %vm955, %v1706, 0.0
      %v1746 = vadd.f32 %v1744, %v1745
      %v1747 = vsel %vm955, %v1707, 0.0
      %v1748 = vadd.f32 %v1746, %v1747
      %v1749 = vsel %vm955, %v1708, 0.0
      %v1750 = vadd.f32 %v1748, %v1749
      %v1751 = vsel %vm955, %v1709, 0.0
      %v1752 = vadd.f32 %v1750, %v1751
      %v1753 = vsel %vm955, %v1710, 0.0
      %v1754 = vadd.f32 %v1752, %v1753
      %v1755 = vsel %vm955, %v1711, 0.0
      %v1756 = vadd.f32 %v1754, %v1755
      %v1757 = vsel %vm955, %v1712, 0.0
      %v1758 = vadd.f32 %v1756, %v1757
      %v1759 = vsel %vm955, %v1713, 0.0
      %v1760 = vadd.f32 %v1758, %v1759
      %v1761 = vsel %vm955, %v1714, 0.0
      %v1762 = vadd.f32 %v1760, %v1761
      %v1763 = vsel %vm955, %v1715, 0.0
      %v1764 = vadd.f32 %v1762, %v1763
      %v1765 = vsel %vm955, %v1716, 0.0
      %v1766 = vadd.f32 %v1764, %v1765
      %v1767 = vsel %vm955, %v1717, 0.0
      %v1768 = vadd.f32 %v1766, %v1767
      %v1769 = vsel %vm955, %v1718, 0.0
      %v1770 = vadd.f32 %v1768, %v1769
      %v1771 = vsel %vm955, %v1719, 0.0
      %v1772 = vadd.f32 %v1770, %v1771
      %v1773 = vsel %vm955, %v1720, 0.0
      %v1774 = vadd.f32 %v1772, %v1773
      %v1775 = vsel %vm955, %v1721, 0.0
      %v1776 = vadd.f32 %v1774, %v1775
      %v1777 = vsel %vm955, %v1722, 0.0
      %v1778 = vadd.f32 %v1776, %v1777
      %v1779 = vsel %vm955, %v1723, 0.0
      %v1780 = vadd.f32 %v1778, %v1779
      %v1781 = vsel %vm955, %v1724, 0.0
      %v1782 = vadd.f32 %v1780, %v1781
      %v1783 = vsel %vm955, %v1725, 0.0
      %v1784 = vadd.f32 %v1782, %v1783
      %v1785 = vsel %vm955, %v1726, 0.0
      %v1786 = vadd.f32 %v1784, %v1785
      %v1787 = vsel %vm955, %v1727, 0.0
      %v1788 = vadd.f32 %v1786, %v1787
      %v1789 = vsel %vm955, %v1728, 0.0
      %v1790 = vadd.f32 %v1788, %v1789
      %v1791 = vsel %vm955, %v1729, 0.0
      %v1792 = vadd.f32 %v1790, %v1791
      %v1793 = vrot.slane %v1792, 4
      %v1794 = vadd.f32 %v1792, %v1793
      %v1795 = vrot.slane %v1794, 2
      %v1796 = vadd.f32 %v1794, %v1795
      %v1797 = vrot.slane %v1796, 1
      %v1798 = vadd.f32 %v1796, %v1797
      %vm1799 = vcmask 1040384
      %v1800 = vsel %vm1799, %v1697, %v1798
      %vm1801 = vcmask 25600
      %1802 = vst.msk [vmem:[%s235] sm:$0x3] %vm1801, %v1800
      %v1803 = vpack.c.bf16 %v1598, %v1597
      %v1804 = vpack.c.bf16 %v1600, %v1599
      %v1805 = vpack.c.bf16 %v1602, %v1601
      %v1806 = vpack.c.bf16 %v1604, %v1603
      %v1807 = vpack.c.bf16 %v1606, %v1605
      %v1808 = vpack.c.bf16 %v1608, %v1607
      %v1809 = vpack.c.bf16 %v1610, %v1609
      %v1810 = vpack.c.bf16 %v1612, %v1611
      %v1811 = vpack.c.bf16 %v1614, %v1613
      %v1812 = vpack.c.bf16 %v1616, %v1615
      %v1813 = vpack.c.bf16 %v1618, %v1617
      %v1814 = vpack.c.bf16 %v1620, %v1619
      %v1815 = vpack.c.bf16 %v1622, %v1621
      %v1816 = vpack.c.bf16 %v1624, %v1623
      %v1817 = vpack.c.bf16 %v1626, %v1625
      %v1818 = vpack.c.bf16 %v1628, %v1627
      %v1835 = vunpack.c.l.b16 %v1803
      %v1836 = vunpack.c.h.b16 %v1803
      %v1837 = vunpack.c.l.b16 %v1804
      %v1838 = vunpack.c.h.b16 %v1804
      %v1839 = vunpack.c.l.b16 %v1805
      %v1840 = vunpack.c.h.b16 %v1805
      %v1841 = vunpack.c.l.b16 %v1806
      %v1842 = vunpack.c.h.b16 %v1806
      %v1843 = vunpack.c.l.b16 %v1807
      %v1844 = vunpack.c.h.b16 %v1807
      %v1845 = vunpack.c.l.b16 %v1808
      %v1846 = vunpack.c.h.b16 %v1808
      %v1847 = vunpack.c.l.b16 %v1809
      %v1848 = vunpack.c.h.b16 %v1809
      %v1849 = vunpack.c.l.b16 %v1810
      %v1850 = vunpack.c.h.b16 %v1810
      %v1851 = vunpack.c.l.b16 %v1811
      %v1852 = vunpack.c.h.b16 %v1811
      %v1853 = vunpack.c.l.b16 %v1812
      %v1854 = vunpack.c.h.b16 %v1812
      %v1855 = vunpack.c.l.b16 %v1813
      %v1856 = vunpack.c.h.b16 %v1813
      %v1857 = vunpack.c.l.b16 %v1814
      %v1858 = vunpack.c.h.b16 %v1814
      %v1859 = vunpack.c.l.b16 %v1815
      %v1860 = vunpack.c.h.b16 %v1815
      %v1861 = vunpack.c.l.b16 %v1816
      %v1862 = vunpack.c.h.b16 %v1816
      %v1863 = vunpack.c.l.b16 %v1817
      %v1864 = vunpack.c.h.b16 %v1817
      %v1865 = vunpack.c.l.b16 %v1818
      %v1866 = vunpack.c.h.b16 %v1818
      %v1867 = vpack.c.b16 %v1835, %v1835
      %v1868 = vpack.c.b16 %v1836, %v1836
      %v1869 = vpack.c.b16 %v1837, %v1837
      %v1870 = vpack.c.b16 %v1838, %v1838
      %v1871 = vpack.c.b16 %v1839, %v1839
      %v1872 = vpack.c.b16 %v1840, %v1840
      %v1873 = vpack.c.b16 %v1841, %v1841
      %v1874 = vpack.c.b16 %v1842, %v1842
      %v1875 = vpack.c.b16 %v1843, %v1843
      %v1876 = vpack.c.b16 %v1844, %v1844
      %v1877 = vpack.c.b16 %v1845, %v1845
      %v1878 = vpack.c.b16 %v1846, %v1846
      %v1879 = vpack.c.b16 %v1847, %v1847
      %v1880 = vpack.c.b16 %v1848, %v1848
      %v1881 = vpack.c.b16 %v1849, %v1849
      %v1882 = vpack.c.b16 %v1850, %v1850
      %v1883 = vpack.c.b16 %v1851, %v1851
      %v1884 = vpack.c.b16 %v1852, %v1852
      %v1885 = vpack.c.b16 %v1853, %v1853
      %v1886 = vpack.c.b16 %v1854, %v1854
      %v1887 = vpack.c.b16 %v1855, %v1855
      %v1888 = vpack.c.b16 %v1856, %v1856
      %v1889 = vpack.c.b16 %v1857, %v1857
      %v1890 = vpack.c.b16 %v1858, %v1858
      %v1891 = vpack.c.b16 %v1859, %v1859
      %v1892 = vpack.c.b16 %v1860, %v1860
      %v1893 = vpack.c.b16 %v1861, %v1861
      %v1894 = vpack.c.b16 %v1862, %v1862
      %v1895 = vpack.c.b16 %v1863, %v1863
      %v1896 = vpack.c.b16 %v1864, %v1864
      %v1897 = vpack.c.b16 %v1865, %v1865
      %v1898 = vpack.c.b16 %v1866, %v1866
      %vm1931 = vcmask 27648
      %1932 = vst.msk [vmem:[%s231] sm:$0xf] %vm1931, %v1867
      %1933 = vst.msk [vmem:[%s231 + $0x4] sm:$0xf] %vm1931, %v1868
      %1934 = vst.msk [vmem:[%s231 + $0x8] sm:$0xf] %vm1931, %v1869
      %1935 = vst.msk [vmem:[%s231 + $0xc] sm:$0xf] %vm1931, %v1870
      %1936 = vst.msk [vmem:[%s231 + $0x10] sm:$0xf] %vm1931, %v1871
      %1937 = vst.msk [vmem:[%s231 + $0x14] sm:$0xf] %vm1931, %v1872
      %1938 = vst.msk [vmem:[%s231 + $0x18] sm:$0xf] %vm1931, %v1873
      %1939 = vst.msk [vmem:[%s231 + $0x1c] sm:$0xf] %vm1931, %v1874
      %1940 = vst.msk [vmem:[%s231 + $0x20] sm:$0xf] %vm1931, %v1875
      %1941 = vst.msk [vmem:[%s231 + $0x24] sm:$0xf] %vm1931, %v1876
      %1942 = vst.msk [vmem:[%s231 + $0x28] sm:$0xf] %vm1931, %v1877
      %1943 = vst.msk [vmem:[%s231 + $0x2c] sm:$0xf] %vm1931, %v1878
      %1944 = vst.msk [vmem:[%s231 + $0x30] sm:$0xf] %vm1931, %v1879
      %1945 = vst.msk [vmem:[%s231 + $0x34] sm:$0xf] %vm1931, %v1880
      %1946 = vst.msk [vmem:[%s231 + $0x38] sm:$0xf] %vm1931, %v1881
      %1947 = vst.msk [vmem:[%s231 + $0x3c] sm:$0xf] %vm1931, %v1882
      %1948 = vst.msk [vmem:[%s231 + $0x40] sm:$0xf] %vm1931, %v1883
      %1949 = vst.msk [vmem:[%s231 + $0x44] sm:$0xf] %vm1931, %v1884
      %1950 = vst.msk [vmem:[%s231 + $0x48] sm:$0xf] %vm1931, %v1885
      %1951 = vst.msk [vmem:[%s231 + $0x4c] sm:$0xf] %vm1931, %v1886
      %1952 = vst.msk [vmem:[%s231 + $0x50] sm:$0xf] %vm1931, %v1887
      %1953 = vst.msk [vmem:[%s231 + $0x54] sm:$0xf] %vm1931, %v1888
      %1954 = vst.msk [vmem:[%s231 + $0x58] sm:$0xf] %vm1931, %v1889
      %1955 = vst.msk [vmem:[%s231 + $0x5c] sm:$0xf] %vm1931, %v1890
      %1956 = vst.msk [vmem:[%s231 + $0x60] sm:$0xf] %vm1931, %v1891
      %1957 = vst.msk [vmem:[%s231 + $0x64] sm:$0xf] %vm1931, %v1892
      %1958 = vst.msk [vmem:[%s231 + $0x68] sm:$0xf] %vm1931, %v1893
      %1959 = vst.msk [vmem:[%s231 + $0x6c] sm:$0xf] %vm1931, %v1894
      %1960 = vst.msk [vmem:[%s231 + $0x70] sm:$0xf] %vm1931, %v1895
      %1961 = vst.msk [vmem:[%s231 + $0x74] sm:$0xf] %vm1931, %v1896
      %1962 = vst.msk [vmem:[%s231 + $0x78] sm:$0xf] %vm1931, %v1897
      %1963 = vst.msk [vmem:[%s231 + $0x7c] sm:$0xf] %vm1931, %v1898
      %p1964 = scmp.lt.s32.totalorder %s17, 1
      %s1965 = scalar_select %p1964, %s17, 1
      %s1966 = smul.addr %s1965, 32
      %s1967 = smul.addr %s1966, 4
      %s1968 = scalar_lea.vmem %s4, %s1967
      %p1969 = scmp.lt.s32.totalorder %s17, 1
      %s1970 = scalar_select %p1969, %s17, 1
      %s1971 = smul.addr %s1970, 2
      %s1972 = scalar_lea.vmem %s5, %s1971
      // Predicated region
      $region37: #{basic_block_forward.4} parent=35 // pred_check
        %p1973 = pneg %p124
      $region38: #{basic_block_forward.4} parent=35 // pred_check_branch
        %1975 = sbr.rel (%p1973) target = $region40
      $region39: #{basic_block_forward.4} parent=35 // pred_region
        _
      $region40: #{basic_block_forward.4} parent=35 // pred_fallthru
        _
      // Predicated region
      $region41: #{basic_block_forward.4} parent=35 // pred_check
        %p1976 = pneg %p150
      $region42: #{basic_block_forward.4} parent=35 // pred_check_branch
        %1978 = sbr.rel (%p1976) target = $region44
      $region43: #{basic_block_forward.4} parent=35 // pred_region
        _
      $region44: #{basic_block_forward.4} parent=35 // pred_fallthru
        _
    $region36: #{basic_block_forward.4} parent=5 // pred_fallthru
      _
    %p1979 = scmp.le.s32.totalorder 2, %s12
    // Predicated region
    $region45: #{basic_block_forward.4} parent=5 // pred_check
      %p1980 = pneg %p1979
    $region46: #{basic_block_forward.4} parent=5 // pred_check_branch
      %1982 = sbr.rel (%p1980) target = $region48
    $region47: #{basic_block_forward.4} parent=5 // pred_region
      %s1983 = ssub.s32 %s12, 2
      // Predicated region
      $region49: #{basic_block_forward.4} parent=47 // pred_check
        %p1984 = pneg %p130
      $region50: #{basic_block_forward.4} parent=47 // pred_check_branch
        %1986 = sbr.rel (%p1984) target = $region52
      $region51: #{basic_block_forward.4} parent=47 // pred_region
        %p1987 = scmp.lt.s32.totalorder %s18, 1
        %s1988 = scalar_select %p1987, %s18, 1
        %s1989 = smul.addr %s1988, 32
        %s1990 = smul.addr %s1989, 4
        %s1991 = scalar_lea.vmem %s4, %s1990
      $region52: #{basic_block_forward.4} parent=47 // pred_fallthru
        _
      // Predicated region
      $region53: #{basic_block_forward.4} parent=47 // pred_check
        %p1992 = pneg %p156
      $region54: #{basic_block_forward.4} parent=47 // pred_check_branch
        %1994 = sbr.rel (%p1992) target = $region56
      $region55: #{basic_block_forward.4} parent=47 // pred_region
        %p1995 = scmp.lt.s32.totalorder %s18, 1
        %s1996 = scalar_select %p1995, %s18, 1
        %s1997 = smul.addr %s1996, 2
        %s1998 = scalar_lea.vmem %s5, %s1997
      $region56: #{basic_block_forward.4} parent=47 // pred_fallthru
        _
    $region48: #{basic_block_forward.4} parent=5 // pred_fallthru
      _
  $region6: #{basic_block_forward.4} parent=0 // loop_footer
    %s16 = sadd.s32 1, %s12
  $region7: #{basic_block_forward.4} parent=0 // loop_footer_branch
    %11 = sbr.rel target = $region3
  $region8: #{basic_block_forward.4} parent=0 // loop_exit
    _

</llo_original>
